<compile_context>
chip_gen: v6e
topology: v6e:2x2x1
jax: 0.10.0
libtpu: 0.0.40
codegen_flags: <defaults>
</compile_context>

<pallas_src>
import math
import jax
import jax.numpy as jnp
from jax.experimental import pallas as pl
from jax.experimental.pallas import tpu as pltpu

ALPHA = 0.02      # LeakyReLU negative slope (module sets self.alpha = 0.02)
LN_EPS = 1e-5     # F.layer_norm default eps


def _leaky_relu(x):
    return jnp.where(x > 0, x, ALPHA * x)


def mpnn_kernel(wh_ref, w_ref, b_ref, a_w_ref, a_b_ref, out_ref):
    # wh_ref : (TB, N, F)  tile of Wh (TB graphs per grid step)
    # w_ref  : (F, F)      INW.weight^T + I   (residual folded into the weight)
    # b_ref  : (1, F)      INW.bias
    # a_w_ref: (1, F)      a.weight
    # a_b_ref: (1, 1)      a.bias (scalar in SMEM)
    # out_ref: (TB, F)
    TB, N, F = wh_ref.shape

    # EWh = Wh + INW(Wh) = Wh @ (INW_w^T + I) + INW_b
    # Flatten TB graphs into one tall MXU LHS (TB*N rows).  N % 8 == 0 keeps
    # this reshape a free re-view (no (8,128)-tile relayout copy).
    wh2 = wh_ref[...].reshape(TB * N, F)
    ewh = jnp.dot(wh2, w_ref[...],
                  preferred_element_type=jnp.float32,
                  precision=jax.lax.Precision.HIGHEST) + b_ref[...]
    ewh = ewh.reshape(TB, N, F)

    # attention = softmax(leaky_relu(a(EWh)), over the node axis)
    # Width-1 projection as a VPU multiply + lane reduction (keeps the MXU free).
    att = jnp.sum(ewh * a_w_ref[...], axis=-1, keepdims=True) + a_b_ref[0, 0]
    att = _leaky_relu(att)
    att = jnp.exp(att - jnp.max(att, axis=1, keepdims=True))
    att = att / jnp.sum(att, axis=1, keepdims=True)       # exact per-graph softmax
    ewh = ewh * att

    # F.layer_norm over the last dim, no affine params.
    mean = jnp.mean(ewh, axis=-1, keepdims=True)
    var = jnp.mean(jnp.square(ewh - mean), axis=-1, keepdims=True)
    ewh = (ewh - mean) * jax.lax.rsqrt(var + LN_EPS)

    ewh = _leaky_relu(ewh)

    # sum over nodes -> (TB, F) sublane-dense output slab
    out_ref[...] = jnp.sum(ewh, axis=1)


def _choose_tb(B, N, F, itemsize=4, max_tile_bytes=2 << 20):
    """Graphs per grid step: LARGEST divisor of B whose Wh tile fits the budget
    and keeps the output block sublane-dense (tb % 8 == 0 or tb == B).  Prefer a
    grid of length >= 2 (both v7x TensorCores) only when it keeps >= 256 MXU
    rows per step."""
    divisors = [d for d in range(1, B + 1) if B % d == 0]
    fit = [d for d in divisors if d * N * F * itemsize <= max_tile_bytes] or [1]
    nice = [d for d in fit if d % 8 == 0 or d == B] or fit
    tb = max(nice)                                    # largest tile first
    alt = [d for d in nice if B // d >= 2 and d * N >= 256]
    if B // tb < 2 and alt:                           # feed both TCs if cheap
        tb = max(alt)
    return tb


def mpnn_forward(Wh, params, tb=None):
    """Equivalent of MPNN.forward(Ec=[None]*B, Wh). Returns [B, 1, F]."""
    B, N, F = Wh.shape
    if tb is None:
        tb = _choose_tb(B, N, F, Wh.dtype.itemsize)
    assert B % tb == 0, (B, tb)

    # Fold the residual (Wh + INWh) into the weight once, in the wrapper.
    inw_wt = params["INW_w"].T + jnp.eye(F, dtype=params["INW_w"].dtype)

    out = pl.pallas_call(
        mpnn_kernel,
        out_shape=jax.ShapeDtypeStruct((B, F), Wh.dtype),
        grid=(B // tb,),
        in_specs=[
            pl.BlockSpec((tb, N, F), lambda i: (i, 0, 0)),      # Wh (TB graphs/step)
            pl.BlockSpec((F, F), lambda i: (0, 0)),             # INW_w^T + I (resident)
            pl.BlockSpec((1, F), lambda i: (0, 0)),             # INW.bias (resident)
            pl.BlockSpec((1, F), lambda i: (0, 0)),             # a.weight (resident)
            pl.BlockSpec(memory_space=pltpu.MemorySpace.SMEM),  # a.bias (scalar)
        ],
        out_specs=pl.BlockSpec((tb, F), lambda i: (i, 0)),
        compiler_params=pltpu.CompilerParams(
            dimension_semantics=("parallel",),
            vmem_limit_bytes=32 << 20,   # raise v5e's 16 MiB default; safe on all gens
        ),
    )(Wh, inw_wt, params["INW_b"], params["a_w"], params["a_b"])

    return out[:, None, :]               # [B, 1, F] to match the PyTorch forward


# ---------------------------------------------------------------------------
# Deterministic parameter construction (mirrors MPNN.__init__ shapes)
# ---------------------------------------------------------------------------
def _xavier_uniform(key, shape, gain):
    fan_out, fan_in = shape
    bound = gain * math.sqrt(6.0 / (fan_in + fan_out))
    return jax.random.uniform(key, shape, jnp.float32, -bound, bound)


def _linear_bias(key, fan_in, out_features):
    bound = 1.0 / math.sqrt(fan_in)
    return jax.random.uniform(key, (1, out_features), jnp.float32, -bound, bound)


def init_params(key, in_features, edge_features):
    ks = jax.random.split(key, 8)
    gain = 1.414
    params = {
        # used in the E=None forward path
        "INW_w": _xavier_uniform(ks[0], (in_features, in_features), gain),
        "INW_b": _linear_bias(ks[1], in_features, in_features),
        "a_w": _xavier_uniform(ks[2], (1, in_features), gain),
        "a_b": _linear_bias(ks[3], in_features, 1),
        # defined by __init__ but unused when all edge lists are None
        "OUTW_w": _xavier_uniform(ks[4], (in_features, in_features), gain),
        "OUTW_b": _linear_bias(ks[5], in_features, in_features),
        "EW_w": _xavier_uniform(ks[6], (in_features, edge_features), gain),
        "EW_b": _linear_bias(ks[7], edge_features, in_features),
    }
    return params


# ---------------------------------------------------------------------------
# Pure-JAX reference (mirrors the PyTorch forward, E=None branch).  Matmuls run
# at HIGHEST precision so the f32 kernel is compared against true f32 math.
# ---------------------------------------------------------------------------
def mpnn_reference(Wh, params):
    hi = jax.lax.Precision.HIGHEST
    inwh = jnp.einsum("bnf,gf->bng", Wh, params["INW_w"],
                      precision=hi) + params["INW_b"][0]
    ewh = Wh + inwh                                                  # [B,N,F]
    att = jnp.einsum("bnf,of->bno", ewh, params["a_w"],
                     precision=hi) + params["a_b"][0]                # [B,N,1]
    att = _leaky_relu(att)
    att = jax.nn.softmax(att, axis=1)                                # over nodes
    ewh = ewh * att
    mean = jnp.mean(ewh, axis=-1, keepdims=True)
    var = jnp.mean(jnp.square(ewh - mean), axis=-1, keepdims=True)
    ewh = (ewh - mean) * jax.lax.rsqrt(var + LN_EPS)
    ewh = _leaky_relu(ewh)
    return jnp.sum(ewh, axis=1)[:, None, :]                          # [B,1,F]


if __name__ == "__main__":
    B, N, F, E_FEAT = 32, 16, 32, 8   # tb=16 -> two steps of (256,32)@(32,32)

    key = jax.random.PRNGKey(0)
    k_wh, k_par = jax.random.split(key)
    Wh = jax.random.normal(k_wh, (B, N, F), jnp.float32)
    params = init_params(k_par, F, E_FEAT)

    out = jax.block_until_ready(mpnn_forward(Wh, params))
    ref = mpnn_reference(Wh, params)

    assert out.shape == (B, 1, F)
    max_err = float(jnp.max(jnp.abs(out - ref)))
    assert jnp.allclose(out, ref, atol=2e-3, rtol=2e-3), \
        f"mismatch vs reference (max abs err {max_err:.3e})"

    print("KERNEL_OK")
</pallas_src>

<mosaic_0001>
module attributes {stable_mosaic.version = 11 : i64} {
  func.func @mpnn_kernel(%arg0: i32, %arg1: memref<16x16x32xf32, #tpu.memory_space<vmem>>, %arg2: memref<32x32xf32, #tpu.memory_space<vmem>>, %arg3: memref<1x32xf32, #tpu.memory_space<vmem>>, %arg4: memref<1x32xf32, #tpu.memory_space<vmem>>, %arg5: memref<1x1xf32, #tpu.memory_space<smem>>, %arg6: memref<16x32xf32, #tpu.memory_space<vmem>>) attributes {dimension_semantics = [#tpu.dimension_semantics<parallel>], iteration_bounds = array<i64: 2>, scalar_prefetch = 0 : i64, scratch_operands = 0 : i64, tpu.core_type = #tpu.core_type<tc>, window_params = [{transform_indices = @transform_0, window_bounds = array<i64: 16, 16, 32>}, {pipeline_mode = #tpu.pipeline_mode<synchronous>, transform_indices = @transform_1, window_bounds = array<i64: 32, 32>}, {pipeline_mode = #tpu.pipeline_mode<synchronous>, transform_indices = @transform_2, window_bounds = array<i64: 1, 32>}, {pipeline_mode = #tpu.pipeline_mode<synchronous>, transform_indices = @transform_3, window_bounds = array<i64: 1, 32>}, {transform_indices = @transform_4, window_bounds = array<i64: 1, 1>}, {transform_indices = @transform_5, window_bounds = array<i64: 16, 32>}]} {
    %c0 = arith.constant 0 : index
    %c0_0 = arith.constant 0 : index
    %c0_1 = arith.constant 0 : index
    %0 = vector.load %arg1[%c0, %c0_0, %c0_1] : memref<16x16x32xf32, #tpu.memory_space<vmem>>, vector<16x16x32xf32>
    %1 = vector.shape_cast %0 : vector<16x16x32xf32> to vector<256x32xf32>
    %c0_2 = arith.constant 0 : index
    %c0_3 = arith.constant 0 : index
    %2 = vector.load %arg2[%c0_2, %c0_3] : memref<32x32xf32, #tpu.memory_space<vmem>>, vector<32x32xf32>
    %cst = arith.constant dense<0.000000e+00> : vector<256x32xf32>
    %3 = tpu.matmul %1, %2, %cst {dimension_numbers = #tpu.dot_dimension_numbers<[1], [0], [0], [1], [0, 0, 1, 1], [], []>, precision = #tpu.contract_precision<fp32>} : vector<256x32xf32>, vector<32x32xf32>, vector<256x32xf32> -> vector<256x32xf32>
    %c0_4 = arith.constant 0 : index
    %c0_5 = arith.constant 0 : index
    %4 = vector.load %arg3[%c0_4, %c0_5] : memref<1x32xf32, #tpu.memory_space<vmem>>, vector<1x32xf32>
    %5 = vector.broadcast %4 : vector<1x32xf32> to vector<256x32xf32>
    %6 = arith.addf %3, %5 : vector<256x32xf32>
    %7 = vector.shape_cast %6 : vector<256x32xf32> to vector<16x16x32xf32>
    %c0_6 = arith.constant 0 : index
    %c0_7 = arith.constant 0 : index
    %8 = vector.load %arg4[%c0_6, %c0_7] : memref<1x32xf32, #tpu.memory_space<vmem>>, vector<1x32xf32>
    %9 = vector.shape_cast %8 : vector<1x32xf32> to vector<1x1x32xf32>
    %10 = vector.broadcast %9 : vector<1x1x32xf32> to vector<16x16x32xf32>
    %11 = arith.mulf %7, %10 : vector<16x16x32xf32>
    %cst_8 = arith.constant dense<0.000000e+00> : vector<16x16xf32>
    %12 = vector.multi_reduction <add>, %11, %cst_8 [2] : vector<16x16x32xf32> to vector<16x16xf32>
    %13 = vector.shape_cast %12 : vector<16x16xf32> to vector<16x16x1xf32>
    %c0_9 = arith.constant 0 : index
    %c0_10 = arith.constant 0 : index
    %14 = memref.load %arg5[%c0_9, %c0_10] : memref<1x1xf32, #tpu.memory_space<smem>>
    %15 = vector.broadcast %14 : f32 to vector<16x16x1xf32>
    %16 = arith.addf %13, %15 : vector<16x16x1xf32>
    %cst_11 = arith.constant 0.000000e+00 : f32
    %17 = vector.broadcast %cst_11 : f32 to vector<16x16x1xf32>
    %18 = arith.cmpf ogt, %16, %17 : vector<16x16x1xf32>
    %cst_12 = arith.constant 2.000000e-02 : f32
    %19 = vector.broadcast %cst_12 : f32 to vector<16x16x1xf32>
    %20 = arith.mulf %19, %16 : vector<16x16x1xf32>
    %21 = arith.select %18, %16, %20 : vector<16x16x1xi1>, vector<16x16x1xf32>
    %cst_13 = arith.constant dense<0xFF800000> : vector<16x1xf32>
    %22 = vector.multi_reduction <maximumf>, %21, %cst_13 [1] : vector<16x16x1xf32> to vector<16x1xf32>
    %23 = vector.shape_cast %22 : vector<16x1xf32> to vector<16x1x1xf32>
    %24 = vector.broadcast %23 : vector<16x1x1xf32> to vector<16x16x1xf32>
    %25 = arith.subf %21, %24 : vector<16x16x1xf32>
    %26 = math.exp %25 : vector<16x16x1xf32>
    %cst_14 = arith.constant dense<0.000000e+00> : vector<16x1xf32>
    %27 = vector.multi_reduction <add>, %26, %cst_14 [1] : vector<16x16x1xf32> to vector<16x1xf32>
    %28 = vector.shape_cast %27 : vector<16x1xf32> to vector<16x1x1xf32>
    %29 = vector.broadcast %28 : vector<16x1x1xf32> to vector<16x16x1xf32>
    %30 = arith.divf %26, %29 : vector<16x16x1xf32>
    %31 = vector.broadcast %30 : vector<16x16x1xf32> to vector<16x16x32xf32>
    %32 = arith.mulf %7, %31 : vector<16x16x32xf32>
    %cst_15 = arith.constant dense<0.000000e+00> : vector<16x16xf32>
    %33 = vector.multi_reduction <add>, %32, %cst_15 [2] : vector<16x16x32xf32> to vector<16x16xf32>
    %34 = vector.shape_cast %33 : vector<16x16xf32> to vector<16x16x1xf32>
    %cst_16 = arith.constant 3.200000e+01 : f32
    %35 = vector.broadcast %cst_16 : f32 to vector<16x16x1xf32>
    %36 = arith.divf %34, %35 : vector<16x16x1xf32>
    %37 = vector.broadcast %36 : vector<16x16x1xf32> to vector<16x16x32xf32>
    %38 = arith.subf %32, %37 : vector<16x16x32xf32>
    %39 = arith.mulf %38, %38 : vector<16x16x32xf32>
    %cst_17 = arith.constant dense<0.000000e+00> : vector<16x16xf32>
    %40 = vector.multi_reduction <add>, %39, %cst_17 [2] : vector<16x16x32xf32> to vector<16x16xf32>
    %41 = vector.shape_cast %40 : vector<16x16xf32> to vector<16x16x1xf32>
    %cst_18 = arith.constant 3.200000e+01 : f32
    %42 = vector.broadcast %cst_18 : f32 to vector<16x16x1xf32>
    %43 = arith.divf %41, %42 : vector<16x16x1xf32>
    %44 = vector.broadcast %36 : vector<16x16x1xf32> to vector<16x16x32xf32>
    %45 = arith.subf %32, %44 : vector<16x16x32xf32>
    %cst_19 = arith.constant 9.99999974E-6 : f32
    %46 = vector.broadcast %cst_19 : f32 to vector<16x16x1xf32>
    %47 = arith.addf %43, %46 : vector<16x16x1xf32>
    %48 = math.rsqrt %47 : vector<16x16x1xf32>
    %49 = vector.broadcast %48 : vector<16x16x1xf32> to vector<16x16x32xf32>
    %50 = arith.mulf %45, %49 : vector<16x16x32xf32>
    %cst_20 = arith.constant 0.000000e+00 : f32
    %51 = vector.broadcast %cst_20 : f32 to vector<16x16x32xf32>
    %52 = arith.cmpf ogt, %50, %51 : vector<16x16x32xf32>
    %cst_21 = arith.constant 2.000000e-02 : f32
    %53 = vector.broadcast %cst_21 : f32 to vector<16x16x32xf32>
    %54 = arith.mulf %53, %50 : vector<16x16x32xf32>
    %55 = arith.select %52, %50, %54 : vector<16x16x32xi1>, vector<16x16x32xf32>
    %cst_22 = arith.constant dense<0.000000e+00> : vector<16x32xf32>
    %56 = vector.multi_reduction <add>, %55, %cst_22 [1] : vector<16x16x32xf32> to vector<16x32xf32>
    %c0_23 = arith.constant 0 : index
    %c0_24 = arith.constant 0 : index
    %57 = vector.load %arg6[%c0_23, %c0_24] : memref<16x32xf32, #tpu.memory_space<vmem>>, vector<16x32xf32>
    tpu.vector_store %arg6[%c0_23, %c0_24], %56 {strides = array<i32>} : memref<16x32xf32, #tpu.memory_space<vmem>>, vector<16x32xf32>,
    return
  }
  func.func @transform_0(%arg0: i32) -> (i32, i32, i32) {
    %c0_i32 = arith.constant 0 : i32
    %c0_i32_0 = arith.constant 0 : i32
    %c0_i32_1 = arith.constant 0 : i32
    return %arg0, %c0_i32, %c0_i32_0 : i32, i32, i32
  }
  func.func @transform_1(%arg0: i32) -> (i32, i32) {
    %c0_i32 = arith.constant 0 : i32
    %c0_i32_0 = arith.constant 0 : i32
    %c0_i32_1 = arith.constant 0 : i32
    return %c0_i32, %c0_i32_0 : i32, i32
  }
  func.func @transform_2(%arg0: i32) -> (i32, i32) {
    %c0_i32 = arith.constant 0 : i32
    %c0_i32_0 = arith.constant 0 : i32
    %c0_i32_1 = arith.constant 0 : i32
    return %c0_i32, %c0_i32_0 : i32, i32
  }
  func.func @transform_3(%arg0: i32) -> (i32, i32) {
    %c0_i32 = arith.constant 0 : i32
    %c0_i32_0 = arith.constant 0 : i32
    %c0_i32_1 = arith.constant 0 : i32
    return %c0_i32, %c0_i32_0 : i32, i32
  }
  func.func @transform_4(%arg0: i32) -> (i32, i32) {
    %c0_i32 = arith.constant 0 : i32
    %c0_i32_0 = arith.constant 0 : i32
    %c0_i32_1 = arith.constant 0 : i32
    return %c0_i32, %c0_i32_0 : i32, i32
  }
  func.func @transform_5(%arg0: i32) -> (i32, i32) {
    %c0_i32 = arith.constant 0 : i32
    %c0_i32_0 = arith.constant 0 : i32
    return %arg0, %c0_i32 : i32, i32
  }
}

</mosaic_0001>

<llo_original>
// kernel: tpu_custom_call.1
$region0: #{tpu_custom_call.1}
  #allocation0 [shape = 'u32[]', space=smem, size = 0x4, offset = 0x4, fixed_abs, tag = 'smem constant byte address 0x4 - core index']
  #allocation1 [shape = 'u32[144,128]{1,0:T(1,128)}', space=vmem, size = 0x12000, scoped, tag = 'internal scratch']
  #allocation2 [shape = 'f32[1,1]{1,0:T(1,128)S(6)}', space=smem, size = 0x200, scoped, tag = 'scoped memory for tpu_custom_call.1']
  %s0 = inlined_call_operand.hbm [shape: f32[32,16,32], index: 0, kind: input, shape index: {}]
  %s1 = inlined_call_operand.hbm [shape: f32[32,32], index: 1, kind: input, shape index: {}]
  %s2 = inlined_call_operand.vmem [shape: f32[1,32], index: 2, kind: input, shape index: {}]
  %s3 = inlined_call_operand.vmem [shape: f32[1,32], index: 3, kind: input, shape index: {}]
  %s4 = inlined_call_operand.<no memory space> [shape: f32[1,1], index: 4, kind: input, shape index: {}]
  %s5 = inlined_call_operand.hbm [shape: f32[32,32], index: 5, kind: output, shape index: {}]
  %s6 = sld [smem:[#allocation0]]
  $region61: #{tpu_custom_call.1} parent=0
    _
  %s8 = ssub.s32 1, %s6
  %s9 = scalar_select 0, %s8, %s6
  %10 = sst [smem:[#allocation2]] %s4
  $region1: #{tpu_custom_call.1} parent=0
    #allocation3 [shape = 'u8[262144]{0}', space=vmem, size = 0x40000, scoped, tag = 'input window, operand 0']
    #allocation4 [shape = 's32[2]{0}', space=sflag, size = 0x8, scoped, tag = 'scoped memory for tpu_custom_call.1']
    #allocation5 [shape = 's32[2]{0}', space=sflag, size = 0x8, scoped, tag = 'scoped memory for tpu_custom_call.1']
    #allocation6 [shape = 'u8[16384]{0}', space=vmem, size = 0x4000, scoped, tag = 'input window, operand 1, single buffered']
    #allocation7 [shape = 's32[1]{0}', space=sflag, size = 0x4, scoped, tag = 'scoped memory for tpu_custom_call.1']
    #allocation8 [shape = 'u8[16384]{0}', space=vmem, size = 0x4000, scoped, tag = 'output window, operand 0']
    %11 = vsyncpa [#allocation4], 0
    %s12 = scalar_lea.sflag [#allocation4], 1
    %13 = vsyncpa %s12, 0
    %14 = vsyncpa [#allocation7], 0
    %15 = vsyncpa [#allocation5], 0
    %s16 = scalar_lea.sflag [#allocation5], 1
    %17 = vsyncpa %s16, 0
    loop: start=0, step=1, limit=4
    $region2: #{tpu_custom_call.1} parent=1 // loop_pre_header
      _
    $region3: #{tpu_custom_call.1} parent=1 // loop_header
      %s19 = sphi 0, %s23
      %p20 = scmp.ge.s32.totalorder %s19, 4
      %s29 = sphi 0, %s31
      %s32 = sphi 0, %s29
      %s33 = sphi 0, %s32
      %s49 = sphi 0, %s33
      %s53 = sphi 0, %s53
      %s55 = sphi 0, %s53
      %s56 = sphi 0, %s55
      %s70 = sphi 0, %s56
      %s74 = sphi 0, %s74
      %s76 = sphi 0, %s74
      %s77 = sphi 0, %s76
      %s91 = sphi 0, %s77
      %s95 = sphi 0, %s95
      %s97 = sphi 0, %s95
      %s98 = sphi 0, %s97
      %s112 = sphi 0, %s98
      %s116 = sphi 0, %s116
      %s118 = sphi 0, %s116
      %s119 = sphi 0, %s118
      %s133 = sphi 0, %s119
      %s139 = sphi 0, %s141
      %s142 = sphi 0, %s139
      %s143 = sphi 0, %s142
      %s159 = sphi 0, %s143
    $region4: #{tpu_custom_call.1} parent=1 // loop_header_branch
      %22 = sbr.rel (%p20) target = $region8
    $region5: #{tpu_custom_call.1} parent=1 // loop_body
      %s24 = ssub.s32 %s19, 1
      %s25 = ssub.s32 %s19, 2
      %s26 = sadd.s32 %s19, 1
      %s27 = ssub.s32 %s19, %s26
      %p28 = scmp.eq.s32.totalorder %s27, 0
      %s30 = sadd.s32 %s29, 1
      %s31 = scalar_select %p28, %s29, %s30
      %p34 = pneg %p28
      %p35 = scmp.eq.s32.totalorder %s19, 1
      %p36 = por %p34, %p35
      %p37 = scmp.ne.s32.totalorder %s29, %s32
      %p38 = scmp.eq.s32.totalorder %s19, 0
      %p39 = por %p37, %p38
      %p40 = scmp.ne.s32.totalorder %s29, %s32
      %p41 = scmp.eq.s32.totalorder %s24, 1
      %p42 = por %p40, %p41
      %p43 = scmp.ne.s32.totalorder %s32, %s33
      %p44 = scmp.eq.s32.totalorder %s24, 0
      %p45 = por %p43, %p44
      %p46 = scmp.ne.s32.totalorder %s32, %s33
      %p47 = scmp.eq.s32.totalorder %s25, 1
      %p48 = por %p46, %p47
      %p50 = scmp.ne.s32.totalorder %s33, %s49
      %p51 = scmp.eq.s32.totalorder %s25, 0
      %p52 = por %p50, %p51
      %s54 = sadd.s32 %s53, 1
      %p57 = scmp.eq.s32.totalorder %s19, 1
      %p58 = scmp.ne.s32.totalorder %s53, %s55
      %p59 = scmp.eq.s32.totalorder %s19, 0
      %p60 = por %p58, %p59
      %p61 = scmp.ne.s32.totalorder %s53, %s55
      %p62 = scmp.eq.s32.totalorder %s24, 1
      %p63 = por %p61, %p62
      %p64 = scmp.ne.s32.totalorder %s55, %s56
      %p65 = scmp.eq.s32.totalorder %s24, 0
      %p66 = por %p64, %p65
      %p67 = scmp.ne.s32.totalorder %s55, %s56
      %p68 = scmp.eq.s32.totalorder %s25, 1
      %p69 = por %p67, %p68
      %p71 = scmp.ne.s32.totalorder %s56, %s70
      %p72 = scmp.eq.s32.totalorder %s25, 0
      %p73 = por %p71, %p72
      %s75 = sadd.s32 %s74, 1
      %p78 = scmp.eq.s32.totalorder %s19, 1
      %p79 = scmp.ne.s32.totalorder %s74, %s76
      %p80 = scmp.eq.s32.totalorder %s19, 0
      %p81 = por %p79, %p80
      %p82 = scmp.ne.s32.totalorder %s74, %s76
      %p83 = scmp.eq.s32.totalorder %s24, 1
      %p84 = por %p82, %p83
      %p85 = scmp.ne.s32.totalorder %s76, %s77
      %p86 = scmp.eq.s32.totalorder %s24, 0
      %p87 = por %p85, %p86
      %p88 = scmp.ne.s32.totalorder %s76, %s77
      %p89 = scmp.eq.s32.totalorder %s25, 1
      %p90 = por %p88, %p89
      %p92 = scmp.ne.s32.totalorder %s77, %s91
      %p93 = scmp.eq.s32.totalorder %s25, 0
      %p94 = por %p92, %p93
      %s96 = sadd.s32 %s95, 1
      %p99 = scmp.eq.s32.totalorder %s19, 1
      %p100 = scmp.ne.s32.totalorder %s95, %s97
      %p101 = scmp.eq.s32.totalorder %s19, 0
      %p102 = por %p100, %p101
      %p103 = scmp.ne.s32.totalorder %s95, %s97
      %p104 = scmp.eq.s32.totalorder %s24, 1
      %p105 = por %p103, %p104
      %p106 = scmp.ne.s32.totalorder %s97, %s98
      %p107 = scmp.eq.s32.totalorder %s24, 0
      %p108 = por %p106, %p107
      %p109 = scmp.ne.s32.totalorder %s97, %s98
      %p110 = scmp.eq.s32.totalorder %s25, 1
      %p111 = por %p109, %p110
      %p113 = scmp.ne.s32.totalorder %s98, %s112
      %p114 = scmp.eq.s32.totalorder %s25, 0
      %p115 = por %p113, %p114
      %s117 = sadd.s32 %s116, 1
      %p120 = scmp.eq.s32.totalorder %s19, 1
      %p121 = scmp.ne.s32.totalorder %s116, %s118
      %p122 = scmp.eq.s32.totalorder %s19, 0
      %p123 = por %p121, %p122
      %p124 = scmp.ne.s32.totalorder %s116, %s118
      %p125 = scmp.eq.s32.totalorder %s24, 1
      %p126 = por %p124, %p125
      %p127 = scmp.ne.s32.totalorder %s118, %s119
      %p128 = scmp.eq.s32.totalorder %s24, 0
      %p129 = por %p127, %p128
      %p130 = scmp.ne.s32.totalorder %s118, %s119
      %p131 = scmp.eq.s32.totalorder %s25, 1
      %p132 = por %p130, %p131
      %p134 = scmp.ne.s32.totalorder %s119, %s133
      %p135 = scmp.eq.s32.totalorder %s25, 0
      %p136 = por %p134, %p135
      %s137 = ssub.s32 %s19, %s26
      %p138 = scmp.eq.s32.totalorder %s137, 0
      %s140 = sadd.s32 %s139, 1
      %s141 = scalar_select %p138, %s139, %s140
      %p144 = pneg %p138
      %p145 = scmp.eq.s32.totalorder %s19, 1
      %p146 = por %p144, %p145
      %p147 = scmp.ne.s32.totalorder %s139, %s142
      %p148 = scmp.eq.s32.totalorder %s19, 0
      %p149 = por %p147, %p148
      %p150 = scmp.ne.s32.totalorder %s139, %s142
      %p151 = scmp.eq.s32.totalorder %s24, 1
      %p152 = por %p150, %p151
      %p153 = scmp.ne.s32.totalorder %s142, %s143
      %p154 = scmp.eq.s32.totalorder %s24, 0
      %p155 = por %p153, %p154
      %p156 = scmp.ne.s32.totalorder %s142, %s143
      %p157 = scmp.eq.s32.totalorder %s25, 1
      %p158 = por %p156, %p157
      %p160 = scmp.ne.s32.totalorder %s143, %s159
      %p161 = scmp.eq.s32.totalorder %s25, 0
      %p162 = por %p160, %p161
      %p163 = scmp.le.s32.totalorder 1, %s19
      %p164 = scmp.lt.s32.totalorder %s19, 3
      %p165 = pnand %p163, %p164
      %p166 = pneg %p165
      // Predicated region
      $region9: #{tpu_custom_call.1} parent=5 // pred_check
        _
      $region10: #{tpu_custom_call.1} parent=5 // pred_check_branch
        %168 = sbr.rel (%p165) target = $region12
      $region11: #{tpu_custom_call.1} parent=5 // pred_region
        %s169 = ssub.s32 %s19, 1
        // Predicated region
        $region13: #{tpu_custom_call.1} parent=11 // pred_check
          %p170 = pneg %p66
        $region14: #{tpu_custom_call.1} parent=11 // pred_check_branch
          %172 = sbr.rel (%p170) target = $region16
        $region15: #{tpu_custom_call.1} parent=11 // pred_region
          %s174 = ssub.s32 512, 512
          %175 = vsyncadd [#allocation7], %s174
          %s176 = sshll.u32 [#allocation6], 4
          %s177 = int_to_ptr.vmem [resolvable:$true] %s176
          %182 = dma.hbm_to_vmem [thread:$0]  %s1, 512, %s177, [#allocation7], 128, 128, 8
        $region16: #{tpu_custom_call.1} parent=11 // pred_fallthru
          _
        // Predicated region
        $region17: #{tpu_custom_call.1} parent=11 // pred_check
          %p183 = pneg %p87
        $region18: #{tpu_custom_call.1} parent=11 // pred_check_branch
          %185 = sbr.rel (%p183) target = $region20
        $region19: #{tpu_custom_call.1} parent=11 // pred_region
          _
        $region20: #{tpu_custom_call.1} parent=11 // pred_fallthru
          _
        // Predicated region
        $region21: #{tpu_custom_call.1} parent=11 // pred_check
          %p186 = pneg %p108
        $region22: #{tpu_custom_call.1} parent=11 // pred_check_branch
          %188 = sbr.rel (%p186) target = $region24
        $region23: #{tpu_custom_call.1} parent=11 // pred_region
          _
        $region24: #{tpu_custom_call.1} parent=11 // pred_fallthru
          _
        // Predicated region
        $region25: #{tpu_custom_call.1} parent=11 // pred_check
          %p189 = pneg %p129
        $region26: #{tpu_custom_call.1} parent=11 // pred_check_branch
          %191 = sbr.rel (%p189) target = $region28
        $region27: #{tpu_custom_call.1} parent=11 // pred_region
          _
        $region28: #{tpu_custom_call.1} parent=11 // pred_fallthru
          _
      $region12: #{tpu_custom_call.1} parent=5 // pred_fallthru
        _
      %p192 = scmp.lt.s32.totalorder %s19, 2
      // Predicated region
      $region29: #{tpu_custom_call.1} parent=5 // pred_check
        %p193 = pneg %p192
      $region30: #{tpu_custom_call.1} parent=5 // pred_check_branch
        %195 = sbr.rel (%p193) target = $region32
      $region31: #{tpu_custom_call.1} parent=5 // pred_region
        // Predicated region
        $region33: #{tpu_custom_call.1} parent=31 // pred_check
          %p196 = pneg %p39
        $region34: #{tpu_custom_call.1} parent=31 // pred_check_branch
          %198 = sbr.rel (%p196) target = $region36
        $region35: #{tpu_custom_call.1} parent=31 // pred_region
          %s199 = sand.u32 %s29, 1
          %s200 = scalar_lea.sflag [#allocation4], %s199
          %s201 = sand.u32 %s29, 1
          %s202 = smul.addr %s201, 256
          %s203 = scalar_lea.vmem [#allocation3], %s202
          %s204 = smul.u32 16, %s19
          %s206 = ssub.s32 4096, 4096
          %207 = vsyncadd %s200, %s206
          %s208 = smul.addr %s204, 2
          %s209 = smul.addr %s208, 128
          %s210 = scalar_lea.hbm %s0, %s209
          %s211 = sshll.u32 %s203, 4
          %s212 = int_to_ptr.vmem [resolvable:$true] %s211
          %217 = dma.hbm_to_vmem [thread:$0]  %s210, 4096, %s212, %s200, 128, 128, 8
        $region36: #{tpu_custom_call.1} parent=31 // pred_fallthru
          _
      $region32: #{tpu_custom_call.1} parent=5 // pred_fallthru
        _
      %p218 = scmp.le.s32.totalorder 1, %s19
      %p219 = scmp.lt.s32.totalorder %s19, 3
      %p220 = pnand %p218, %p219
      %p221 = pneg %p220
      // Predicated region
      $region37: #{tpu_custom_call.1} parent=5 // pred_check
        _
      $region38: #{tpu_custom_call.1} parent=5 // pred_check_branch
        %223 = sbr.rel (%p220) target = $region40
      $region39: #{tpu_custom_call.1} parent=5 // pred_region
        %s224 = ssub.s32 %s19, 1
        %s225 = sand.u32 %s32, 1
        %s226 = scalar_lea.sflag [#allocation4], %s225
        %s227 = sand.u32 %s32, 1
        %s228 = smul.addr %s227, 256
        %s229 = scalar_lea.vmem [#allocation3], %s228
        // Predicated region
        $region41: #{tpu_custom_call.1} parent=39 // pred_check
          %p230 = pneg %p45
        $region42: #{tpu_custom_call.1} parent=39 // pred_check_branch
          %232 = sbr.rel (%p230) target = $region44
        $region43: #{tpu_custom_call.1} parent=39 // pred_region
          %233 = dma.done %s226, 4096
        $region44: #{tpu_custom_call.1} parent=39 // pred_fallthru
          _
        // Predicated region
        $region45: #{tpu_custom_call.1} parent=39 // pred_check
          %p234 = pneg %p66
        $region46: #{tpu_custom_call.1} parent=39 // pred_check_branch
          %236 = sbr.rel (%p234) target = $region48
        $region47: #{tpu_custom_call.1} parent=39 // pred_region
          %237 = dma.done [#allocation7], 512
        $region48: #{tpu_custom_call.1} parent=39 // pred_fallthru
          _
        %s238 = sand.u32 %s32, 1
        %s239 = scalar_lea.sflag [#allocation4], %s238
        %s240 = sand.u32 %s32, 1
        %s241 = smul.addr %s240, 256
        %s242 = scalar_lea.vmem [#allocation3], %s241
        %p243 = pneg %p45
        %p244 = pneg %p42
        %p245 = pneg %p66
        %p246 = pneg %p63
        %p247 = pneg %p87
        %p248 = pneg %p84
        %p249 = pneg %p108
        %p250 = pneg %p105
        %p251 = pneg %p129
        %p252 = pneg %p126
        %p253 = pneg %p155
        %p254 = pneg %p152
        %s255 = sand.u32 %s142, 1
        %s256 = scalar_lea.sflag [#allocation5], %s255
        %s257 = sand.u32 %s142, 1
        %s258 = smul.addr %s257, 16
        %s259 = scalar_lea.vmem [#allocation8], %s258
        %s260 = smul.u32 16, %s24
        %s261 = smul.u32 2, %s24
        %v262 = vld [vmem:[%s229] sm:$0xff]
        %v263 = vld [vmem:[%s229 + $0x8] sm:$0xff]
        %v264 = vld [vmem:[%s229 + $0x10] sm:$0xff]
        %v265 = vld [vmem:[%s229 + $0x18] sm:$0xff]
        %v266 = vld [vmem:[%s229 + $0x20] sm:$0xff]
        %v267 = vld [vmem:[%s229 + $0x28] sm:$0xff]
        %v268 = vld [vmem:[%s229 + $0x30] sm:$0xff]
        %v269 = vld [vmem:[%s229 + $0x38] sm:$0xff]
        %v270 = vld [vmem:[%s229 + $0x40] sm:$0xff]
        %v271 = vld [vmem:[%s229 + $0x48] sm:$0xff]
        %v272 = vld [vmem:[%s229 + $0x50] sm:$0xff]
        %v273 = vld [vmem:[%s229 + $0x58] sm:$0xff]
        %v274 = vld [vmem:[%s229 + $0x60] sm:$0xff]
        %v275 = vld [vmem:[%s229 + $0x68] sm:$0xff]
        %v276 = vld [vmem:[%s229 + $0x70] sm:$0xff]
        %v277 = vld [vmem:[%s229 + $0x78] sm:$0xff]
        %v278 = vld [vmem:[%s229 + $0x80] sm:$0xff]
        %v279 = vld [vmem:[%s229 + $0x88] sm:$0xff]
        %v280 = vld [vmem:[%s229 + $0x90] sm:$0xff]
        %v281 = vld [vmem:[%s229 + $0x98] sm:$0xff]
        %v282 = vld [vmem:[%s229 + $0xa0] sm:$0xff]
        %v283 = vld [vmem:[%s229 + $0xa8] sm:$0xff]
        %v284 = vld [vmem:[%s229 + $0xb0] sm:$0xff]
        %v285 = vld [vmem:[%s229 + $0xb8] sm:$0xff]
        %v286 = vld [vmem:[%s229 + $0xc0] sm:$0xff]
        %v287 = vld [vmem:[%s229 + $0xc8] sm:$0xff]
        %v288 = vld [vmem:[%s229 + $0xd0] sm:$0xff]
        %v289 = vld [vmem:[%s229 + $0xd8] sm:$0xff]
        %v290 = vld [vmem:[%s229 + $0xe0] sm:$0xff]
        %v291 = vld [vmem:[%s229 + $0xe8] sm:$0xff]
        %v292 = vld [vmem:[%s229 + $0xf0] sm:$0xff]
        %v293 = vld [vmem:[%s229 + $0xf8] sm:$0xff]
        %v294 = vld [vmem:[#allocation6] sm:$0xff]
        %v295 = vld [vmem:[#allocation6 + $0x8] sm:$0xff]
        %v296 = vld [vmem:[#allocation6 + $0x10] sm:$0xff]
        %v297 = vld [vmem:[#allocation6 + $0x18] sm:$0xff]
        %v298 = vld [vmem:[%s2] sm:$0x1]
        %v300 = vlaneseq
        %v301 = vshrl.u32 %v300, 7
        %v302 = vsub.s32 0, %v301
        %v303 = vrot.slane %v298, %v302
        %vm305 = vcmask 261120
        %v307 = vsel %vm305, %v262, 0
        %v310 = vsel %vm305, %v263, 0
        %v313 = vsel %vm305, %v264, 0
        %v316 = vsel %vm305, %v265, 0
        %v319 = vsel %vm305, %v266, 0
        %v322 = vsel %vm305, %v267, 0
        %v325 = vsel %vm305, %v268, 0
        %v328 = vsel %vm305, %v269, 0
        %v331 = vsel %vm305, %v270, 0
        %v334 = vsel %vm305, %v271, 0
        %v337 = vsel %vm305, %v272, 0
        %v340 = vsel %vm305, %v273, 0
        %v343 = vsel %vm305, %v274, 0
        %v346 = vsel %vm305, %v275, 0
        %v349 = vsel %vm305, %v276, 0
        %v352 = vsel %vm305, %v277, 0
        %v355 = vsel %vm305, %v278, 0
        %v358 = vsel %vm305, %v279, 0
        %v361 = vsel %vm305, %v280, 0
        %v364 = vsel %vm305, %v281, 0
        %v367 = vsel %vm305, %v282, 0
        %v370 = vsel %vm305, %v283, 0
        %v373 = vsel %vm305, %v284, 0
        %v376 = vsel %vm305, %v285, 0
        %v379 = vsel %vm305, %v286, 0
        %v382 = vsel %vm305, %v287, 0
        %v385 = vsel %vm305, %v288, 0
        %v388 = vsel %vm305, %v289, 0
        %v391 = vsel %vm305, %v290, 0
        %v394 = vsel %vm305, %v291, 0
        %v397 = vsel %vm305, %v292, 0
        %v400 = vsel %vm305, %v293, 0
        %402 = vmatprep.subr.mxu0 0.0
        %403 = vmatpush1.msra.mxu0 0.0
        %404 = vmatprep.subr.mxu0 0.0
        %405 = vmatpush1.msra.mxu0 0.0
        %406 = vmatprep.subr.mxu0 0.0
        %407 = vmatpush1.msra.mxu0 0.0
        %408 = vmatprep.subr.mxu0 0.0
        %409 = vmatpush1.msra.mxu0 0.0
        %410 = vmatprep.subr.mxu0 0.0
        %411 = vmatpush1.msra.mxu0 0.0
        %412 = vmatprep.subr.mxu0 0.0
        %413 = vmatpush1.msra.mxu0 0.0
        %414 = vmatprep.subr.mxu0 0.0
        %415 = vmatpush1.msra.mxu0 0.0
        %416 = vmatprep.subr.mxu0 0.0
        %417 = vmatpush1.msra.mxu0 0.0
        %418 = vmatprep.subr.mxu0 0.0
        %419 = vmatpush1.msra.mxu0 0.0
        %420 = vmatprep.subr.mxu0 0.0
        %421 = vmatpush1.msra.mxu0 0.0
        %422 = vmatprep.subr.mxu0 0.0
        %423 = vmatpush1.msra.mxu0 0.0
        %424 = vmatprep.subr.mxu0 0.0
        %425 = vmatpush1.msra.mxu0 0.0
        %426 = vmatprep.subr.mxu0 0.0
        %v427 = vand.u32 %v297, 4294901760
        %428 = vmatpush1.msra.mxu0 %v427
        %429 = vmatprep.subr.mxu0 0.0
        %v430 = vand.u32 %v296, 4294901760
        %431 = vmatpush1.msra.mxu0 %v430
        %432 = vmatprep.subr.mxu0 0.0
        %v433 = vand.u32 %v295, 4294901760
        %434 = vmatpush1.msra.mxu0 %v433
        %435 = vmatprep.subr.mxu0 0.0
        %v436 = vand.u32 %v294, 4294901760
        %437 = vmatpush1.msra.mxu0 %v436
        %438 = vmatprep.subr.mxu0 0.0
        %439 = vmatpush2.msra.mxu0 0.0
        %440 = vmatprep.subr.mxu0 0.0
        %441 = vmatpush2.msra.mxu0 0.0
        %442 = vmatprep.subr.mxu0 0.0
        %443 = vmatpush2.msra.mxu0 0.0
        %444 = vmatprep.subr.mxu0 0.0
        %445 = vmatpush2.msra.mxu0 0.0
        %446 = vmatprep.subr.mxu0 0.0
        %447 = vmatpush2.msra.mxu0 0.0
        %448 = vmatprep.subr.mxu0 0.0
        %449 = vmatpush2.msra.mxu0 0.0
        %450 = vmatprep.subr.mxu0 0.0
        %451 = vmatpush2.msra.mxu0 0.0
        %452 = vmatprep.subr.mxu0 0.0
        %453 = vmatpush2.msra.mxu0 0.0
        %454 = vmatprep.subr.mxu0 0.0
        %455 = vmatpush2.msra.mxu0 0.0
        %456 = vmatprep.subr.mxu0 0.0
        %457 = vmatpush2.msra.mxu0 0.0
        %458 = vmatprep.subr.mxu0 0.0
        %459 = vmatpush2.msra.mxu0 0.0
        %460 = vmatprep.subr.mxu0 0.0
        %461 = vmatpush2.msra.mxu0 0.0
        %462 = vmatprep.subr.mxu0 0.0
        %463 = vmatpush2.msra.mxu0 0.0
        %464 = vmatprep.subr.mxu0 0.0
        %465 = vmatpush2.msra.mxu0 0.0
        %466 = vmatprep.subr.mxu0 0.0
        %467 = vmatpush2.msra.mxu0 0.0
        %468 = vmatprep.subr.mxu0 0.0
        %469 = vmatpush2.msra.mxu0 0.0
        %470 = vmatprep.mubr.f32.mxu0 0.0
        %v471 = vand.u32 %v307, 4294901760
        %v472 = vsub.f32 %v307, %v471
        %v473 = vand.u32 %v472, 4294901760
        %v474 = vsub.f32 %v472, %v473
        %v475 = vand.u32 %v474, 4294901760
        %476 = vmatmul.mubr.f32.gmra.mxu0 %v475
        %v477 = vpop.f32.mrf.mxu0
        %v478 = vadd.f32 %v303, %v477
        %v479 = vpop.f32.mrf.mxu0
        %480 = vmatprep.mubr.f32.mxu0 0.0
        %v481 = vand.u32 %v310, 4294901760
        %v482 = vsub.f32 %v310, %v481
        %v483 = vand.u32 %v482, 4294901760
        %v484 = vsub.f32 %v482, %v483
        %v485 = vand.u32 %v484, 4294901760
        %486 = vmatmul.mubr.f32.gmra.mxu0 %v485
        %v487 = vpop.f32.mrf.mxu0
        %v488 = vadd.f32 %v303, %v487
        %v489 = vpop.f32.mrf.mxu0
        %490 = vmatprep.mubr.f32.mxu0 0.0
        %v491 = vand.u32 %v313, 4294901760
        %v492 = vsub.f32 %v313, %v491
        %v493 = vand.u32 %v492, 4294901760
        %v494 = vsub.f32 %v492, %v493
        %v495 = vand.u32 %v494, 4294901760
        %496 = vmatmul.mubr.f32.gmra.mxu0 %v495
        %v497 = vpop.f32.mrf.mxu0
        %v498 = vadd.f32 %v303, %v497
        %v499 = vpop.f32.mrf.mxu0
        %500 = vmatprep.mubr.f32.mxu0 0.0
        %v501 = vand.u32 %v316, 4294901760
        %v502 = vsub.f32 %v316, %v501
        %v503 = vand.u32 %v502, 4294901760
        %v504 = vsub.f32 %v502, %v503
        %v505 = vand.u32 %v504, 4294901760
        %506 = vmatmul.mubr.f32.gmra.mxu0 %v505
        %v507 = vpop.f32.mrf.mxu0
        %v508 = vadd.f32 %v303, %v507
        %v509 = vpop.f32.mrf.mxu0
        %510 = vmatprep.mubr.f32.mxu0 0.0
        %v511 = vand.u32 %v319, 4294901760
        %v512 = vsub.f32 %v319, %v511
        %v513 = vand.u32 %v512, 4294901760
        %v514 = vsub.f32 %v512, %v513
        %v515 = vand.u32 %v514, 4294901760
        %516 = vmatmul.mubr.f32.gmra.mxu0 %v515
        %v517 = vpop.f32.mrf.mxu0
        %v518 = vadd.f32 %v303, %v517
        %v519 = vpop.f32.mrf.mxu0
        %520 = vmatprep.mubr.f32.mxu0 0.0
        %v521 = vand.u32 %v322, 4294901760
        %v522 = vsub.f32 %v322, %v521
        %v523 = vand.u32 %v522, 4294901760
        %v524 = vsub.f32 %v522, %v523
        %v525 = vand.u32 %v524, 4294901760
        %526 = vmatmul.mubr.f32.gmra.mxu0 %v525
        %v527 = vpop.f32.mrf.mxu0
        %v528 = vadd.f32 %v303, %v527
        %v529 = vpop.f32.mrf.mxu0
        %530 = vmatprep.mubr.f32.mxu0 0.0
        %v531 = vand.u32 %v325, 4294901760
        %v532 = vsub.f32 %v325, %v531
        %v533 = vand.u32 %v532, 4294901760
        %v534 = vsub.f32 %v532, %v533
        %v535 = vand.u32 %v534, 4294901760
        %536 = vmatmul.mubr.f32.gmra.mxu0 %v535
        %v537 = vpop.f32.mrf.mxu0
        %v538 = vadd.f32 %v303, %v537
        %v539 = vpop.f32.mrf.mxu0
        %540 = vmatprep.mubr.f32.mxu0 0.0
        %v541 = vand.u32 %v328, 4294901760
        %v542 = vsub.f32 %v328, %v541
        %v543 = vand.u32 %v542, 4294901760
        %v544 = vsub.f32 %v542, %v543
        %v545 = vand.u32 %v544, 4294901760
        %546 = vmatmul.mubr.f32.gmra.mxu0 %v545
        %v547 = vpop.f32.mrf.mxu0
        %v548 = vadd.f32 %v303, %v547
        %v549 = vpop.f32.mrf.mxu0
        %550 = vmatprep.mubr.f32.mxu0 0.0
        %v551 = vand.u32 %v331, 4294901760
        %v552 = vsub.f32 %v331, %v551
        %v553 = vand.u32 %v552, 4294901760
        %v554 = vsub.f32 %v552, %v553
        %v555 = vand.u32 %v554, 4294901760
        %556 = vmatmul.mubr.f32.gmra.mxu0 %v555
        %v557 = vpop.f32.mrf.mxu0
        %v558 = vadd.f32 %v303, %v557
        %v559 = vpop.f32.mrf.mxu0
        %560 = vmatprep.mubr.f32.mxu0 0.0
        %v561 = vand.u32 %v334, 4294901760
        %v562 = vsub.f32 %v334, %v561
        %v563 = vand.u32 %v562, 4294901760
        %v564 = vsub.f32 %v562, %v563
        %v565 = vand.u32 %v564, 4294901760
        %566 = vmatmul.mubr.f32.gmra.mxu0 %v565
        %v567 = vpop.f32.mrf.mxu0
        %v568 = vadd.f32 %v303, %v567
        %v569 = vpop.f32.mrf.mxu0
        %570 = vmatprep.mubr.f32.mxu0 0.0
        %v571 = vand.u32 %v337, 4294901760
        %v572 = vsub.f32 %v337, %v571
        %v573 = vand.u32 %v572, 4294901760
        %v574 = vsub.f32 %v572, %v573
        %v575 = vand.u32 %v574, 4294901760
        %576 = vmatmul.mubr.f32.gmra.mxu0 %v575
        %v577 = vpop.f32.mrf.mxu0
        %v578 = vadd.f32 %v303, %v577
        %v579 = vpop.f32.mrf.mxu0
        %580 = vmatprep.mubr.f32.mxu0 0.0
        %v581 = vand.u32 %v340, 4294901760
        %v582 = vsub.f32 %v340, %v581
        %v583 = vand.u32 %v582, 4294901760
        %v584 = vsub.f32 %v582, %v583
        %v585 = vand.u32 %v584, 4294901760
        %586 = vmatmul.mubr.f32.gmra.mxu0 %v585
        %v587 = vpop.f32.mrf.mxu0
        %v588 = vadd.f32 %v303, %v587
        %v589 = vpop.f32.mrf.mxu0
        %590 = vmatprep.mubr.f32.mxu0 0.0
        %v591 = vand.u32 %v343, 4294901760
        %v592 = vsub.f32 %v343, %v591
        %v593 = vand.u32 %v592, 4294901760
        %v594 = vsub.f32 %v592, %v593
        %v595 = vand.u32 %v594, 4294901760
        %596 = vmatmul.mubr.f32.gmra.mxu0 %v595
        %v597 = vpop.f32.mrf.mxu0
        %v598 = vadd.f32 %v303, %v597
        %v599 = vpop.f32.mrf.mxu0
        %600 = vmatprep.mubr.f32.mxu0 0.0
        %v601 = vand.u32 %v346, 4294901760
        %v602 = vsub.f32 %v346, %v601
        %v603 = vand.u32 %v602, 4294901760
        %v604 = vsub.f32 %v602, %v603
        %v605 = vand.u32 %v604, 4294901760
        %606 = vmatmul.mubr.f32.gmra.mxu0 %v605
        %v607 = vpop.f32.mrf.mxu0
        %v608 = vadd.f32 %v303, %v607
        %v609 = vpop.f32.mrf.mxu0
        %610 = vmatprep.mubr.f32.mxu0 0.0
        %v611 = vand.u32 %v349, 4294901760
        %v612 = vsub.f32 %v349, %v611
        %v613 = vand.u32 %v612, 4294901760
        %v614 = vsub.f32 %v612, %v613
        %v615 = vand.u32 %v614, 4294901760
        %616 = vmatmul.mubr.f32.gmra.mxu0 %v615
        %v617 = vpop.f32.mrf.mxu0
        %v618 = vadd.f32 %v303, %v617
        %v619 = vpop.f32.mrf.mxu0
        %620 = vmatprep.mubr.f32.mxu0 0.0
        %v621 = vand.u32 %v352, 4294901760
        %v622 = vsub.f32 %v352, %v621
        %v623 = vand.u32 %v622, 4294901760
        %v624 = vsub.f32 %v622, %v623
        %v625 = vand.u32 %v624, 4294901760
        %626 = vmatmul.mubr.f32.gmra.mxu0 %v625
        %v627 = vpop.f32.mrf.mxu0
        %v628 = vadd.f32 %v303, %v627
        %v629 = vpop.f32.mrf.mxu0
        %630 = vmatprep.mubr.f32.mxu0 0.0
        %v631 = vand.u32 %v355, 4294901760
        %v632 = vsub.f32 %v355, %v631
        %v633 = vand.u32 %v632, 4294901760
        %v634 = vsub.f32 %v632, %v633
        %v635 = vand.u32 %v634, 4294901760
        %636 = vmatmul.mubr.f32.gmra.mxu0 %v635
        %v637 = vpop.f32.mrf.mxu0
        %v638 = vadd.f32 %v303, %v637
        %v639 = vpop.f32.mrf.mxu0
        %640 = vmatprep.mubr.f32.mxu0 0.0
        %v641 = vand.u32 %v358, 4294901760
        %v642 = vsub.f32 %v358, %v641
        %v643 = vand.u32 %v642, 4294901760
        %v644 = vsub.f32 %v642, %v643
        %v645 = vand.u32 %v644, 4294901760
        %646 = vmatmul.mubr.f32.gmra.mxu0 %v645
        %v647 = vpop.f32.mrf.mxu0
        %v648 = vadd.f32 %v303, %v647
        %v649 = vpop.f32.mrf.mxu0
        %650 = vmatprep.mubr.f32.mxu0 0.0
        %v651 = vand.u32 %v361, 4294901760
        %v652 = vsub.f32 %v361, %v651
        %v653 = vand.u32 %v652, 4294901760
        %v654 = vsub.f32 %v652, %v653
        %v655 = vand.u32 %v654, 4294901760
        %656 = vmatmul.mubr.f32.gmra.mxu0 %v655
        %v657 = vpop.f32.mrf.mxu0
        %v658 = vadd.f32 %v303, %v657
        %v659 = vpop.f32.mrf.mxu0
        %660 = vmatprep.mubr.f32.mxu0 0.0
        %v661 = vand.u32 %v364, 4294901760
        %v662 = vsub.f32 %v364, %v661
        %v663 = vand.u32 %v662, 4294901760
        %v664 = vsub.f32 %v662, %v663
        %v665 = vand.u32 %v664, 4294901760
        %666 = vmatmul.mubr.f32.gmra.mxu0 %v665
        %v667 = vpop.f32.mrf.mxu0
        %v668 = vadd.f32 %v303, %v667
        %v669 = vpop.f32.mrf.mxu0
        %670 = vmatprep.mubr.f32.mxu0 0.0
        %v671 = vand.u32 %v367, 4294901760
        %v672 = vsub.f32 %v367, %v671
        %v673 = vand.u32 %v672, 4294901760
        %v674 = vsub.f32 %v672, %v673
        %v675 = vand.u32 %v674, 4294901760
        %676 = vmatmul.mubr.f32.gmra.mxu0 %v675
        %v677 = vpop.f32.mrf.mxu0
        %v678 = vadd.f32 %v303, %v677
        %v679 = vpop.f32.mrf.mxu0
        %680 = vmatprep.mubr.f32.mxu0 0.0
        %v681 = vand.u32 %v370, 4294901760
        %v682 = vsub.f32 %v370, %v681
        %v683 = vand.u32 %v682, 4294901760
        %v684 = vsub.f32 %v682, %v683
        %v685 = vand.u32 %v684, 4294901760
        %686 = vmatmul.mubr.f32.gmra.mxu0 %v685
        %v687 = vpop.f32.mrf.mxu0
        %v688 = vadd.f32 %v303, %v687
        %v689 = vpop.f32.mrf.mxu0
        %690 = vmatprep.mubr.f32.mxu0 0.0
        %v691 = vand.u32 %v373, 4294901760
        %v692 = vsub.f32 %v373, %v691
        %v693 = vand.u32 %v692, 4294901760
        %v694 = vsub.f32 %v692, %v693
        %v695 = vand.u32 %v694, 4294901760
        %696 = vmatmul.mubr.f32.gmra.mxu0 %v695
        %v697 = vpop.f32.mrf.mxu0
        %v698 = vadd.f32 %v303, %v697
        %v699 = vpop.f32.mrf.mxu0
        %700 = vmatprep.mubr.f32.mxu0 0.0
        %v701 = vand.u32 %v376, 4294901760
        %v702 = vsub.f32 %v376, %v701
        %v703 = vand.u32 %v702, 4294901760
        %v704 = vsub.f32 %v702, %v703
        %v705 = vand.u32 %v704, 4294901760
        %706 = vmatmul.mubr.f32.gmra.mxu0 %v705
        %v707 = vpop.f32.mrf.mxu0
        %v708 = vadd.f32 %v303, %v707
        %v709 = vpop.f32.mrf.mxu0
        %710 = vmatprep.mubr.f32.mxu0 0.0
        %v711 = vand.u32 %v379, 4294901760
        %v712 = vsub.f32 %v379, %v711
        %v713 = vand.u32 %v712, 4294901760
        %v714 = vsub.f32 %v712, %v713
        %v715 = vand.u32 %v714, 4294901760
        %716 = vmatmul.mubr.f32.gmra.mxu0 %v715
        %v717 = vpop.f32.mrf.mxu0
        %v718 = vadd.f32 %v303, %v717
        %v719 = vpop.f32.mrf.mxu0
        %720 = vmatprep.mubr.f32.mxu0 0.0
        %v721 = vand.u32 %v382, 4294901760
        %v722 = vsub.f32 %v382, %v721
        %v723 = vand.u32 %v722, 4294901760
        %v724 = vsub.f32 %v722, %v723
        %v725 = vand.u32 %v724, 4294901760
        %726 = vmatmul.mubr.f32.gmra.mxu0 %v725
        %v727 = vpop.f32.mrf.mxu0
        %v728 = vadd.f32 %v303, %v727
        %v729 = vpop.f32.mrf.mxu0
        %730 = vmatprep.mubr.f32.mxu0 0.0
        %v731 = vand.u32 %v385, 4294901760
        %v732 = vsub.f32 %v385, %v731
        %v733 = vand.u32 %v732, 4294901760
        %v734 = vsub.f32 %v732, %v733
        %v735 = vand.u32 %v734, 4294901760
        %736 = vmatmul.mubr.f32.gmra.mxu0 %v735
        %v737 = vpop.f32.mrf.mxu0
        %v738 = vadd.f32 %v303, %v737
        %v739 = vpop.f32.mrf.mxu0
        %740 = vmatprep.mubr.f32.mxu0 0.0
        %v741 = vand.u32 %v388, 4294901760
        %v742 = vsub.f32 %v388, %v741
        %v743 = vand.u32 %v742, 4294901760
        %v744 = vsub.f32 %v742, %v743
        %v745 = vand.u32 %v744, 4294901760
        %746 = vmatmul.mubr.f32.gmra.mxu0 %v745
        %v747 = vpop.f32.mrf.mxu0
        %v748 = vadd.f32 %v303, %v747
        %v749 = vpop.f32.mrf.mxu0
        %750 = vmatprep.mubr.f32.mxu0 0.0
        %v751 = vand.u32 %v391, 4294901760
        %v752 = vsub.f32 %v391, %v751
        %v753 = vand.u32 %v752, 4294901760
        %v754 = vsub.f32 %v752, %v753
        %v755 = vand.u32 %v754, 4294901760
        %756 = vmatmul.mubr.f32.gmra.mxu0 %v755
        %v757 = vpop.f32.mrf.mxu0
        %v758 = vadd.f32 %v303, %v757
        %v759 = vpop.f32.mrf.mxu0
        %760 = vmatprep.mubr.f32.mxu0 0.0
        %v761 = vand.u32 %v394, 4294901760
        %v762 = vsub.f32 %v394, %v761
        %v763 = vand.u32 %v762, 4294901760
        %v764 = vsub.f32 %v762, %v763
        %v765 = vand.u32 %v764, 4294901760
        %766 = vmatmul.mubr.f32.gmra.mxu0 %v765
        %v767 = vpop.f32.mrf.mxu0
        %v768 = vadd.f32 %v303, %v767
        %v769 = vpop.f32.mrf.mxu0
        %770 = vmatprep.mubr.f32.mxu0 0.0
        %v771 = vand.u32 %v397, 4294901760
        %v772 = vsub.f32 %v397, %v771
        %v773 = vand.u32 %v772, 4294901760
        %v774 = vsub.f32 %v772, %v773
        %v775 = vand.u32 %v774, 4294901760
        %776 = vmatmul.mubr.f32.gmra.mxu0 %v775
        %v777 = vpop.f32.mrf.mxu0
        %v778 = vadd.f32 %v303, %v777
        %v779 = vpop.f32.mrf.mxu0
        %780 = vmatprep.mubr.f32.mxu0 0.0
        %v781 = vand.u32 %v400, 4294901760
        %v782 = vsub.f32 %v400, %v781
        %v783 = vand.u32 %v782, 4294901760
        %v784 = vsub.f32 %v782, %v783
        %v785 = vand.u32 %v784, 4294901760
        %786 = vmatmul.mubr.f32.gmra.mxu0 %v785
        %v787 = vpop.f32.mrf.mxu0
        %v788 = vadd.f32 %v303, %v787
        %v789 = vpop.f32.mrf.mxu0
        %790 = vdwg.mxu0
        %791 = vmatprep.subr.mxu0 0.0
        %792 = vmatpush1.msra.mxu0 0.0
        %793 = vmatprep.subr.mxu0 0.0
        %794 = vmatpush1.msra.mxu0 0.0
        %795 = vmatprep.subr.mxu0 0.0
        %796 = vmatpush1.msra.mxu0 0.0
        %797 = vmatprep.subr.mxu0 0.0
        %798 = vmatpush1.msra.mxu0 0.0
        %799 = vmatprep.subr.mxu0 0.0
        %800 = vmatpush1.msra.mxu0 0.0
        %801 = vmatprep.subr.mxu0 0.0
        %802 = vmatpush1.msra.mxu0 0.0
        %803 = vmatprep.subr.mxu0 0.0
        %804 = vmatpush1.msra.mxu0 0.0
        %805 = vmatprep.subr.mxu0 0.0
        %806 = vmatpush1.msra.mxu0 0.0
        %807 = vmatprep.subr.mxu0 0.0
        %808 = vmatpush1.msra.mxu0 0.0
        %809 = vmatprep.subr.mxu0 0.0
        %810 = vmatpush1.msra.mxu0 0.0
        %811 = vmatprep.subr.mxu0 0.0
        %812 = vmatpush1.msra.mxu0 0.0
        %813 = vmatprep.subr.mxu0 0.0
        %814 = vmatpush1.msra.mxu0 0.0
        %815 = vmatprep.subr.mxu0 0.0
        %v816 = vand.u32 %v297, 4294901760
        %v817 = vsub.f32 %v297, %v816
        %v818 = vand.u32 %v817, 4294901760
        %v819 = vsub.f32 %v817, %v818
        %v820 = vand.u32 %v819, 4294901760
        %821 = vmatpush1.msra.mxu0 %v820
        %822 = vmatprep.subr.mxu0 0.0
        %v823 = vand.u32 %v296, 4294901760
        %v824 = vsub.f32 %v296, %v823
        %v825 = vand.u32 %v824, 4294901760
        %v826 = vsub.f32 %v824, %v825
        %v827 = vand.u32 %v826, 4294901760
        %828 = vmatpush1.msra.mxu0 %v827
        %829 = vmatprep.subr.mxu0 0.0
        %v830 = vand.u32 %v295, 4294901760
        %v831 = vsub.f32 %v295, %v830
        %v832 = vand.u32 %v831, 4294901760
        %v833 = vsub.f32 %v831, %v832
        %v834 = vand.u32 %v833, 4294901760
        %835 = vmatpush1.msra.mxu0 %v834
        %836 = vmatprep.subr.mxu0 0.0
        %v837 = vand.u32 %v294, 4294901760
        %v838 = vsub.f32 %v294, %v837
        %v839 = vand.u32 %v838, 4294901760
        %v840 = vsub.f32 %v838, %v839
        %v841 = vand.u32 %v840, 4294901760
        %842 = vmatpush1.msra.mxu0 %v841
        %843 = vmatprep.subr.mxu0 0.0
        %844 = vmatpush2.msra.mxu0 0.0
        %845 = vmatprep.subr.mxu0 0.0
        %846 = vmatpush2.msra.mxu0 0.0
        %847 = vmatprep.subr.mxu0 0.0
        %848 = vmatpush2.msra.mxu0 0.0
        %849 = vmatprep.subr.mxu0 0.0
        %850 = vmatpush2.msra.mxu0 0.0
        %851 = vmatprep.subr.mxu0 0.0
        %852 = vmatpush2.msra.mxu0 0.0
        %853 = vmatprep.subr.mxu0 0.0
        %854 = vmatpush2.msra.mxu0 0.0
        %855 = vmatprep.subr.mxu0 0.0
        %856 = vmatpush2.msra.mxu0 0.0
        %857 = vmatprep.subr.mxu0 0.0
        %858 = vmatpush2.msra.mxu0 0.0
        %859 = vmatprep.subr.mxu0 0.0
        %860 = vmatpush2.msra.mxu0 0.0
        %861 = vmatprep.subr.mxu0 0.0
        %862 = vmatpush2.msra.mxu0 0.0
        %863 = vmatprep.subr.mxu0 0.0
        %864 = vmatpush2.msra.mxu0 0.0
        %865 = vmatprep.subr.mxu0 0.0
        %866 = vmatpush2.msra.mxu0 0.0
        %867 = vmatprep.subr.mxu0 0.0
        %868 = vmatpush2.msra.mxu0 0.0
        %869 = vmatprep.subr.mxu0 0.0
        %870 = vmatpush2.msra.mxu0 0.0
        %871 = vmatprep.subr.mxu0 0.0
        %872 = vmatpush2.msra.mxu0 0.0
        %873 = vmatprep.subr.mxu0 0.0
        %874 = vmatpush2.msra.mxu0 0.0
        %875 = vmatprep.mubr.f32.mxu0 0.0
        %v876 = vand.u32 %v307, 4294901760
        %877 = vmatmul.mubr.f32.gmra.mxu0 %v876
        %v878 = vpop.f32.mrf.mxu0
        %v879 = vadd.f32 %v478, %v878
        %v880 = vpop.f32.mrf.mxu0
        %881 = vmatprep.mubr.f32.mxu0 0.0
        %v882 = vand.u32 %v310, 4294901760
        %883 = vmatmul.mubr.f32.gmra.mxu0 %v882
        %v884 = vpop.f32.mrf.mxu0
        %v885 = vadd.f32 %v488, %v884
        %v886 = vpop.f32.mrf.mxu0
        %887 = vmatprep.mubr.f32.mxu0 0.0
        %v888 = vand.u32 %v313, 4294901760
        %889 = vmatmul.mubr.f32.gmra.mxu0 %v888
        %v890 = vpop.f32.mrf.mxu0
        %v891 = vadd.f32 %v498, %v890
        %v892 = vpop.f32.mrf.mxu0
        %893 = vmatprep.mubr.f32.mxu0 0.0
        %v894 = vand.u32 %v316, 4294901760
        %895 = vmatmul.mubr.f32.gmra.mxu0 %v894
        %v896 = vpop.f32.mrf.mxu0
        %v897 = vadd.f32 %v508, %v896
        %v898 = vpop.f32.mrf.mxu0
        %899 = vmatprep.mubr.f32.mxu0 0.0
        %v900 = vand.u32 %v319, 4294901760
        %901 = vmatmul.mubr.f32.gmra.mxu0 %v900
        %v902 = vpop.f32.mrf.mxu0
        %v903 = vadd.f32 %v518, %v902
        %v904 = vpop.f32.mrf.mxu0
        %905 = vmatprep.mubr.f32.mxu0 0.0
        %v906 = vand.u32 %v322, 4294901760
        %907 = vmatmul.mubr.f32.gmra.mxu0 %v906
        %v908 = vpop.f32.mrf.mxu0
        %v909 = vadd.f32 %v528, %v908
        %v910 = vpop.f32.mrf.mxu0
        %911 = vmatprep.mubr.f32.mxu0 0.0
        %v912 = vand.u32 %v325, 4294901760
        %913 = vmatmul.mubr.f32.gmra.mxu0 %v912
        %v914 = vpop.f32.mrf.mxu0
        %v915 = vadd.f32 %v538, %v914
        %v916 = vpop.f32.mrf.mxu0
        %917 = vmatprep.mubr.f32.mxu0 0.0
        %v918 = vand.u32 %v328, 4294901760
        %919 = vmatmul.mubr.f32.gmra.mxu0 %v918
        %v920 = vpop.f32.mrf.mxu0
        %v921 = vadd.f32 %v548, %v920
        %v922 = vpop.f32.mrf.mxu0
        %923 = vmatprep.mubr.f32.mxu0 0.0
        %v924 = vand.u32 %v331, 4294901760
        %925 = vmatmul.mubr.f32.gmra.mxu0 %v924
        %v926 = vpop.f32.mrf.mxu0
        %v927 = vadd.f32 %v558, %v926
        %v928 = vpop.f32.mrf.mxu0
        %929 = vmatprep.mubr.f32.mxu0 0.0
        %v930 = vand.u32 %v334, 4294901760
        %931 = vmatmul.mubr.f32.gmra.mxu0 %v930
        %v932 = vpop.f32.mrf.mxu0
        %v933 = vadd.f32 %v568, %v932
        %v934 = vpop.f32.mrf.mxu0
        %935 = vmatprep.mubr.f32.mxu0 0.0
        %v936 = vand.u32 %v337, 4294901760
        %937 = vmatmul.mubr.f32.gmra.mxu0 %v936
        %v938 = vpop.f32.mrf.mxu0
        %v939 = vadd.f32 %v578, %v938
        %v940 = vpop.f32.mrf.mxu0
        %941 = vmatprep.mubr.f32.mxu0 0.0
        %v942 = vand.u32 %v340, 4294901760
        %943 = vmatmul.mubr.f32.gmra.mxu0 %v942
        %v944 = vpop.f32.mrf.mxu0
        %v945 = vadd.f32 %v588, %v944
        %v946 = vpop.f32.mrf.mxu0
        %947 = vmatprep.mubr.f32.mxu0 0.0
        %v948 = vand.u32 %v343, 4294901760
        %949 = vmatmul.mubr.f32.gmra.mxu0 %v948
        %v950 = vpop.f32.mrf.mxu0
        %v951 = vadd.f32 %v598, %v950
        %v952 = vpop.f32.mrf.mxu0
        %953 = vmatprep.mubr.f32.mxu0 0.0
        %v954 = vand.u32 %v346, 4294901760
        %955 = vmatmul.mubr.f32.gmra.mxu0 %v954
        %v956 = vpop.f32.mrf.mxu0
        %v957 = vadd.f32 %v608, %v956
        %v958 = vpop.f32.mrf.mxu0
        %959 = vmatprep.mubr.f32.mxu0 0.0
        %v960 = vand.u32 %v349, 4294901760
        %961 = vmatmul.mubr.f32.gmra.mxu0 %v960
        %v962 = vpop.f32.mrf.mxu0
        %v963 = vadd.f32 %v618, %v962
        %v964 = vpop.f32.mrf.mxu0
        %965 = vmatprep.mubr.f32.mxu0 0.0
        %v966 = vand.u32 %v352, 4294901760
        %967 = vmatmul.mubr.f32.gmra.mxu0 %v966
        %v968 = vpop.f32.mrf.mxu0
        %v969 = vadd.f32 %v628, %v968
        %v970 = vpop.f32.mrf.mxu0
        %971 = vmatprep.mubr.f32.mxu0 0.0
        %v972 = vand.u32 %v355, 4294901760
        %973 = vmatmul.mubr.f32.gmra.mxu0 %v972
        %v974 = vpop.f32.mrf.mxu0
        %v975 = vadd.f32 %v638, %v974
        %v976 = vpop.f32.mrf.mxu0
        %977 = vmatprep.mubr.f32.mxu0 0.0
        %v978 = vand.u32 %v358, 4294901760
        %979 = vmatmul.mubr.f32.gmra.mxu0 %v978
        %v980 = vpop.f32.mrf.mxu0
        %v981 = vadd.f32 %v648, %v980
        %v982 = vpop.f32.mrf.mxu0
        %983 = vmatprep.mubr.f32.mxu0 0.0
        %v984 = vand.u32 %v361, 4294901760
        %985 = vmatmul.mubr.f32.gmra.mxu0 %v984
        %v986 = vpop.f32.mrf.mxu0
        %v987 = vadd.f32 %v658, %v986
        %v988 = vpop.f32.mrf.mxu0
        %989 = vmatprep.mubr.f32.mxu0 0.0
        %v990 = vand.u32 %v364, 4294901760
        %991 = vmatmul.mubr.f32.gmra.mxu0 %v990
        %v992 = vpop.f32.mrf.mxu0
        %v993 = vadd.f32 %v668, %v992
        %v994 = vpop.f32.mrf.mxu0
        %995 = vmatprep.mubr.f32.mxu0 0.0
        %v996 = vand.u32 %v367, 4294901760
        %997 = vmatmul.mubr.f32.gmra.mxu0 %v996
        %v998 = vpop.f32.mrf.mxu0
        %v999 = vadd.f32 %v678, %v998
        %v1000 = vpop.f32.mrf.mxu0
        %1001 = vmatprep.mubr.f32.mxu0 0.0
        %v1002 = vand.u32 %v370, 4294901760
        %1003 = vmatmul.mubr.f32.gmra.mxu0 %v1002
        %v1004 = vpop.f32.mrf.mxu0
        %v1005 = vadd.f32 %v688, %v1004
        %v1006 = vpop.f32.mrf.mxu0
        %1007 = vmatprep.mubr.f32.mxu0 0.0
        %v1008 = vand.u32 %v373, 4294901760
        %1009 = vmatmul.mubr.f32.gmra.mxu0 %v1008
        %v1010 = vpop.f32.mrf.mxu0
        %v1011 = vadd.f32 %v698, %v1010
        %v1012 = vpop.f32.mrf.mxu0
        %1013 = vmatprep.mubr.f32.mxu0 0.0
        %v1014 = vand.u32 %v376, 4294901760
        %1015 = vmatmul.mubr.f32.gmra.mxu0 %v1014
        %v1016 = vpop.f32.mrf.mxu0
        %v1017 = vadd.f32 %v708, %v1016
        %v1018 = vpop.f32.mrf.mxu0
        %1019 = vmatprep.mubr.f32.mxu0 0.0
        %v1020 = vand.u32 %v379, 4294901760
        %1021 = vmatmul.mubr.f32.gmra.mxu0 %v1020
        %v1022 = vpop.f32.mrf.mxu0
        %v1023 = vadd.f32 %v718, %v1022
        %v1024 = vpop.f32.mrf.mxu0
        %1025 = vmatprep.mubr.f32.mxu0 0.0
        %v1026 = vand.u32 %v382, 4294901760
        %1027 = vmatmul.mubr.f32.gmra.mxu0 %v1026
        %v1028 = vpop.f32.mrf.mxu0
        %v1029 = vadd.f32 %v728, %v1028
        %v1030 = vpop.f32.mrf.mxu0
        %1031 = vmatprep.mubr.f32.mxu0 0.0
        %v1032 = vand.u32 %v385, 4294901760
        %1033 = vmatmul.mubr.f32.gmra.mxu0 %v1032
        %v1034 = vpop.f32.mrf.mxu0
        %v1035 = vadd.f32 %v738, %v1034
        %v1036 = vpop.f32.mrf.mxu0
        %1037 = vmatprep.mubr.f32.mxu0 0.0
        %v1038 = vand.u32 %v388, 4294901760
        %1039 = vmatmul.mubr.f32.gmra.mxu0 %v1038
        %v1040 = vpop.f32.mrf.mxu0
        %v1041 = vadd.f32 %v748, %v1040
        %v1042 = vpop.f32.mrf.mxu0
        %1043 = vmatprep.mubr.f32.mxu0 0.0
        %v1044 = vand.u32 %v391, 4294901760
        %1045 = vmatmul.mubr.f32.gmra.mxu0 %v1044
        %v1046 = vpop.f32.mrf.mxu0
        %v1047 = vadd.f32 %v758, %v1046
        %v1048 = vpop.f32.mrf.mxu0
        %1049 = vmatprep.mubr.f32.mxu0 0.0
        %v1050 = vand.u32 %v394, 4294901760
        %1051 = vmatmul.mubr.f32.gmra.mxu0 %v1050
        %v1052 = vpop.f32.mrf.mxu0
        %v1053 = vadd.f32 %v768, %v1052
        %v1054 = vpop.f32.mrf.mxu0
        %1055 = vmatprep.mubr.f32.mxu0 0.0
        %v1056 = vand.u32 %v397, 4294901760
        %1057 = vmatmul.mubr.f32.gmra.mxu0 %v1056
        %v1058 = vpop.f32.mrf.mxu0
        %v1059 = vadd.f32 %v778, %v1058
        %v1060 = vpop.f32.mrf.mxu0
        %1061 = vmatprep.mubr.f32.mxu0 0.0
        %v1062 = vand.u32 %v400, 4294901760
        %1063 = vmatmul.mubr.f32.gmra.mxu0 %v1062
        %v1064 = vpop.f32.mrf.mxu0
        %v1065 = vadd.f32 %v788, %v1064
        %v1066 = vpop.f32.mrf.mxu0
        %1067 = vdwg.mxu0
        %1068 = vmatprep.subr.mxu0 0.0
        %1069 = vmatpush1.msra.mxu0 0.0
        %1070 = vmatprep.subr.mxu0 0.0
        %1071 = vmatpush1.msra.mxu0 0.0
        %1072 = vmatprep.subr.mxu0 0.0
        %1073 = vmatpush1.msra.mxu0 0.0
        %1074 = vmatprep.subr.mxu0 0.0
        %1075 = vmatpush1.msra.mxu0 0.0
        %1076 = vmatprep.subr.mxu0 0.0
        %1077 = vmatpush1.msra.mxu0 0.0
        %1078 = vmatprep.subr.mxu0 0.0
        %1079 = vmatpush1.msra.mxu0 0.0
        %1080 = vmatprep.subr.mxu0 0.0
        %1081 = vmatpush1.msra.mxu0 0.0
        %1082 = vmatprep.subr.mxu0 0.0
        %1083 = vmatpush1.msra.mxu0 0.0
        %1084 = vmatprep.subr.mxu0 0.0
        %1085 = vmatpush1.msra.mxu0 0.0
        %1086 = vmatprep.subr.mxu0 0.0
        %1087 = vmatpush1.msra.mxu0 0.0
        %1088 = vmatprep.subr.mxu0 0.0
        %1089 = vmatpush1.msra.mxu0 0.0
        %1090 = vmatprep.subr.mxu0 0.0
        %1091 = vmatpush1.msra.mxu0 0.0
        %1092 = vmatprep.subr.mxu0 0.0
        %v1093 = vand.u32 %v297, 4294901760
        %v1094 = vsub.f32 %v297, %v1093
        %1095 = vmatpush1.msra.mxu0 %v1094
        %1096 = vmatprep.subr.mxu0 0.0
        %v1097 = vand.u32 %v296, 4294901760
        %v1098 = vsub.f32 %v296, %v1097
        %1099 = vmatpush1.msra.mxu0 %v1098
        %1100 = vmatprep.subr.mxu0 0.0
        %v1101 = vand.u32 %v295, 4294901760
        %v1102 = vsub.f32 %v295, %v1101
        %1103 = vmatpush1.msra.mxu0 %v1102
        %1104 = vmatprep.subr.mxu0 0.0
        %v1105 = vand.u32 %v294, 4294901760
        %v1106 = vsub.f32 %v294, %v1105
        %1107 = vmatpush1.msra.mxu0 %v1106
        %1108 = vmatprep.subr.mxu0 0.0
        %1109 = vmatpush2.msra.mxu0 0.0
        %1110 = vmatprep.subr.mxu0 0.0
        %1111 = vmatpush2.msra.mxu0 0.0
        %1112 = vmatprep.subr.mxu0 0.0
        %1113 = vmatpush2.msra.mxu0 0.0
        %1114 = vmatprep.subr.mxu0 0.0
        %1115 = vmatpush2.msra.mxu0 0.0
        %1116 = vmatprep.subr.mxu0 0.0
        %1117 = vmatpush2.msra.mxu0 0.0
        %1118 = vmatprep.subr.mxu0 0.0
        %1119 = vmatpush2.msra.mxu0 0.0
        %1120 = vmatprep.subr.mxu0 0.0
        %1121 = vmatpush2.msra.mxu0 0.0
        %1122 = vmatprep.subr.mxu0 0.0
        %1123 = vmatpush2.msra.mxu0 0.0
        %1124 = vmatprep.subr.mxu0 0.0
        %1125 = vmatpush2.msra.mxu0 0.0
        %1126 = vmatprep.subr.mxu0 0.0
        %1127 = vmatpush2.msra.mxu0 0.0
        %1128 = vmatprep.subr.mxu0 0.0
        %1129 = vmatpush2.msra.mxu0 0.0
        %1130 = vmatprep.subr.mxu0 0.0
        %1131 = vmatpush2.msra.mxu0 0.0
        %1132 = vmatprep.subr.mxu0 0.0
        %1133 = vmatpush2.msra.mxu0 0.0
        %1134 = vmatprep.subr.mxu0 0.0
        %1135 = vmatpush2.msra.mxu0 0.0
        %1136 = vmatprep.subr.mxu0 0.0
        %1137 = vmatpush2.msra.mxu0 0.0
        %1138 = vmatprep.subr.mxu0 0.0
        %1139 = vmatpush2.msra.mxu0 0.0
        %1140 = vmatprep.mubr.f32.mxu0 0.0
        %v1141 = vand.u32 %v307, 4294901760
        %v1142 = vsub.f32 %v307, %v1141
        %1143 = vmatmul.mubr.f32.gmra.mxu0 %v1142
        %v1144 = vpop.f32.mrf.mxu0
        %v1145 = vadd.f32 %v879, %v1144
        %v1146 = vpop.f32.mrf.mxu0
        %1147 = vmatprep.mubr.f32.mxu0 0.0
        %v1148 = vand.u32 %v310, 4294901760
        %v1149 = vsub.f32 %v310, %v1148
        %1150 = vmatmul.mubr.f32.gmra.mxu0 %v1149
        %v1151 = vpop.f32.mrf.mxu0
        %v1152 = vadd.f32 %v885, %v1151
        %v1153 = vpop.f32.mrf.mxu0
        %1154 = vmatprep.mubr.f32.mxu0 0.0
        %v1155 = vand.u32 %v313, 4294901760
        %v1156 = vsub.f32 %v313, %v1155
        %1157 = vmatmul.mubr.f32.gmra.mxu0 %v1156
        %v1158 = vpop.f32.mrf.mxu0
        %v1159 = vadd.f32 %v891, %v1158
        %v1160 = vpop.f32.mrf.mxu0
        %1161 = vmatprep.mubr.f32.mxu0 0.0
        %v1162 = vand.u32 %v316, 4294901760
        %v1163 = vsub.f32 %v316, %v1162
        %1164 = vmatmul.mubr.f32.gmra.mxu0 %v1163
        %v1165 = vpop.f32.mrf.mxu0
        %v1166 = vadd.f32 %v897, %v1165
        %v1167 = vpop.f32.mrf.mxu0
        %1168 = vmatprep.mubr.f32.mxu0 0.0
        %v1169 = vand.u32 %v319, 4294901760
        %v1170 = vsub.f32 %v319, %v1169
        %1171 = vmatmul.mubr.f32.gmra.mxu0 %v1170
        %v1172 = vpop.f32.mrf.mxu0
        %v1173 = vadd.f32 %v903, %v1172
        %v1174 = vpop.f32.mrf.mxu0
        %1175 = vmatprep.mubr.f32.mxu0 0.0
        %v1176 = vand.u32 %v322, 4294901760
        %v1177 = vsub.f32 %v322, %v1176
        %1178 = vmatmul.mubr.f32.gmra.mxu0 %v1177
        %v1179 = vpop.f32.mrf.mxu0
        %v1180 = vadd.f32 %v909, %v1179
        %v1181 = vpop.f32.mrf.mxu0
        %1182 = vmatprep.mubr.f32.mxu0 0.0
        %v1183 = vand.u32 %v325, 4294901760
        %v1184 = vsub.f32 %v325, %v1183
        %1185 = vmatmul.mubr.f32.gmra.mxu0 %v1184
        %v1186 = vpop.f32.mrf.mxu0
        %v1187 = vadd.f32 %v915, %v1186
        %v1188 = vpop.f32.mrf.mxu0
        %1189 = vmatprep.mubr.f32.mxu0 0.0
        %v1190 = vand.u32 %v328, 4294901760
        %v1191 = vsub.f32 %v328, %v1190
        %1192 = vmatmul.mubr.f32.gmra.mxu0 %v1191
        %v1193 = vpop.f32.mrf.mxu0
        %v1194 = vadd.f32 %v921, %v1193
        %v1195 = vpop.f32.mrf.mxu0
        %1196 = vmatprep.mubr.f32.mxu0 0.0
        %v1197 = vand.u32 %v331, 4294901760
        %v1198 = vsub.f32 %v331, %v1197
        %1199 = vmatmul.mubr.f32.gmra.mxu0 %v1198
        %v1200 = vpop.f32.mrf.mxu0
        %v1201 = vadd.f32 %v927, %v1200
        %v1202 = vpop.f32.mrf.mxu0
        %1203 = vmatprep.mubr.f32.mxu0 0.0
        %v1204 = vand.u32 %v334, 4294901760
        %v1205 = vsub.f32 %v334, %v1204
        %1206 = vmatmul.mubr.f32.gmra.mxu0 %v1205
        %v1207 = vpop.f32.mrf.mxu0
        %v1208 = vadd.f32 %v933, %v1207
        %v1209 = vpop.f32.mrf.mxu0
        %1210 = vmatprep.mubr.f32.mxu0 0.0
        %v1211 = vand.u32 %v337, 4294901760
        %v1212 = vsub.f32 %v337, %v1211
        %1213 = vmatmul.mubr.f32.gmra.mxu0 %v1212
        %v1214 = vpop.f32.mrf.mxu0
        %v1215 = vadd.f32 %v939, %v1214
        %v1216 = vpop.f32.mrf.mxu0
        %1217 = vmatprep.mubr.f32.mxu0 0.0
        %v1218 = vand.u32 %v340, 4294901760
        %v1219 = vsub.f32 %v340, %v1218
        %1220 = vmatmul.mubr.f32.gmra.mxu0 %v1219
        %v1221 = vpop.f32.mrf.mxu0
        %v1222 = vadd.f32 %v945, %v1221
        %v1223 = vpop.f32.mrf.mxu0
        %1224 = vmatprep.mubr.f32.mxu0 0.0
        %v1225 = vand.u32 %v343, 4294901760
        %v1226 = vsub.f32 %v343, %v1225
        %1227 = vmatmul.mubr.f32.gmra.mxu0 %v1226
        %v1228 = vpop.f32.mrf.mxu0
        %v1229 = vadd.f32 %v951, %v1228
        %v1230 = vpop.f32.mrf.mxu0
        %1231 = vmatprep.mubr.f32.mxu0 0.0
        %v1232 = vand.u32 %v346, 4294901760
        %v1233 = vsub.f32 %v346, %v1232
        %1234 = vmatmul.mubr.f32.gmra.mxu0 %v1233
        %v1235 = vpop.f32.mrf.mxu0
        %v1236 = vadd.f32 %v957, %v1235
        %v1237 = vpop.f32.mrf.mxu0
        %1238 = vmatprep.mubr.f32.mxu0 0.0
        %v1239 = vand.u32 %v349, 4294901760
        %v1240 = vsub.f32 %v349, %v1239
        %1241 = vmatmul.mubr.f32.gmra.mxu0 %v1240
        %v1242 = vpop.f32.mrf.mxu0
        %v1243 = vadd.f32 %v963, %v1242
        %v1244 = vpop.f32.mrf.mxu0
        %1245 = vmatprep.mubr.f32.mxu0 0.0
        %v1246 = vand.u32 %v352, 4294901760
        %v1247 = vsub.f32 %v352, %v1246
        %1248 = vmatmul.mubr.f32.gmra.mxu0 %v1247
        %v1249 = vpop.f32.mrf.mxu0
        %v1250 = vadd.f32 %v969, %v1249
        %v1251 = vpop.f32.mrf.mxu0
        %1252 = vmatprep.mubr.f32.mxu0 0.0
        %v1253 = vand.u32 %v355, 4294901760
        %v1254 = vsub.f32 %v355, %v1253
        %1255 = vmatmul.mubr.f32.gmra.mxu0 %v1254
        %v1256 = vpop.f32.mrf.mxu0
        %v1257 = vadd.f32 %v975, %v1256
        %v1258 = vpop.f32.mrf.mxu0
        %1259 = vmatprep.mubr.f32.mxu0 0.0
        %v1260 = vand.u32 %v358, 4294901760
        %v1261 = vsub.f32 %v358, %v1260
        %1262 = vmatmul.mubr.f32.gmra.mxu0 %v1261
        %v1263 = vpop.f32.mrf.mxu0
        %v1264 = vadd.f32 %v981, %v1263
        %v1265 = vpop.f32.mrf.mxu0
        %1266 = vmatprep.mubr.f32.mxu0 0.0
        %v1267 = vand.u32 %v361, 4294901760
        %v1268 = vsub.f32 %v361, %v1267
        %1269 = vmatmul.mubr.f32.gmra.mxu0 %v1268
        %v1270 = vpop.f32.mrf.mxu0
        %v1271 = vadd.f32 %v987, %v1270
        %v1272 = vpop.f32.mrf.mxu0
        %1273 = vmatprep.mubr.f32.mxu0 0.0
        %v1274 = vand.u32 %v364, 4294901760
        %v1275 = vsub.f32 %v364, %v1274
        %1276 = vmatmul.mubr.f32.gmra.mxu0 %v1275
        %v1277 = vpop.f32.mrf.mxu0
        %v1278 = vadd.f32 %v993, %v1277
        %v1279 = vpop.f32.mrf.mxu0
        %1280 = vmatprep.mubr.f32.mxu0 0.0
        %v1281 = vand.u32 %v367, 4294901760
        %v1282 = vsub.f32 %v367, %v1281
        %1283 = vmatmul.mubr.f32.gmra.mxu0 %v1282
        %v1284 = vpop.f32.mrf.mxu0
        %v1285 = vadd.f32 %v999, %v1284
        %v1286 = vpop.f32.mrf.mxu0
        %1287 = vmatprep.mubr.f32.mxu0 0.0
        %v1288 = vand.u32 %v370, 4294901760
        %v1289 = vsub.f32 %v370, %v1288
        %1290 = vmatmul.mubr.f32.gmra.mxu0 %v1289
        %v1291 = vpop.f32.mrf.mxu0
        %v1292 = vadd.f32 %v1005, %v1291
        %v1293 = vpop.f32.mrf.mxu0
        %1294 = vmatprep.mubr.f32.mxu0 0.0
        %v1295 = vand.u32 %v373, 4294901760
        %v1296 = vsub.f32 %v373, %v1295
        %1297 = vmatmul.mubr.f32.gmra.mxu0 %v1296
        %v1298 = vpop.f32.mrf.mxu0
        %v1299 = vadd.f32 %v1011, %v1298
        %v1300 = vpop.f32.mrf.mxu0
        %1301 = vmatprep.mubr.f32.mxu0 0.0
        %v1302 = vand.u32 %v376, 4294901760
        %v1303 = vsub.f32 %v376, %v1302
        %1304 = vmatmul.mubr.f32.gmra.mxu0 %v1303
        %v1305 = vpop.f32.mrf.mxu0
        %v1306 = vadd.f32 %v1017, %v1305
        %v1307 = vpop.f32.mrf.mxu0
        %1308 = vmatprep.mubr.f32.mxu0 0.0
        %v1309 = vand.u32 %v379, 4294901760
        %v1310 = vsub.f32 %v379, %v1309
        %1311 = vmatmul.mubr.f32.gmra.mxu0 %v1310
        %v1312 = vpop.f32.mrf.mxu0
        %v1313 = vadd.f32 %v1023, %v1312
        %v1314 = vpop.f32.mrf.mxu0
        %1315 = vmatprep.mubr.f32.mxu0 0.0
        %v1316 = vand.u32 %v382, 4294901760
        %v1317 = vsub.f32 %v382, %v1316
        %1318 = vmatmul.mubr.f32.gmra.mxu0 %v1317
        %v1319 = vpop.f32.mrf.mxu0
        %v1320 = vadd.f32 %v1029, %v1319
        %v1321 = vpop.f32.mrf.mxu0
        %1322 = vmatprep.mubr.f32.mxu0 0.0
        %v1323 = vand.u32 %v385, 4294901760
        %v1324 = vsub.f32 %v385, %v1323
        %1325 = vmatmul.mubr.f32.gmra.mxu0 %v1324
        %v1326 = vpop.f32.mrf.mxu0
        %v1327 = vadd.f32 %v1035, %v1326
        %v1328 = vpop.f32.mrf.mxu0
        %1329 = vmatprep.mubr.f32.mxu0 0.0
        %v1330 = vand.u32 %v388, 4294901760
        %v1331 = vsub.f32 %v388, %v1330
        %1332 = vmatmul.mubr.f32.gmra.mxu0 %v1331
        %v1333 = vpop.f32.mrf.mxu0
        %v1334 = vadd.f32 %v1041, %v1333
        %v1335 = vpop.f32.mrf.mxu0
        %1336 = vmatprep.mubr.f32.mxu0 0.0
        %v1337 = vand.u32 %v391, 4294901760
        %v1338 = vsub.f32 %v391, %v1337
        %1339 = vmatmul.mubr.f32.gmra.mxu0 %v1338
        %v1340 = vpop.f32.mrf.mxu0
        %v1341 = vadd.f32 %v1047, %v1340
        %v1342 = vpop.f32.mrf.mxu0
        %1343 = vmatprep.mubr.f32.mxu0 0.0
        %v1344 = vand.u32 %v394, 4294901760
        %v1345 = vsub.f32 %v394, %v1344
        %1346 = vmatmul.mubr.f32.gmra.mxu0 %v1345
        %v1347 = vpop.f32.mrf.mxu0
        %v1348 = vadd.f32 %v1053, %v1347
        %v1349 = vpop.f32.mrf.mxu0
        %1350 = vmatprep.mubr.f32.mxu0 0.0
        %v1351 = vand.u32 %v397, 4294901760
        %v1352 = vsub.f32 %v397, %v1351
        %1353 = vmatmul.mubr.f32.gmra.mxu0 %v1352
        %v1354 = vpop.f32.mrf.mxu0
        %v1355 = vadd.f32 %v1059, %v1354
        %v1356 = vpop.f32.mrf.mxu0
        %1357 = vmatprep.mubr.f32.mxu0 0.0
        %v1358 = vand.u32 %v400, 4294901760
        %v1359 = vsub.f32 %v400, %v1358
        %1360 = vmatmul.mubr.f32.gmra.mxu0 %v1359
        %v1361 = vpop.f32.mrf.mxu0
        %v1362 = vadd.f32 %v1065, %v1361
        %v1363 = vpop.f32.mrf.mxu0
        %1364 = vdwg.mxu0
        %1365 = vmatprep.subr.mxu0 0.0
        %1366 = vmatpush1.msra.mxu0 0.0
        %1367 = vmatprep.subr.mxu0 0.0
        %1368 = vmatpush1.msra.mxu0 0.0
        %1369 = vmatprep.subr.mxu0 0.0
        %1370 = vmatpush1.msra.mxu0 0.0
        %1371 = vmatprep.subr.mxu0 0.0
        %1372 = vmatpush1.msra.mxu0 0.0
        %1373 = vmatprep.subr.mxu0 0.0
        %1374 = vmatpush1.msra.mxu0 0.0
        %1375 = vmatprep.subr.mxu0 0.0
        %1376 = vmatpush1.msra.mxu0 0.0
        %1377 = vmatprep.subr.mxu0 0.0
        %1378 = vmatpush1.msra.mxu0 0.0
        %1379 = vmatprep.subr.mxu0 0.0
        %1380 = vmatpush1.msra.mxu0 0.0
        %1381 = vmatprep.subr.mxu0 0.0
        %1382 = vmatpush1.msra.mxu0 0.0
        %1383 = vmatprep.subr.mxu0 0.0
        %1384 = vmatpush1.msra.mxu0 0.0
        %1385 = vmatprep.subr.mxu0 0.0
        %1386 = vmatpush1.msra.mxu0 0.0
        %1387 = vmatprep.subr.mxu0 0.0
        %1388 = vmatpush1.msra.mxu0 0.0
        %1389 = vmatprep.subr.mxu0 0.0
        %v1390 = vand.u32 %v297, 4294901760
        %1391 = vmatpush1.msra.mxu0 %v1390
        %1392 = vmatprep.subr.mxu0 0.0
        %v1393 = vand.u32 %v296, 4294901760
        %1394 = vmatpush1.msra.mxu0 %v1393
        %1395 = vmatprep.subr.mxu0 0.0
        %v1396 = vand.u32 %v295, 4294901760
        %1397 = vmatpush1.msra.mxu0 %v1396
        %1398 = vmatprep.subr.mxu0 0.0
        %v1399 = vand.u32 %v294, 4294901760
        %1400 = vmatpush1.msra.mxu0 %v1399
        %1401 = vmatprep.subr.mxu0 0.0
        %1402 = vmatpush2.msra.mxu0 0.0
        %1403 = vmatprep.subr.mxu0 0.0
        %1404 = vmatpush2.msra.mxu0 0.0
        %1405 = vmatprep.subr.mxu0 0.0
        %1406 = vmatpush2.msra.mxu0 0.0
        %1407 = vmatprep.subr.mxu0 0.0
        %1408 = vmatpush2.msra.mxu0 0.0
        %1409 = vmatprep.subr.mxu0 0.0
        %1410 = vmatpush2.msra.mxu0 0.0
        %1411 = vmatprep.subr.mxu0 0.0
        %1412 = vmatpush2.msra.mxu0 0.0
        %1413 = vmatprep.subr.mxu0 0.0
        %1414 = vmatpush2.msra.mxu0 0.0
        %1415 = vmatprep.subr.mxu0 0.0
        %1416 = vmatpush2.msra.mxu0 0.0
        %1417 = vmatprep.subr.mxu0 0.0
        %1418 = vmatpush2.msra.mxu0 0.0
        %1419 = vmatprep.subr.mxu0 0.0
        %1420 = vmatpush2.msra.mxu0 0.0
        %1421 = vmatprep.subr.mxu0 0.0
        %1422 = vmatpush2.msra.mxu0 0.0
        %1423 = vmatprep.subr.mxu0 0.0
        %1424 = vmatpush2.msra.mxu0 0.0
        %1425 = vmatprep.subr.mxu0 0.0
        %1426 = vmatpush2.msra.mxu0 0.0
        %1427 = vmatprep.subr.mxu0 0.0
        %1428 = vmatpush2.msra.mxu0 0.0
        %1429 = vmatprep.subr.mxu0 0.0
        %1430 = vmatpush2.msra.mxu0 0.0
        %1431 = vmatprep.subr.mxu0 0.0
        %1432 = vmatpush2.msra.mxu0 0.0
        %1433 = vmatprep.mubr.f32.mxu0 0.0
        %v1434 = vand.u32 %v307, 4294901760
        %v1435 = vsub.f32 %v307, %v1434
        %v1436 = vand.u32 %v1435, 4294901760
        %1437 = vmatmul.mubr.f32.gmra.mxu0 %v1436
        %v1438 = vpop.f32.mrf.mxu0
        %v1439 = vadd.f32 %v1145, %v1438
        %v1440 = vpop.f32.mrf.mxu0
        %1441 = vmatprep.mubr.f32.mxu0 0.0
        %v1442 = vand.u32 %v310, 4294901760
        %v1443 = vsub.f32 %v310, %v1442
        %v1444 = vand.u32 %v1443, 4294901760
        %1445 = vmatmul.mubr.f32.gmra.mxu0 %v1444
        %v1446 = vpop.f32.mrf.mxu0
        %v1447 = vadd.f32 %v1152, %v1446
        %v1448 = vpop.f32.mrf.mxu0
        %1449 = vmatprep.mubr.f32.mxu0 0.0
        %v1450 = vand.u32 %v313, 4294901760
        %v1451 = vsub.f32 %v313, %v1450
        %v1452 = vand.u32 %v1451, 4294901760
        %1453 = vmatmul.mubr.f32.gmra.mxu0 %v1452
        %v1454 = vpop.f32.mrf.mxu0
        %v1455 = vadd.f32 %v1159, %v1454
        %v1456 = vpop.f32.mrf.mxu0
        %1457 = vmatprep.mubr.f32.mxu0 0.0
        %v1458 = vand.u32 %v316, 4294901760
        %v1459 = vsub.f32 %v316, %v1458
        %v1460 = vand.u32 %v1459, 4294901760
        %1461 = vmatmul.mubr.f32.gmra.mxu0 %v1460
        %v1462 = vpop.f32.mrf.mxu0
        %v1463 = vadd.f32 %v1166, %v1462
        %v1464 = vpop.f32.mrf.mxu0
        %1465 = vmatprep.mubr.f32.mxu0 0.0
        %v1466 = vand.u32 %v319, 4294901760
        %v1467 = vsub.f32 %v319, %v1466
        %v1468 = vand.u32 %v1467, 4294901760
        %1469 = vmatmul.mubr.f32.gmra.mxu0 %v1468
        %v1470 = vpop.f32.mrf.mxu0
        %v1471 = vadd.f32 %v1173, %v1470
        %v1472 = vpop.f32.mrf.mxu0
        %1473 = vmatprep.mubr.f32.mxu0 0.0
        %v1474 = vand.u32 %v322, 4294901760
        %v1475 = vsub.f32 %v322, %v1474
        %v1476 = vand.u32 %v1475, 4294901760
        %1477 = vmatmul.mubr.f32.gmra.mxu0 %v1476
        %v1478 = vpop.f32.mrf.mxu0
        %v1479 = vadd.f32 %v1180, %v1478
        %v1480 = vpop.f32.mrf.mxu0
        %1481 = vmatprep.mubr.f32.mxu0 0.0
        %v1482 = vand.u32 %v325, 4294901760
        %v1483 = vsub.f32 %v325, %v1482
        %v1484 = vand.u32 %v1483, 4294901760
        %1485 = vmatmul.mubr.f32.gmra.mxu0 %v1484
        %v1486 = vpop.f32.mrf.mxu0
        %v1487 = vadd.f32 %v1187, %v1486
        %v1488 = vpop.f32.mrf.mxu0
        %1489 = vmatprep.mubr.f32.mxu0 0.0
        %v1490 = vand.u32 %v328, 4294901760
        %v1491 = vsub.f32 %v328, %v1490
        %v1492 = vand.u32 %v1491, 4294901760
        %1493 = vmatmul.mubr.f32.gmra.mxu0 %v1492
        %v1494 = vpop.f32.mrf.mxu0
        %v1495 = vadd.f32 %v1194, %v1494
        %v1496 = vpop.f32.mrf.mxu0
        %1497 = vmatprep.mubr.f32.mxu0 0.0
        %v1498 = vand.u32 %v331, 4294901760
        %v1499 = vsub.f32 %v331, %v1498
        %v1500 = vand.u32 %v1499, 4294901760
        %1501 = vmatmul.mubr.f32.gmra.mxu0 %v1500
        %v1502 = vpop.f32.mrf.mxu0
        %v1503 = vadd.f32 %v1201, %v1502
        %v1504 = vpop.f32.mrf.mxu0
        %1505 = vmatprep.mubr.f32.mxu0 0.0
        %v1506 = vand.u32 %v334, 4294901760
        %v1507 = vsub.f32 %v334, %v1506
        %v1508 = vand.u32 %v1507, 4294901760
        %1509 = vmatmul.mubr.f32.gmra.mxu0 %v1508
        %v1510 = vpop.f32.mrf.mxu0
        %v1511 = vadd.f32 %v1208, %v1510
        %v1512 = vpop.f32.mrf.mxu0
        %1513 = vmatprep.mubr.f32.mxu0 0.0
        %v1514 = vand.u32 %v337, 4294901760
        %v1515 = vsub.f32 %v337, %v1514
        %v1516 = vand.u32 %v1515, 4294901760
        %1517 = vmatmul.mubr.f32.gmra.mxu0 %v1516
        %v1518 = vpop.f32.mrf.mxu0
        %v1519 = vadd.f32 %v1215, %v1518
        %v1520 = vpop.f32.mrf.mxu0
        %1521 = vmatprep.mubr.f32.mxu0 0.0
        %v1522 = vand.u32 %v340, 4294901760
        %v1523 = vsub.f32 %v340, %v1522
        %v1524 = vand.u32 %v1523, 4294901760
        %1525 = vmatmul.mubr.f32.gmra.mxu0 %v1524
        %v1526 = vpop.f32.mrf.mxu0
        %v1527 = vadd.f32 %v1222, %v1526
        %v1528 = vpop.f32.mrf.mxu0
        %1529 = vmatprep.mubr.f32.mxu0 0.0
        %v1530 = vand.u32 %v343, 4294901760
        %v1531 = vsub.f32 %v343, %v1530
        %v1532 = vand.u32 %v1531, 4294901760
        %1533 = vmatmul.mubr.f32.gmra.mxu0 %v1532
        %v1534 = vpop.f32.mrf.mxu0
        %v1535 = vadd.f32 %v1229, %v1534
        %v1536 = vpop.f32.mrf.mxu0
        %1537 = vmatprep.mubr.f32.mxu0 0.0
        %v1538 = vand.u32 %v346, 4294901760
        %v1539 = vsub.f32 %v346, %v1538
        %v1540 = vand.u32 %v1539, 4294901760
        %1541 = vmatmul.mubr.f32.gmra.mxu0 %v1540
        %v1542 = vpop.f32.mrf.mxu0
        %v1543 = vadd.f32 %v1236, %v1542
        %v1544 = vpop.f32.mrf.mxu0
        %1545 = vmatprep.mubr.f32.mxu0 0.0
        %v1546 = vand.u32 %v349, 4294901760
        %v1547 = vsub.f32 %v349, %v1546
        %v1548 = vand.u32 %v1547, 4294901760
        %1549 = vmatmul.mubr.f32.gmra.mxu0 %v1548
        %v1550 = vpop.f32.mrf.mxu0
        %v1551 = vadd.f32 %v1243, %v1550
        %v1552 = vpop.f32.mrf.mxu0
        %1553 = vmatprep.mubr.f32.mxu0 0.0
        %v1554 = vand.u32 %v352, 4294901760
        %v1555 = vsub.f32 %v352, %v1554
        %v1556 = vand.u32 %v1555, 4294901760
        %1557 = vmatmul.mubr.f32.gmra.mxu0 %v1556
        %v1558 = vpop.f32.mrf.mxu0
        %v1559 = vadd.f32 %v1250, %v1558
        %v1560 = vpop.f32.mrf.mxu0
        %1561 = vmatprep.mubr.f32.mxu0 0.0
        %v1562 = vand.u32 %v355, 4294901760
        %v1563 = vsub.f32 %v355, %v1562
        %v1564 = vand.u32 %v1563, 4294901760
        %1565 = vmatmul.mubr.f32.gmra.mxu0 %v1564
        %v1566 = vpop.f32.mrf.mxu0
        %v1567 = vadd.f32 %v1257, %v1566
        %v1568 = vpop.f32.mrf.mxu0
        %1569 = vmatprep.mubr.f32.mxu0 0.0
        %v1570 = vand.u32 %v358, 4294901760
        %v1571 = vsub.f32 %v358, %v1570
        %v1572 = vand.u32 %v1571, 4294901760
        %1573 = vmatmul.mubr.f32.gmra.mxu0 %v1572
        %v1574 = vpop.f32.mrf.mxu0
        %v1575 = vadd.f32 %v1264, %v1574
        %v1576 = vpop.f32.mrf.mxu0
        %1577 = vmatprep.mubr.f32.mxu0 0.0
        %v1578 = vand.u32 %v361, 4294901760
        %v1579 = vsub.f32 %v361, %v1578
        %v1580 = vand.u32 %v1579, 4294901760
        %1581 = vmatmul.mubr.f32.gmra.mxu0 %v1580
        %v1582 = vpop.f32.mrf.mxu0
        %v1583 = vadd.f32 %v1271, %v1582
        %v1584 = vpop.f32.mrf.mxu0
        %1585 = vmatprep.mubr.f32.mxu0 0.0
        %v1586 = vand.u32 %v364, 4294901760
        %v1587 = vsub.f32 %v364, %v1586
        %v1588 = vand.u32 %v1587, 4294901760
        %1589 = vmatmul.mubr.f32.gmra.mxu0 %v1588
        %v1590 = vpop.f32.mrf.mxu0
        %v1591 = vadd.f32 %v1278, %v1590
        %v1592 = vpop.f32.mrf.mxu0
        %1593 = vmatprep.mubr.f32.mxu0 0.0
        %v1594 = vand.u32 %v367, 4294901760
        %v1595 = vsub.f32 %v367, %v1594
        %v1596 = vand.u32 %v1595, 4294901760
        %1597 = vmatmul.mubr.f32.gmra.mxu0 %v1596
        %v1598 = vpop.f32.mrf.mxu0
        %v1599 = vadd.f32 %v1285, %v1598
        %v1600 = vpop.f32.mrf.mxu0
        %1601 = vmatprep.mubr.f32.mxu0 0.0
        %v1602 = vand.u32 %v370, 4294901760
        %v1603 = vsub.f32 %v370, %v1602
        %v1604 = vand.u32 %v1603, 4294901760
        %1605 = vmatmul.mubr.f32.gmra.mxu0 %v1604
        %v1606 = vpop.f32.mrf.mxu0
        %v1607 = vadd.f32 %v1292, %v1606
        %v1608 = vpop.f32.mrf.mxu0
        %1609 = vmatprep.mubr.f32.mxu0 0.0
        %v1610 = vand.u32 %v373, 4294901760
        %v1611 = vsub.f32 %v373, %v1610
        %v1612 = vand.u32 %v1611, 4294901760
        %1613 = vmatmul.mubr.f32.gmra.mxu0 %v1612
        %v1614 = vpop.f32.mrf.mxu0
        %v1615 = vadd.f32 %v1299, %v1614
        %v1616 = vpop.f32.mrf.mxu0
        %1617 = vmatprep.mubr.f32.mxu0 0.0
        %v1618 = vand.u32 %v376, 4294901760
        %v1619 = vsub.f32 %v376, %v1618
        %v1620 = vand.u32 %v1619, 4294901760
        %1621 = vmatmul.mubr.f32.gmra.mxu0 %v1620
        %v1622 = vpop.f32.mrf.mxu0
        %v1623 = vadd.f32 %v1306, %v1622
        %v1624 = vpop.f32.mrf.mxu0
        %1625 = vmatprep.mubr.f32.mxu0 0.0
        %v1626 = vand.u32 %v379, 4294901760
        %v1627 = vsub.f32 %v379, %v1626
        %v1628 = vand.u32 %v1627, 4294901760
        %1629 = vmatmul.mubr.f32.gmra.mxu0 %v1628
        %v1630 = vpop.f32.mrf.mxu0
        %v1631 = vadd.f32 %v1313, %v1630
        %v1632 = vpop.f32.mrf.mxu0
        %1633 = vmatprep.mubr.f32.mxu0 0.0
        %v1634 = vand.u32 %v382, 4294901760
        %v1635 = vsub.f32 %v382, %v1634
        %v1636 = vand.u32 %v1635, 4294901760
        %1637 = vmatmul.mubr.f32.gmra.mxu0 %v1636
        %v1638 = vpop.f32.mrf.mxu0
        %v1639 = vadd.f32 %v1320, %v1638
        %v1640 = vpop.f32.mrf.mxu0
        %1641 = vmatprep.mubr.f32.mxu0 0.0
        %v1642 = vand.u32 %v385, 4294901760
        %v1643 = vsub.f32 %v385, %v1642
        %v1644 = vand.u32 %v1643, 4294901760
        %1645 = vmatmul.mubr.f32.gmra.mxu0 %v1644
        %v1646 = vpop.f32.mrf.mxu0
        %v1647 = vadd.f32 %v1327, %v1646
        %v1648 = vpop.f32.mrf.mxu0
        %1649 = vmatprep.mubr.f32.mxu0 0.0
        %v1650 = vand.u32 %v388, 4294901760
        %v1651 = vsub.f32 %v388, %v1650
        %v1652 = vand.u32 %v1651, 4294901760
        %1653 = vmatmul.mubr.f32.gmra.mxu0 %v1652
        %v1654 = vpop.f32.mrf.mxu0
        %v1655 = vadd.f32 %v1334, %v1654
        %v1656 = vpop.f32.mrf.mxu0
        %1657 = vmatprep.mubr.f32.mxu0 0.0
        %v1658 = vand.u32 %v391, 4294901760
        %v1659 = vsub.f32 %v391, %v1658
        %v1660 = vand.u32 %v1659, 4294901760
        %1661 = vmatmul.mubr.f32.gmra.mxu0 %v1660
        %v1662 = vpop.f32.mrf.mxu0
        %v1663 = vadd.f32 %v1341, %v1662
        %v1664 = vpop.f32.mrf.mxu0
        %1665 = vmatprep.mubr.f32.mxu0 0.0
        %v1666 = vand.u32 %v394, 4294901760
        %v1667 = vsub.f32 %v394, %v1666
        %v1668 = vand.u32 %v1667, 4294901760
        %1669 = vmatmul.mubr.f32.gmra.mxu0 %v1668
        %v1670 = vpop.f32.mrf.mxu0
        %v1671 = vadd.f32 %v1348, %v1670
        %v1672 = vpop.f32.mrf.mxu0
        %1673 = vmatprep.mubr.f32.mxu0 0.0
        %v1674 = vand.u32 %v397, 4294901760
        %v1675 = vsub.f32 %v397, %v1674
        %v1676 = vand.u32 %v1675, 4294901760
        %1677 = vmatmul.mubr.f32.gmra.mxu0 %v1676
        %v1678 = vpop.f32.mrf.mxu0
        %v1679 = vadd.f32 %v1355, %v1678
        %v1680 = vpop.f32.mrf.mxu0
        %1681 = vmatprep.mubr.f32.mxu0 0.0
        %v1682 = vand.u32 %v400, 4294901760
        %v1683 = vsub.f32 %v400, %v1682
        %v1684 = vand.u32 %v1683, 4294901760
        %1685 = vmatmul.mubr.f32.gmra.mxu0 %v1684
        %v1686 = vpop.f32.mrf.mxu0
        %v1687 = vadd.f32 %v1362, %v1686
        %v1688 = vpop.f32.mrf.mxu0
        %1689 = vdwg.mxu0
        %1690 = vmatprep.subr.mxu0 0.0
        %1691 = vmatpush1.msra.mxu0 0.0
        %1692 = vmatprep.subr.mxu0 0.0
        %1693 = vmatpush1.msra.mxu0 0.0
        %1694 = vmatprep.subr.mxu0 0.0
        %1695 = vmatpush1.msra.mxu0 0.0
        %1696 = vmatprep.subr.mxu0 0.0
        %1697 = vmatpush1.msra.mxu0 0.0
        %1698 = vmatprep.subr.mxu0 0.0
        %1699 = vmatpush1.msra.mxu0 0.0
        %1700 = vmatprep.subr.mxu0 0.0
        %1701 = vmatpush1.msra.mxu0 0.0
        %1702 = vmatprep.subr.mxu0 0.0
        %1703 = vmatpush1.msra.mxu0 0.0
        %1704 = vmatprep.subr.mxu0 0.0
        %1705 = vmatpush1.msra.mxu0 0.0
        %1706 = vmatprep.subr.mxu0 0.0
        %1707 = vmatpush1.msra.mxu0 0.0
        %1708 = vmatprep.subr.mxu0 0.0
        %1709 = vmatpush1.msra.mxu0 0.0
        %1710 = vmatprep.subr.mxu0 0.0
        %1711 = vmatpush1.msra.mxu0 0.0
        %1712 = vmatprep.subr.mxu0 0.0
        %1713 = vmatpush1.msra.mxu0 0.0
        %1714 = vmatprep.subr.mxu0 0.0
        %v1715 = vand.u32 %v297, 4294901760
        %v1716 = vsub.f32 %v297, %v1715
        %v1717 = vand.u32 %v1716, 4294901760
        %1718 = vmatpush1.msra.mxu0 %v1717
        %1719 = vmatprep.subr.mxu0 0.0
        %v1720 = vand.u32 %v296, 4294901760
        %v1721 = vsub.f32 %v296, %v1720
        %v1722 = vand.u32 %v1721, 4294901760
        %1723 = vmatpush1.msra.mxu0 %v1722
        %1724 = vmatprep.subr.mxu0 0.0
        %v1725 = vand.u32 %v295, 4294901760
        %v1726 = vsub.f32 %v295, %v1725
        %v1727 = vand.u32 %v1726, 4294901760
        %1728 = vmatpush1.msra.mxu0 %v1727
        %1729 = vmatprep.subr.mxu0 0.0
        %v1730 = vand.u32 %v294, 4294901760
        %v1731 = vsub.f32 %v294, %v1730
        %v1732 = vand.u32 %v1731, 4294901760
        %1733 = vmatpush1.msra.mxu0 %v1732
        %1734 = vmatprep.subr.mxu0 0.0
        %1735 = vmatpush2.msra.mxu0 0.0
        %1736 = vmatprep.subr.mxu0 0.0
        %1737 = vmatpush2.msra.mxu0 0.0
        %1738 = vmatprep.subr.mxu0 0.0
        %1739 = vmatpush2.msra.mxu0 0.0
        %1740 = vmatprep.subr.mxu0 0.0
        %1741 = vmatpush2.msra.mxu0 0.0
        %1742 = vmatprep.subr.mxu0 0.0
        %1743 = vmatpush2.msra.mxu0 0.0
        %1744 = vmatprep.subr.mxu0 0.0
        %1745 = vmatpush2.msra.mxu0 0.0
        %1746 = vmatprep.subr.mxu0 0.0
        %1747 = vmatpush2.msra.mxu0 0.0
        %1748 = vmatprep.subr.mxu0 0.0
        %1749 = vmatpush2.msra.mxu0 0.0
        %1750 = vmatprep.subr.mxu0 0.0
        %1751 = vmatpush2.msra.mxu0 0.0
        %1752 = vmatprep.subr.mxu0 0.0
        %1753 = vmatpush2.msra.mxu0 0.0
        %1754 = vmatprep.subr.mxu0 0.0
        %1755 = vmatpush2.msra.mxu0 0.0
        %1756 = vmatprep.subr.mxu0 0.0
        %1757 = vmatpush2.msra.mxu0 0.0
        %1758 = vmatprep.subr.mxu0 0.0
        %1759 = vmatpush2.msra.mxu0 0.0
        %1760 = vmatprep.subr.mxu0 0.0
        %1761 = vmatpush2.msra.mxu0 0.0
        %1762 = vmatprep.subr.mxu0 0.0
        %1763 = vmatpush2.msra.mxu0 0.0
        %1764 = vmatprep.subr.mxu0 0.0
        %1765 = vmatpush2.msra.mxu0 0.0
        %1766 = vmatprep.mubr.f32.mxu0 0.0
        %v1767 = vand.u32 %v307, 4294901760
        %1768 = vmatmul.mubr.f32.gmra.mxu0 %v1767
        %v1769 = vpop.f32.mrf.mxu0
        %v1770 = vadd.f32 %v1439, %v1769
        %v1771 = vpop.f32.mrf.mxu0
        %1772 = vmatprep.mubr.f32.mxu0 0.0
        %v1773 = vand.u32 %v310, 4294901760
        %1774 = vmatmul.mubr.f32.gmra.mxu0 %v1773
        %v1775 = vpop.f32.mrf.mxu0
        %v1776 = vadd.f32 %v1447, %v1775
        %v1777 = vpop.f32.mrf.mxu0
        %1778 = vmatprep.mubr.f32.mxu0 0.0
        %v1779 = vand.u32 %v313, 4294901760
        %1780 = vmatmul.mubr.f32.gmra.mxu0 %v1779
        %v1781 = vpop.f32.mrf.mxu0
        %v1782 = vadd.f32 %v1455, %v1781
        %v1783 = vpop.f32.mrf.mxu0
        %1784 = vmatprep.mubr.f32.mxu0 0.0
        %v1785 = vand.u32 %v316, 4294901760
        %1786 = vmatmul.mubr.f32.gmra.mxu0 %v1785
        %v1787 = vpop.f32.mrf.mxu0
        %v1788 = vadd.f32 %v1463, %v1787
        %v1789 = vpop.f32.mrf.mxu0
        %1790 = vmatprep.mubr.f32.mxu0 0.0
        %v1791 = vand.u32 %v319, 4294901760
        %1792 = vmatmul.mubr.f32.gmra.mxu0 %v1791
        %v1793 = vpop.f32.mrf.mxu0
        %v1794 = vadd.f32 %v1471, %v1793
        %v1795 = vpop.f32.mrf.mxu0
        %1796 = vmatprep.mubr.f32.mxu0 0.0
        %v1797 = vand.u32 %v322, 4294901760
        %1798 = vmatmul.mubr.f32.gmra.mxu0 %v1797
        %v1799 = vpop.f32.mrf.mxu0
        %v1800 = vadd.f32 %v1479, %v1799
        %v1801 = vpop.f32.mrf.mxu0
        %1802 = vmatprep.mubr.f32.mxu0 0.0
        %v1803 = vand.u32 %v325, 4294901760
        %1804 = vmatmul.mubr.f32.gmra.mxu0 %v1803
        %v1805 = vpop.f32.mrf.mxu0
        %v1806 = vadd.f32 %v1487, %v1805
        %v1807 = vpop.f32.mrf.mxu0
        %1808 = vmatprep.mubr.f32.mxu0 0.0
        %v1809 = vand.u32 %v328, 4294901760
        %1810 = vmatmul.mubr.f32.gmra.mxu0 %v1809
        %v1811 = vpop.f32.mrf.mxu0
        %v1812 = vadd.f32 %v1495, %v1811
        %v1813 = vpop.f32.mrf.mxu0
        %1814 = vmatprep.mubr.f32.mxu0 0.0
        %v1815 = vand.u32 %v331, 4294901760
        %1816 = vmatmul.mubr.f32.gmra.mxu0 %v1815
        %v1817 = vpop.f32.mrf.mxu0
        %v1818 = vadd.f32 %v1503, %v1817
        %v1819 = vpop.f32.mrf.mxu0
        %1820 = vmatprep.mubr.f32.mxu0 0.0
        %v1821 = vand.u32 %v334, 4294901760
        %1822 = vmatmul.mubr.f32.gmra.mxu0 %v1821
        %v1823 = vpop.f32.mrf.mxu0
        %v1824 = vadd.f32 %v1511, %v1823
        %v1825 = vpop.f32.mrf.mxu0
        %1826 = vmatprep.mubr.f32.mxu0 0.0
        %v1827 = vand.u32 %v337, 4294901760
        %1828 = vmatmul.mubr.f32.gmra.mxu0 %v1827
        %v1829 = vpop.f32.mrf.mxu0
        %v1830 = vadd.f32 %v1519, %v1829
        %v1831 = vpop.f32.mrf.mxu0
        %1832 = vmatprep.mubr.f32.mxu0 0.0
        %v1833 = vand.u32 %v340, 4294901760
        %1834 = vmatmul.mubr.f32.gmra.mxu0 %v1833
        %v1835 = vpop.f32.mrf.mxu0
        %v1836 = vadd.f32 %v1527, %v1835
        %v1837 = vpop.f32.mrf.mxu0
        %1838 = vmatprep.mubr.f32.mxu0 0.0
        %v1839 = vand.u32 %v343, 4294901760
        %1840 = vmatmul.mubr.f32.gmra.mxu0 %v1839
        %v1841 = vpop.f32.mrf.mxu0
        %v1842 = vadd.f32 %v1535, %v1841
        %v1843 = vpop.f32.mrf.mxu0
        %1844 = vmatprep.mubr.f32.mxu0 0.0
        %v1845 = vand.u32 %v346, 4294901760
        %1846 = vmatmul.mubr.f32.gmra.mxu0 %v1845
        %v1847 = vpop.f32.mrf.mxu0
        %v1848 = vadd.f32 %v1543, %v1847
        %v1849 = vpop.f32.mrf.mxu0
        %1850 = vmatprep.mubr.f32.mxu0 0.0
        %v1851 = vand.u32 %v349, 4294901760
        %1852 = vmatmul.mubr.f32.gmra.mxu0 %v1851
        %v1853 = vpop.f32.mrf.mxu0
        %v1854 = vadd.f32 %v1551, %v1853
        %v1855 = vpop.f32.mrf.mxu0
        %1856 = vmatprep.mubr.f32.mxu0 0.0
        %v1857 = vand.u32 %v352, 4294901760
        %1858 = vmatmul.mubr.f32.gmra.mxu0 %v1857
        %v1859 = vpop.f32.mrf.mxu0
        %v1860 = vadd.f32 %v1559, %v1859
        %v1861 = vpop.f32.mrf.mxu0
        %1862 = vmatprep.mubr.f32.mxu0 0.0
        %v1863 = vand.u32 %v355, 4294901760
        %1864 = vmatmul.mubr.f32.gmra.mxu0 %v1863
        %v1865 = vpop.f32.mrf.mxu0
        %v1866 = vadd.f32 %v1567, %v1865
        %v1867 = vpop.f32.mrf.mxu0
        %1868 = vmatprep.mubr.f32.mxu0 0.0
        %v1869 = vand.u32 %v358, 4294901760
        %1870 = vmatmul.mubr.f32.gmra.mxu0 %v1869
        %v1871 = vpop.f32.mrf.mxu0
        %v1872 = vadd.f32 %v1575, %v1871
        %v1873 = vpop.f32.mrf.mxu0
        %1874 = vmatprep.mubr.f32.mxu0 0.0
        %v1875 = vand.u32 %v361, 4294901760
        %1876 = vmatmul.mubr.f32.gmra.mxu0 %v1875
        %v1877 = vpop.f32.mrf.mxu0
        %v1878 = vadd.f32 %v1583, %v1877
        %v1879 = vpop.f32.mrf.mxu0
        %1880 = vmatprep.mubr.f32.mxu0 0.0
        %v1881 = vand.u32 %v364, 4294901760
        %1882 = vmatmul.mubr.f32.gmra.mxu0 %v1881
        %v1883 = vpop.f32.mrf.mxu0
        %v1884 = vadd.f32 %v1591, %v1883
        %v1885 = vpop.f32.mrf.mxu0
        %1886 = vmatprep.mubr.f32.mxu0 0.0
        %v1887 = vand.u32 %v367, 4294901760
        %1888 = vmatmul.mubr.f32.gmra.mxu0 %v1887
        %v1889 = vpop.f32.mrf.mxu0
        %v1890 = vadd.f32 %v1599, %v1889
        %v1891 = vpop.f32.mrf.mxu0
        %1892 = vmatprep.mubr.f32.mxu0 0.0
        %v1893 = vand.u32 %v370, 4294901760
        %1894 = vmatmul.mubr.f32.gmra.mxu0 %v1893
        %v1895 = vpop.f32.mrf.mxu0
        %v1896 = vadd.f32 %v1607, %v1895
        %v1897 = vpop.f32.mrf.mxu0
        %1898 = vmatprep.mubr.f32.mxu0 0.0
        %v1899 = vand.u32 %v373, 4294901760
        %1900 = vmatmul.mubr.f32.gmra.mxu0 %v1899
        %v1901 = vpop.f32.mrf.mxu0
        %v1902 = vadd.f32 %v1615, %v1901
        %v1903 = vpop.f32.mrf.mxu0
        %1904 = vmatprep.mubr.f32.mxu0 0.0
        %v1905 = vand.u32 %v376, 4294901760
        %1906 = vmatmul.mubr.f32.gmra.mxu0 %v1905
        %v1907 = vpop.f32.mrf.mxu0
        %v1908 = vadd.f32 %v1623, %v1907
        %v1909 = vpop.f32.mrf.mxu0
        %1910 = vmatprep.mubr.f32.mxu0 0.0
        %v1911 = vand.u32 %v379, 4294901760
        %1912 = vmatmul.mubr.f32.gmra.mxu0 %v1911
        %v1913 = vpop.f32.mrf.mxu0
        %v1914 = vadd.f32 %v1631, %v1913
        %v1915 = vpop.f32.mrf.mxu0
        %1916 = vmatprep.mubr.f32.mxu0 0.0
        %v1917 = vand.u32 %v382, 4294901760
        %1918 = vmatmul.mubr.f32.gmra.mxu0 %v1917
        %v1919 = vpop.f32.mrf.mxu0
        %v1920 = vadd.f32 %v1639, %v1919
        %v1921 = vpop.f32.mrf.mxu0
        %1922 = vmatprep.mubr.f32.mxu0 0.0
        %v1923 = vand.u32 %v385, 4294901760
        %1924 = vmatmul.mubr.f32.gmra.mxu0 %v1923
        %v1925 = vpop.f32.mrf.mxu0
        %v1926 = vadd.f32 %v1647, %v1925
        %v1927 = vpop.f32.mrf.mxu0
        %1928 = vmatprep.mubr.f32.mxu0 0.0
        %v1929 = vand.u32 %v388, 4294901760
        %1930 = vmatmul.mubr.f32.gmra.mxu0 %v1929
        %v1931 = vpop.f32.mrf.mxu0
        %v1932 = vadd.f32 %v1655, %v1931
        %v1933 = vpop.f32.mrf.mxu0
        %1934 = vmatprep.mubr.f32.mxu0 0.0
        %v1935 = vand.u32 %v391, 4294901760
        %1936 = vmatmul.mubr.f32.gmra.mxu0 %v1935
        %v1937 = vpop.f32.mrf.mxu0
        %v1938 = vadd.f32 %v1663, %v1937
        %v1939 = vpop.f32.mrf.mxu0
        %1940 = vmatprep.mubr.f32.mxu0 0.0
        %v1941 = vand.u32 %v394, 4294901760
        %1942 = vmatmul.mubr.f32.gmra.mxu0 %v1941
        %v1943 = vpop.f32.mrf.mxu0
        %v1944 = vadd.f32 %v1671, %v1943
        %v1945 = vpop.f32.mrf.mxu0
        %1946 = vmatprep.mubr.f32.mxu0 0.0
        %v1947 = vand.u32 %v397, 4294901760
        %1948 = vmatmul.mubr.f32.gmra.mxu0 %v1947
        %v1949 = vpop.f32.mrf.mxu0
        %v1950 = vadd.f32 %v1679, %v1949
        %v1951 = vpop.f32.mrf.mxu0
        %1952 = vmatprep.mubr.f32.mxu0 0.0
        %v1953 = vand.u32 %v400, 4294901760
        %1954 = vmatmul.mubr.f32.gmra.mxu0 %v1953
        %v1955 = vpop.f32.mrf.mxu0
        %v1956 = vadd.f32 %v1687, %v1955
        %v1957 = vpop.f32.mrf.mxu0
        %1958 = vdwg.mxu0
        %1959 = vmatprep.subr.mxu0 0.0
        %1960 = vmatpush1.msra.mxu0 0.0
        %1961 = vmatprep.subr.mxu0 0.0
        %1962 = vmatpush1.msra.mxu0 0.0
        %1963 = vmatprep.subr.mxu0 0.0
        %1964 = vmatpush1.msra.mxu0 0.0
        %1965 = vmatprep.subr.mxu0 0.0
        %1966 = vmatpush1.msra.mxu0 0.0
        %1967 = vmatprep.subr.mxu0 0.0
        %1968 = vmatpush1.msra.mxu0 0.0
        %1969 = vmatprep.subr.mxu0 0.0
        %1970 = vmatpush1.msra.mxu0 0.0
        %1971 = vmatprep.subr.mxu0 0.0
        %1972 = vmatpush1.msra.mxu0 0.0
        %1973 = vmatprep.subr.mxu0 0.0
        %1974 = vmatpush1.msra.mxu0 0.0
        %1975 = vmatprep.subr.mxu0 0.0
        %1976 = vmatpush1.msra.mxu0 0.0
        %1977 = vmatprep.subr.mxu0 0.0
        %1978 = vmatpush1.msra.mxu0 0.0
        %1979 = vmatprep.subr.mxu0 0.0
        %1980 = vmatpush1.msra.mxu0 0.0
        %1981 = vmatprep.subr.mxu0 0.0
        %1982 = vmatpush1.msra.mxu0 0.0
        %1983 = vmatprep.subr.mxu0 0.0
        %v1984 = vand.u32 %v297, 4294901760
        %1985 = vmatpush1.msra.mxu0 %v1984
        %1986 = vmatprep.subr.mxu0 0.0
        %v1987 = vand.u32 %v296, 4294901760
        %1988 = vmatpush1.msra.mxu0 %v1987
        %1989 = vmatprep.subr.mxu0 0.0
        %v1990 = vand.u32 %v295, 4294901760
        %1991 = vmatpush1.msra.mxu0 %v1990
        %1992 = vmatprep.subr.mxu0 0.0
        %v1993 = vand.u32 %v294, 4294901760
        %1994 = vmatpush1.msra.mxu0 %v1993
        %1995 = vmatprep.subr.mxu0 0.0
        %1996 = vmatpush2.msra.mxu0 0.0
        %1997 = vmatprep.subr.mxu0 0.0
        %1998 = vmatpush2.msra.mxu0 0.0
        %1999 = vmatprep.subr.mxu0 0.0
        %2000 = vmatpush2.msra.mxu0 0.0
        %2001 = vmatprep.subr.mxu0 0.0
        %2002 = vmatpush2.msra.mxu0 0.0
        %2003 = vmatprep.subr.mxu0 0.0
        %2004 = vmatpush2.msra.mxu0 0.0
        %2005 = vmatprep.subr.mxu0 0.0
        %2006 = vmatpush2.msra.mxu0 0.0
        %2007 = vmatprep.subr.mxu0 0.0
        %2008 = vmatpush2.msra.mxu0 0.0
        %2009 = vmatprep.subr.mxu0 0.0
        %2010 = vmatpush2.msra.mxu0 0.0
        %2011 = vmatprep.subr.mxu0 0.0
        %2012 = vmatpush2.msra.mxu0 0.0
        %2013 = vmatprep.subr.mxu0 0.0
        %2014 = vmatpush2.msra.mxu0 0.0
        %2015 = vmatprep.subr.mxu0 0.0
        %2016 = vmatpush2.msra.mxu0 0.0
        %2017 = vmatprep.subr.mxu0 0.0
        %2018 = vmatpush2.msra.mxu0 0.0
        %2019 = vmatprep.subr.mxu0 0.0
        %2020 = vmatpush2.msra.mxu0 0.0
        %2021 = vmatprep.subr.mxu0 0.0
        %2022 = vmatpush2.msra.mxu0 0.0
        %2023 = vmatprep.subr.mxu0 0.0
        %2024 = vmatpush2.msra.mxu0 0.0
        %2025 = vmatprep.subr.mxu0 0.0
        %2026 = vmatpush2.msra.mxu0 0.0
        %2027 = vmatprep.mubr.f32.mxu0 0.0
        %v2028 = vand.u32 %v307, 4294901760
        %2029 = vmatmul.mubr.f32.gmra.mxu0 %v2028
        %v2030 = vpop.f32.mrf.mxu0
        %v2031 = vadd.f32 %v1770, %v2030
        %v2032 = vpop.f32.mrf.mxu0
        %2033 = vmatprep.mubr.f32.mxu0 0.0
        %v2034 = vand.u32 %v310, 4294901760
        %2035 = vmatmul.mubr.f32.gmra.mxu0 %v2034
        %v2036 = vpop.f32.mrf.mxu0
        %v2037 = vadd.f32 %v1776, %v2036
        %v2038 = vpop.f32.mrf.mxu0
        %2039 = vmatprep.mubr.f32.mxu0 0.0
        %v2040 = vand.u32 %v313, 4294901760
        %2041 = vmatmul.mubr.f32.gmra.mxu0 %v2040
        %v2042 = vpop.f32.mrf.mxu0
        %v2043 = vadd.f32 %v1782, %v2042
        %v2044 = vpop.f32.mrf.mxu0
        %2045 = vmatprep.mubr.f32.mxu0 0.0
        %v2046 = vand.u32 %v316, 4294901760
        %2047 = vmatmul.mubr.f32.gmra.mxu0 %v2046
        %v2048 = vpop.f32.mrf.mxu0
        %v2049 = vadd.f32 %v1788, %v2048
        %v2050 = vpop.f32.mrf.mxu0
        %2051 = vmatprep.mubr.f32.mxu0 0.0
        %v2052 = vand.u32 %v319, 4294901760
        %2053 = vmatmul.mubr.f32.gmra.mxu0 %v2052
        %v2054 = vpop.f32.mrf.mxu0
        %v2055 = vadd.f32 %v1794, %v2054
        %v2056 = vpop.f32.mrf.mxu0
        %2057 = vmatprep.mubr.f32.mxu0 0.0
        %v2058 = vand.u32 %v322, 4294901760
        %2059 = vmatmul.mubr.f32.gmra.mxu0 %v2058
        %v2060 = vpop.f32.mrf.mxu0
        %v2061 = vadd.f32 %v1800, %v2060
        %v2062 = vpop.f32.mrf.mxu0
        %2063 = vmatprep.mubr.f32.mxu0 0.0
        %v2064 = vand.u32 %v325, 4294901760
        %2065 = vmatmul.mubr.f32.gmra.mxu0 %v2064
        %v2066 = vpop.f32.mrf.mxu0
        %v2067 = vadd.f32 %v1806, %v2066
        %v2068 = vpop.f32.mrf.mxu0
        %2069 = vmatprep.mubr.f32.mxu0 0.0
        %v2070 = vand.u32 %v328, 4294901760
        %2071 = vmatmul.mubr.f32.gmra.mxu0 %v2070
        %v2072 = vpop.f32.mrf.mxu0
        %v2073 = vadd.f32 %v1812, %v2072
        %v2074 = vpop.f32.mrf.mxu0
        %2075 = vmatprep.mubr.f32.mxu0 0.0
        %v2076 = vand.u32 %v331, 4294901760
        %2077 = vmatmul.mubr.f32.gmra.mxu0 %v2076
        %v2078 = vpop.f32.mrf.mxu0
        %v2079 = vadd.f32 %v1818, %v2078
        %v2080 = vpop.f32.mrf.mxu0
        %2081 = vmatprep.mubr.f32.mxu0 0.0
        %v2082 = vand.u32 %v334, 4294901760
        %2083 = vmatmul.mubr.f32.gmra.mxu0 %v2082
        %v2084 = vpop.f32.mrf.mxu0
        %v2085 = vadd.f32 %v1824, %v2084
        %v2086 = vpop.f32.mrf.mxu0
        %2087 = vmatprep.mubr.f32.mxu0 0.0
        %v2088 = vand.u32 %v337, 4294901760
        %2089 = vmatmul.mubr.f32.gmra.mxu0 %v2088
        %v2090 = vpop.f32.mrf.mxu0
        %v2091 = vadd.f32 %v1830, %v2090
        %v2092 = vpop.f32.mrf.mxu0
        %2093 = vmatprep.mubr.f32.mxu0 0.0
        %v2094 = vand.u32 %v340, 4294901760
        %2095 = vmatmul.mubr.f32.gmra.mxu0 %v2094
        %v2096 = vpop.f32.mrf.mxu0
        %v2097 = vadd.f32 %v1836, %v2096
        %v2098 = vpop.f32.mrf.mxu0
        %2099 = vmatprep.mubr.f32.mxu0 0.0
        %v2100 = vand.u32 %v343, 4294901760
        %2101 = vmatmul.mubr.f32.gmra.mxu0 %v2100
        %v2102 = vpop.f32.mrf.mxu0
        %v2103 = vadd.f32 %v1842, %v2102
        %v2104 = vpop.f32.mrf.mxu0
        %2105 = vmatprep.mubr.f32.mxu0 0.0
        %v2106 = vand.u32 %v346, 4294901760
        %2107 = vmatmul.mubr.f32.gmra.mxu0 %v2106
        %v2108 = vpop.f32.mrf.mxu0
        %v2109 = vadd.f32 %v1848, %v2108
        %v2110 = vpop.f32.mrf.mxu0
        %2111 = vmatprep.mubr.f32.mxu0 0.0
        %v2112 = vand.u32 %v349, 4294901760
        %2113 = vmatmul.mubr.f32.gmra.mxu0 %v2112
        %v2114 = vpop.f32.mrf.mxu0
        %v2115 = vadd.f32 %v1854, %v2114
        %v2116 = vpop.f32.mrf.mxu0
        %2117 = vmatprep.mubr.f32.mxu0 0.0
        %v2118 = vand.u32 %v352, 4294901760
        %2119 = vmatmul.mubr.f32.gmra.mxu0 %v2118
        %v2120 = vpop.f32.mrf.mxu0
        %v2121 = vadd.f32 %v1860, %v2120
        %v2122 = vpop.f32.mrf.mxu0
        %2123 = vmatprep.mubr.f32.mxu0 0.0
        %v2124 = vand.u32 %v355, 4294901760
        %2125 = vmatmul.mubr.f32.gmra.mxu0 %v2124
        %v2126 = vpop.f32.mrf.mxu0
        %v2127 = vadd.f32 %v1866, %v2126
        %v2128 = vpop.f32.mrf.mxu0
        %2129 = vmatprep.mubr.f32.mxu0 0.0
        %v2130 = vand.u32 %v358, 4294901760
        %2131 = vmatmul.mubr.f32.gmra.mxu0 %v2130
        %v2132 = vpop.f32.mrf.mxu0
        %v2133 = vadd.f32 %v1872, %v2132
        %v2134 = vpop.f32.mrf.mxu0
        %2135 = vmatprep.mubr.f32.mxu0 0.0
        %v2136 = vand.u32 %v361, 4294901760
        %2137 = vmatmul.mubr.f32.gmra.mxu0 %v2136
        %v2138 = vpop.f32.mrf.mxu0
        %v2139 = vadd.f32 %v1878, %v2138
        %v2140 = vpop.f32.mrf.mxu0
        %2141 = vmatprep.mubr.f32.mxu0 0.0
        %v2142 = vand.u32 %v364, 4294901760
        %2143 = vmatmul.mubr.f32.gmra.mxu0 %v2142
        %v2144 = vpop.f32.mrf.mxu0
        %v2145 = vadd.f32 %v1884, %v2144
        %v2146 = vpop.f32.mrf.mxu0
        %2147 = vmatprep.mubr.f32.mxu0 0.0
        %v2148 = vand.u32 %v367, 4294901760
        %2149 = vmatmul.mubr.f32.gmra.mxu0 %v2148
        %v2150 = vpop.f32.mrf.mxu0
        %v2151 = vadd.f32 %v1890, %v2150
        %v2152 = vpop.f32.mrf.mxu0
        %2153 = vmatprep.mubr.f32.mxu0 0.0
        %v2154 = vand.u32 %v370, 4294901760
        %2155 = vmatmul.mubr.f32.gmra.mxu0 %v2154
        %v2156 = vpop.f32.mrf.mxu0
        %v2157 = vadd.f32 %v1896, %v2156
        %v2158 = vpop.f32.mrf.mxu0
        %2159 = vmatprep.mubr.f32.mxu0 0.0
        %v2160 = vand.u32 %v373, 4294901760
        %2161 = vmatmul.mubr.f32.gmra.mxu0 %v2160
        %v2162 = vpop.f32.mrf.mxu0
        %v2163 = vadd.f32 %v1902, %v2162
        %v2164 = vpop.f32.mrf.mxu0
        %2165 = vmatprep.mubr.f32.mxu0 0.0
        %v2166 = vand.u32 %v376, 4294901760
        %2167 = vmatmul.mubr.f32.gmra.mxu0 %v2166
        %v2168 = vpop.f32.mrf.mxu0
        %v2169 = vadd.f32 %v1908, %v2168
        %v2170 = vpop.f32.mrf.mxu0
        %2171 = vmatprep.mubr.f32.mxu0 0.0
        %v2172 = vand.u32 %v379, 4294901760
        %2173 = vmatmul.mubr.f32.gmra.mxu0 %v2172
        %v2174 = vpop.f32.mrf.mxu0
        %v2175 = vadd.f32 %v1914, %v2174
        %v2176 = vpop.f32.mrf.mxu0
        %2177 = vmatprep.mubr.f32.mxu0 0.0
        %v2178 = vand.u32 %v382, 4294901760
        %2179 = vmatmul.mubr.f32.gmra.mxu0 %v2178
        %v2180 = vpop.f32.mrf.mxu0
        %v2181 = vadd.f32 %v1920, %v2180
        %v2182 = vpop.f32.mrf.mxu0
        %2183 = vmatprep.mubr.f32.mxu0 0.0
        %v2184 = vand.u32 %v385, 4294901760
        %2185 = vmatmul.mubr.f32.gmra.mxu0 %v2184
        %v2186 = vpop.f32.mrf.mxu0
        %v2187 = vadd.f32 %v1926, %v2186
        %v2188 = vpop.f32.mrf.mxu0
        %2189 = vmatprep.mubr.f32.mxu0 0.0
        %v2190 = vand.u32 %v388, 4294901760
        %2191 = vmatmul.mubr.f32.gmra.mxu0 %v2190
        %v2192 = vpop.f32.mrf.mxu0
        %v2193 = vadd.f32 %v1932, %v2192
        %v2194 = vpop.f32.mrf.mxu0
        %2195 = vmatprep.mubr.f32.mxu0 0.0
        %v2196 = vand.u32 %v391, 4294901760
        %2197 = vmatmul.mubr.f32.gmra.mxu0 %v2196
        %v2198 = vpop.f32.mrf.mxu0
        %v2199 = vadd.f32 %v1938, %v2198
        %v2200 = vpop.f32.mrf.mxu0
        %2201 = vmatprep.mubr.f32.mxu0 0.0
        %v2202 = vand.u32 %v394, 4294901760
        %2203 = vmatmul.mubr.f32.gmra.mxu0 %v2202
        %v2204 = vpop.f32.mrf.mxu0
        %v2205 = vadd.f32 %v1944, %v2204
        %v2206 = vpop.f32.mrf.mxu0
        %2207 = vmatprep.mubr.f32.mxu0 0.0
        %v2208 = vand.u32 %v397, 4294901760
        %2209 = vmatmul.mubr.f32.gmra.mxu0 %v2208
        %v2210 = vpop.f32.mrf.mxu0
        %v2211 = vadd.f32 %v1950, %v2210
        %v2212 = vpop.f32.mrf.mxu0
        %2213 = vmatprep.mubr.f32.mxu0 0.0
        %v2214 = vand.u32 %v400, 4294901760
        %2215 = vmatmul.mubr.f32.gmra.mxu0 %v2214
        %v2216 = vpop.f32.mrf.mxu0
        %v2217 = vadd.f32 %v1956, %v2216
        %v2218 = vpop.f32.mrf.mxu0
        %2219 = vdwg.mxu0
        %v2220 = vld [vmem:[%s3] sm:$0x1]
        %v2222 = vlaneseq
        %v2223 = vshrl.u32 %v2222, 7
        %v2224 = vsub.s32 0, %v2223
        %v2225 = vrot.slane %v2220, %v2224
        %v2227 = vmul.f32 %v2031, %v2225
        %v2228 = vmul.f32 %v2037, %v2225
        %v2229 = vmul.f32 %v2043, %v2225
        %v2230 = vmul.f32 %v2049, %v2225
        %v2231 = vmul.f32 %v2055, %v2225
        %v2232 = vmul.f32 %v2061, %v2225
        %v2233 = vmul.f32 %v2067, %v2225
        %v2234 = vmul.f32 %v2073, %v2225
        %v2235 = vmul.f32 %v2079, %v2225
        %v2236 = vmul.f32 %v2085, %v2225
        %v2237 = vmul.f32 %v2091, %v2225
        %v2238 = vmul.f32 %v2097, %v2225
        %v2239 = vmul.f32 %v2103, %v2225
        %v2240 = vmul.f32 %v2109, %v2225
        %v2241 = vmul.f32 %v2115, %v2225
        %v2242 = vmul.f32 %v2121, %v2225
        %v2243 = vmul.f32 %v2127, %v2225
        %v2244 = vmul.f32 %v2133, %v2225
        %v2245 = vmul.f32 %v2139, %v2225
        %v2246 = vmul.f32 %v2145, %v2225
        %v2247 = vmul.f32 %v2151, %v2225
        %v2248 = vmul.f32 %v2157, %v2225
        %v2249 = vmul.f32 %v2163, %v2225
        %v2250 = vmul.f32 %v2169, %v2225
        %v2251 = vmul.f32 %v2175, %v2225
        %v2252 = vmul.f32 %v2181, %v2225
        %v2253 = vmul.f32 %v2187, %v2225
        %v2254 = vmul.f32 %v2193, %v2225
        %v2255 = vmul.f32 %v2199, %v2225
        %v2256 = vmul.f32 %v2205, %v2225
        %v2257 = vmul.f32 %v2211, %v2225
        %v2258 = vmul.f32 %v2217, %v2225
        %v2259 = vsel %vm305, %v2227, 0.0
        %2260 = vadd.xlane.f32.xlu0 %v2259
        %v2261 = vpop.xlane.xlu0 %2260
        %v2262 = vsel %vm305, %v2228, 0.0
        %2263 = vadd.xlane.f32.xlu0 %v2262
        %v2264 = vpop.xlane.xlu0 %2263
        %v2265 = vsel %vm305, %v2229, 0.0
        %2266 = vadd.xlane.f32.xlu0 %v2265
        %v2267 = vpop.xlane.xlu0 %2266
        %v2268 = vsel %vm305, %v2230, 0.0
        %2269 = vadd.xlane.f32.xlu0 %v2268
        %v2270 = vpop.xlane.xlu0 %2269
        %v2271 = vsel %vm305, %v2231, 0.0
        %2272 = vadd.xlane.f32.xlu0 %v2271
        %v2273 = vpop.xlane.xlu0 %2272
        %v2274 = vsel %vm305, %v2232, 0.0
        %2275 = vadd.xlane.f32.xlu0 %v2274
        %v2276 = vpop.xlane.xlu0 %2275
        %v2277 = vsel %vm305, %v2233, 0.0
        %2278 = vadd.xlane.f32.xlu0 %v2277
        %v2279 = vpop.xlane.xlu0 %2278
        %v2280 = vsel %vm305, %v2234, 0.0
        %2281 = vadd.xlane.f32.xlu0 %v2280
        %v2282 = vpop.xlane.xlu0 %2281
        %v2283 = vsel %vm305, %v2235, 0.0
        %2284 = vadd.xlane.f32.xlu0 %v2283
        %v2285 = vpop.xlane.xlu0 %2284
        %v2286 = vsel %vm305, %v2236, 0.0
        %2287 = vadd.xlane.f32.xlu0 %v2286
        %v2288 = vpop.xlane.xlu0 %2287
        %v2289 = vsel %vm305, %v2237, 0.0
        %2290 = vadd.xlane.f32.xlu0 %v2289
        %v2291 = vpop.xlane.xlu0 %2290
        %v2292 = vsel %vm305, %v2238, 0.0
        %2293 = vadd.xlane.f32.xlu0 %v2292
        %v2294 = vpop.xlane.xlu0 %2293
        %v2295 = vsel %vm305, %v2239, 0.0
        %2296 = vadd.xlane.f32.xlu0 %v2295
        %v2297 = vpop.xlane.xlu0 %2296
        %v2298 = vsel %vm305, %v2240, 0.0
        %2299 = vadd.xlane.f32.xlu0 %v2298
        %v2300 = vpop.xlane.xlu0 %2299
        %v2301 = vsel %vm305, %v2241, 0.0
        %2302 = vadd.xlane.f32.xlu0 %v2301
        %v2303 = vpop.xlane.xlu0 %2302
        %v2304 = vsel %vm305, %v2242, 0.0
        %2305 = vadd.xlane.f32.xlu0 %v2304
        %v2306 = vpop.xlane.xlu0 %2305
        %v2307 = vsel %vm305, %v2243, 0.0
        %2308 = vadd.xlane.f32.xlu0 %v2307
        %v2309 = vpop.xlane.xlu0 %2308
        %v2310 = vsel %vm305, %v2244, 0.0
        %2311 = vadd.xlane.f32.xlu0 %v2310
        %v2312 = vpop.xlane.xlu0 %2311
        %v2313 = vsel %vm305, %v2245, 0.0
        %2314 = vadd.xlane.f32.xlu0 %v2313
        %v2315 = vpop.xlane.xlu0 %2314
        %v2316 = vsel %vm305, %v2246, 0.0
        %2317 = vadd.xlane.f32.xlu0 %v2316
        %v2318 = vpop.xlane.xlu0 %2317
        %v2319 = vsel %vm305, %v2247, 0.0
        %2320 = vadd.xlane.f32.xlu0 %v2319
        %v2321 = vpop.xlane.xlu0 %2320
        %v2322 = vsel %vm305, %v2248, 0.0
        %2323 = vadd.xlane.f32.xlu0 %v2322
        %v2324 = vpop.xlane.xlu0 %2323
        %v2325 = vsel %vm305, %v2249, 0.0
        %2326 = vadd.xlane.f32.xlu0 %v2325
        %v2327 = vpop.xlane.xlu0 %2326
        %v2328 = vsel %vm305, %v2250, 0.0
        %2329 = vadd.xlane.f32.xlu0 %v2328
        %v2330 = vpop.xlane.xlu0 %2329
        %v2331 = vsel %vm305, %v2251, 0.0
        %2332 = vadd.xlane.f32.xlu0 %v2331
        %v2333 = vpop.xlane.xlu0 %2332
        %v2334 = vsel %vm305, %v2252, 0.0
        %2335 = vadd.xlane.f32.xlu0 %v2334
        %v2336 = vpop.xlane.xlu0 %2335
        %v2337 = vsel %vm305, %v2253, 0.0
        %2338 = vadd.xlane.f32.xlu0 %v2337
        %v2339 = vpop.xlane.xlu0 %2338
        %v2340 = vsel %vm305, %v2254, 0.0
        %2341 = vadd.xlane.f32.xlu0 %v2340
        %v2342 = vpop.xlane.xlu0 %2341
        %v2343 = vsel %vm305, %v2255, 0.0
        %2344 = vadd.xlane.f32.xlu0 %v2343
        %v2345 = vpop.xlane.xlu0 %2344
        %v2346 = vsel %vm305, %v2256, 0.0
        %2347 = vadd.xlane.f32.xlu0 %v2346
        %v2348 = vpop.xlane.xlu0 %2347
        %v2349 = vsel %vm305, %v2257, 0.0
        %2350 = vadd.xlane.f32.xlu0 %v2349
        %v2351 = vpop.xlane.xlu0 %2350
        %v2352 = vsel %vm305, %v2258, 0.0
        %2353 = vadd.xlane.f32.xlu0 %v2352
        %v2354 = vpop.xlane.xlu0 %2353
        %s2355 = sld [smem:[#allocation2]]
        %v2356 = vstv %s2355
        %v2357 = vadd.f32 %v2261, %v2356
        %v2358 = vadd.f32 %v2264, %v2356
        %v2359 = vadd.f32 %v2267, %v2356
        %v2360 = vadd.f32 %v2270, %v2356
        %v2361 = vadd.f32 %v2273, %v2356
        %v2362 = vadd.f32 %v2276, %v2356
        %v2363 = vadd.f32 %v2279, %v2356
        %v2364 = vadd.f32 %v2282, %v2356
        %v2365 = vadd.f32 %v2285, %v2356
        %v2366 = vadd.f32 %v2288, %v2356
        %v2367 = vadd.f32 %v2291, %v2356
        %v2368 = vadd.f32 %v2294, %v2356
        %v2369 = vadd.f32 %v2297, %v2356
        %v2370 = vadd.f32 %v2300, %v2356
        %v2371 = vadd.f32 %v2303, %v2356
        %v2372 = vadd.f32 %v2306, %v2356
        %v2373 = vadd.f32 %v2309, %v2356
        %v2374 = vadd.f32 %v2312, %v2356
        %v2375 = vadd.f32 %v2315, %v2356
        %v2376 = vadd.f32 %v2318, %v2356
        %v2377 = vadd.f32 %v2321, %v2356
        %v2378 = vadd.f32 %v2324, %v2356
        %v2379 = vadd.f32 %v2327, %v2356
        %v2380 = vadd.f32 %v2330, %v2356
        %v2381 = vadd.f32 %v2333, %v2356
        %v2382 = vadd.f32 %v2336, %v2356
        %v2383 = vadd.f32 %v2339, %v2356
        %v2384 = vadd.f32 %v2342, %v2356
        %v2385 = vadd.f32 %v2345, %v2356
        %v2386 = vadd.f32 %v2348, %v2356
        %v2387 = vadd.f32 %v2351, %v2356
        %v2388 = vadd.f32 %v2354, %v2356
        %vm2389 = vcmp.gt.f32.partialorder %v2357, 0.0
        %vm2390 = vcmp.gt.f32.partialorder %v2358, 0.0
        %vm2391 = vcmp.gt.f32.partialorder %v2359, 0.0
        %vm2392 = vcmp.gt.f32.partialorder %v2360, 0.0
        %vm2393 = vcmp.gt.f32.partialorder %v2361, 0.0
        %vm2394 = vcmp.gt.f32.partialorder %v2362, 0.0
        %vm2395 = vcmp.gt.f32.partialorder %v2363, 0.0
        %vm2396 = vcmp.gt.f32.partialorder %v2364, 0.0
        %vm2397 = vcmp.gt.f32.partialorder %v2365, 0.0
        %vm2398 = vcmp.gt.f32.partialorder %v2366, 0.0
        %vm2399 = vcmp.gt.f32.partialorder %v2367, 0.0
        %vm2400 = vcmp.gt.f32.partialorder %v2368, 0.0
        %vm2401 = vcmp.gt.f32.partialorder %v2369, 0.0
        %vm2402 = vcmp.gt.f32.partialorder %v2370, 0.0
        %vm2403 = vcmp.gt.f32.partialorder %v2371, 0.0
        %vm2404 = vcmp.gt.f32.partialorder %v2372, 0.0
        %vm2405 = vcmp.gt.f32.partialorder %v2373, 0.0
        %vm2406 = vcmp.gt.f32.partialorder %v2374, 0.0
        %vm2407 = vcmp.gt.f32.partialorder %v2375, 0.0
        %vm2408 = vcmp.gt.f32.partialorder %v2376, 0.0
        %vm2409 = vcmp.gt.f32.partialorder %v2377, 0.0
        %vm2410 = vcmp.gt.f32.partialorder %v2378, 0.0
        %vm2411 = vcmp.gt.f32.partialorder %v2379, 0.0
        %vm2412 = vcmp.gt.f32.partialorder %v2380, 0.0
        %vm2413 = vcmp.gt.f32.partialorder %v2381, 0.0
        %vm2414 = vcmp.gt.f32.partialorder %v2382, 0.0
        %vm2415 = vcmp.gt.f32.partialorder %v2383, 0.0
        %vm2416 = vcmp.gt.f32.partialorder %v2384, 0.0
        %vm2417 = vcmp.gt.f32.partialorder %v2385, 0.0
        %vm2418 = vcmp.gt.f32.partialorder %v2386, 0.0
        %vm2419 = vcmp.gt.f32.partialorder %v2387, 0.0
        %vm2420 = vcmp.gt.f32.partialorder %v2388, 0.0
        %v2421 = vmul.f32 %v2357, 0.02
        %v2422 = vmul.f32 %v2358, 0.02
        %v2423 = vmul.f32 %v2359, 0.02
        %v2424 = vmul.f32 %v2360, 0.02
        %v2425 = vmul.f32 %v2361, 0.02
        %v2426 = vmul.f32 %v2362, 0.02
        %v2427 = vmul.f32 %v2363, 0.02
        %v2428 = vmul.f32 %v2364, 0.02
        %v2429 = vmul.f32 %v2365, 0.02
        %v2430 = vmul.f32 %v2366, 0.02
        %v2431 = vmul.f32 %v2367, 0.02
        %v2432 = vmul.f32 %v2368, 0.02
        %v2433 = vmul.f32 %v2369, 0.02
        %v2434 = vmul.f32 %v2370, 0.02
        %v2435 = vmul.f32 %v2371, 0.02
        %v2436 = vmul.f32 %v2372, 0.02
        %v2437 = vmul.f32 %v2373, 0.02
        %v2438 = vmul.f32 %v2374, 0.02
        %v2439 = vmul.f32 %v2375, 0.02
        %v2440 = vmul.f32 %v2376, 0.02
        %v2441 = vmul.f32 %v2377, 0.02
        %v2442 = vmul.f32 %v2378, 0.02
        %v2443 = vmul.f32 %v2379, 0.02
        %v2444 = vmul.f32 %v2380, 0.02
        %v2445 = vmul.f32 %v2381, 0.02
        %v2446 = vmul.f32 %v2382, 0.02
        %v2447 = vmul.f32 %v2383, 0.02
        %v2448 = vmul.f32 %v2384, 0.02
        %v2449 = vmul.f32 %v2385, 0.02
        %v2450 = vmul.f32 %v2386, 0.02
        %v2451 = vmul.f32 %v2387, 0.02
        %v2452 = vmul.f32 %v2388, 0.02
        %v2453 = vsel %vm2389, %v2357, %v2421
        %v2454 = vsel %vm2390, %v2358, %v2422
        %v2455 = vsel %vm2391, %v2359, %v2423
        %v2456 = vsel %vm2392, %v2360, %v2424
        %v2457 = vsel %vm2393, %v2361, %v2425
        %v2458 = vsel %vm2394, %v2362, %v2426
        %v2459 = vsel %vm2395, %v2363, %v2427
        %v2460 = vsel %vm2396, %v2364, %v2428
        %v2461 = vsel %vm2397, %v2365, %v2429
        %v2462 = vsel %vm2398, %v2366, %v2430
        %v2463 = vsel %vm2399, %v2367, %v2431
        %v2464 = vsel %vm2400, %v2368, %v2432
        %v2465 = vsel %vm2401, %v2369, %v2433
        %v2466 = vsel %vm2402, %v2370, %v2434
        %v2467 = vsel %vm2403, %v2371, %v2435
        %v2468 = vsel %vm2404, %v2372, %v2436
        %v2469 = vsel %vm2405, %v2373, %v2437
        %v2470 = vsel %vm2406, %v2374, %v2438
        %v2471 = vsel %vm2407, %v2375, %v2439
        %v2472 = vsel %vm2408, %v2376, %v2440
        %v2473 = vsel %vm2409, %v2377, %v2441
        %v2474 = vsel %vm2410, %v2378, %v2442
        %v2475 = vsel %vm2411, %v2379, %v2443
        %v2476 = vsel %vm2412, %v2380, %v2444
        %v2477 = vsel %vm2413, %v2381, %v2445
        %v2478 = vsel %vm2414, %v2382, %v2446
        %v2479 = vsel %vm2415, %v2383, %v2447
        %v2480 = vsel %vm2416, %v2384, %v2448
        %v2481 = vsel %vm2417, %v2385, %v2449
        %v2482 = vsel %vm2418, %v2386, %v2450
        %v2483 = vsel %vm2419, %v2387, %v2451
        %v2484 = vsel %vm2420, %v2388, %v2452
        %v2485 = vmax.f32 %v2453, %v2454
        %v2486 = vrot.slane %v2485, 4
        %v2487 = vmax.f32 %v2485, %v2486
        %v2488 = vrot.slane %v2487, 2
        %v2489 = vmax.f32 %v2487, %v2488
        %v2490 = vrot.slane %v2489, 1
        %v2491 = vmax.f32 %v2489, %v2490
        %v2492 = vmax.f32 %v2455, %v2456
        %v2493 = vrot.slane %v2492, 4
        %v2494 = vmax.f32 %v2492, %v2493
        %v2495 = vrot.slane %v2494, 2
        %v2496 = vmax.f32 %v2494, %v2495
        %v2497 = vrot.slane %v2496, 1
        %v2498 = vmax.f32 %v2496, %v2497
        %v2499 = vmax.f32 %v2457, %v2458
        %v2500 = vrot.slane %v2499, 4
        %v2501 = vmax.f32 %v2499, %v2500
        %v2502 = vrot.slane %v2501, 2
        %v2503 = vmax.f32 %v2501, %v2502
        %v2504 = vrot.slane %v2503, 1
        %v2505 = vmax.f32 %v2503, %v2504
        %v2506 = vmax.f32 %v2459, %v2460
        %v2507 = vrot.slane %v2506, 4
        %v2508 = vmax.f32 %v2506, %v2507
        %v2509 = vrot.slane %v2508, 2
        %v2510 = vmax.f32 %v2508, %v2509
        %v2511 = vrot.slane %v2510, 1
        %v2512 = vmax.f32 %v2510, %v2511
        %v2513 = vmax.f32 %v2461, %v2462
        %v2514 = vrot.slane %v2513, 4
        %v2515 = vmax.f32 %v2513, %v2514
        %v2516 = vrot.slane %v2515, 2
        %v2517 = vmax.f32 %v2515, %v2516
        %v2518 = vrot.slane %v2517, 1
        %v2519 = vmax.f32 %v2517, %v2518
        %v2520 = vmax.f32 %v2463, %v2464
        %v2521 = vrot.slane %v2520, 4
        %v2522 = vmax.f32 %v2520, %v2521
        %v2523 = vrot.slane %v2522, 2
        %v2524 = vmax.f32 %v2522, %v2523
        %v2525 = vrot.slane %v2524, 1
        %v2526 = vmax.f32 %v2524, %v2525
        %v2527 = vmax.f32 %v2465, %v2466
        %v2528 = vrot.slane %v2527, 4
        %v2529 = vmax.f32 %v2527, %v2528
        %v2530 = vrot.slane %v2529, 2
        %v2531 = vmax.f32 %v2529, %v2530
        %v2532 = vrot.slane %v2531, 1
        %v2533 = vmax.f32 %v2531, %v2532
        %v2534 = vmax.f32 %v2467, %v2468
        %v2535 = vrot.slane %v2534, 4
        %v2536 = vmax.f32 %v2534, %v2535
        %v2537 = vrot.slane %v2536, 2
        %v2538 = vmax.f32 %v2536, %v2537
        %v2539 = vrot.slane %v2538, 1
        %v2540 = vmax.f32 %v2538, %v2539
        %v2541 = vmax.f32 %v2469, %v2470
        %v2542 = vrot.slane %v2541, 4
        %v2543 = vmax.f32 %v2541, %v2542
        %v2544 = vrot.slane %v2543, 2
        %v2545 = vmax.f32 %v2543, %v2544
        %v2546 = vrot.slane %v2545, 1
        %v2547 = vmax.f32 %v2545, %v2546
        %v2548 = vmax.f32 %v2471, %v2472
        %v2549 = vrot.slane %v2548, 4
        %v2550 = vmax.f32 %v2548, %v2549
        %v2551 = vrot.slane %v2550, 2
        %v2552 = vmax.f32 %v2550, %v2551
        %v2553 = vrot.slane %v2552, 1
        %v2554 = vmax.f32 %v2552, %v2553
        %v2555 = vmax.f32 %v2473, %v2474
        %v2556 = vrot.slane %v2555, 4
        %v2557 = vmax.f32 %v2555, %v2556
        %v2558 = vrot.slane %v2557, 2
        %v2559 = vmax.f32 %v2557, %v2558
        %v2560 = vrot.slane %v2559, 1
        %v2561 = vmax.f32 %v2559, %v2560
        %v2562 = vmax.f32 %v2475, %v2476
        %v2563 = vrot.slane %v2562, 4
        %v2564 = vmax.f32 %v2562, %v2563
        %v2565 = vrot.slane %v2564, 2
        %v2566 = vmax.f32 %v2564, %v2565
        %v2567 = vrot.slane %v2566, 1
        %v2568 = vmax.f32 %v2566, %v2567
        %v2569 = vmax.f32 %v2477, %v2478
        %v2570 = vrot.slane %v2569, 4
        %v2571 = vmax.f32 %v2569, %v2570
        %v2572 = vrot.slane %v2571, 2
        %v2573 = vmax.f32 %v2571, %v2572
        %v2574 = vrot.slane %v2573, 1
        %v2575 = vmax.f32 %v2573, %v2574
        %v2576 = vmax.f32 %v2479, %v2480
        %v2577 = vrot.slane %v2576, 4
        %v2578 = vmax.f32 %v2576, %v2577
        %v2579 = vrot.slane %v2578, 2
        %v2580 = vmax.f32 %v2578, %v2579
        %v2581 = vrot.slane %v2580, 1
        %v2582 = vmax.f32 %v2580, %v2581
        %v2583 = vmax.f32 %v2481, %v2482
        %v2584 = vrot.slane %v2583, 4
        %v2585 = vmax.f32 %v2583, %v2584
        %v2586 = vrot.slane %v2585, 2
        %v2587 = vmax.f32 %v2585, %v2586
        %v2588 = vrot.slane %v2587, 1
        %v2589 = vmax.f32 %v2587, %v2588
        %v2590 = vmax.f32 %v2483, %v2484
        %v2591 = vrot.slane %v2590, 4
        %v2592 = vmax.f32 %v2590, %v2591
        %v2593 = vrot.slane %v2592, 2
        %v2594 = vmax.f32 %v2592, %v2593
        %v2595 = vrot.slane %v2594, 1
        %v2596 = vmax.f32 %v2594, %v2595
        %v2597 = vsub.f32 %v2453, %v2491
        %v2598 = vsub.f32 %v2454, %v2491
        %v2599 = vsub.f32 %v2455, %v2498
        %v2600 = vsub.f32 %v2456, %v2498
        %v2601 = vsub.f32 %v2457, %v2505
        %v2602 = vsub.f32 %v2458, %v2505
        %v2603 = vsub.f32 %v2459, %v2512
        %v2604 = vsub.f32 %v2460, %v2512
        %v2605 = vsub.f32 %v2461, %v2519
        %v2606 = vsub.f32 %v2462, %v2519
        %v2607 = vsub.f32 %v2463, %v2526
        %v2608 = vsub.f32 %v2464, %v2526
        %v2609 = vsub.f32 %v2465, %v2533
        %v2610 = vsub.f32 %v2466, %v2533
        %v2611 = vsub.f32 %v2467, %v2540
        %v2612 = vsub.f32 %v2468, %v2540
        %v2613 = vsub.f32 %v2469, %v2547
        %v2614 = vsub.f32 %v2470, %v2547
        %v2615 = vsub.f32 %v2471, %v2554
        %v2616 = vsub.f32 %v2472, %v2554
        %v2617 = vsub.f32 %v2473, %v2561
        %v2618 = vsub.f32 %v2474, %v2561
        %v2619 = vsub.f32 %v2475, %v2568
        %v2620 = vsub.f32 %v2476, %v2568
        %v2621 = vsub.f32 %v2477, %v2575
        %v2622 = vsub.f32 %v2478, %v2575
        %v2623 = vsub.f32 %v2479, %v2582
        %v2624 = vsub.f32 %v2480, %v2582
        %v2625 = vsub.f32 %v2481, %v2589
        %v2626 = vsub.f32 %v2482, %v2589
        %v2627 = vsub.f32 %v2483, %v2596
        %v2628 = vsub.f32 %v2484, %v2596
        %v2629 = vmul.f32 %v2597, 1.442695
        %v2630 = vpow.pop %v2629
        %v2631 = vmul.f32 %v2598, 1.442695
        %v2632 = vpow.pop %v2631
        %v2633 = vmul.f32 %v2599, 1.442695
        %v2634 = vpow.pop %v2633
        %v2635 = vmul.f32 %v2600, 1.442695
        %v2636 = vpow.pop %v2635
        %v2637 = vmul.f32 %v2601, 1.442695
        %v2638 = vpow.pop %v2637
        %v2639 = vmul.f32 %v2602, 1.442695
        %v2640 = vpow.pop %v2639
        %v2641 = vmul.f32 %v2603, 1.442695
        %v2642 = vpow.pop %v2641
        %v2643 = vmul.f32 %v2604, 1.442695
        %v2644 = vpow.pop %v2643
        %v2645 = vmul.f32 %v2605, 1.442695
        %v2646 = vpow.pop %v2645
        %v2647 = vmul.f32 %v2606, 1.442695
        %v2648 = vpow.pop %v2647
        %v2649 = vmul.f32 %v2607, 1.442695
        %v2650 = vpow.pop %v2649
        %v2651 = vmul.f32 %v2608, 1.442695
        %v2652 = vpow.pop %v2651
        %v2653 = vmul.f32 %v2609, 1.442695
        %v2654 = vpow.pop %v2653
        %v2655 = vmul.f32 %v2610, 1.442695
        %v2656 = vpow.pop %v2655
        %v2657 = vmul.f32 %v2611, 1.442695
        %v2658 = vpow.pop %v2657
        %v2659 = vmul.f32 %v2612, 1.442695
        %v2660 = vpow.pop %v2659
        %v2661 = vmul.f32 %v2613, 1.442695
        %v2662 = vpow.pop %v2661
        %v2663 = vmul.f32 %v2614, 1.442695
        %v2664 = vpow.pop %v2663
        %v2665 = vmul.f32 %v2615, 1.442695
        %v2666 = vpow.pop %v2665
        %v2667 = vmul.f32 %v2616, 1.442695
        %v2668 = vpow.pop %v2667
        %v2669 = vmul.f32 %v2617, 1.442695
        %v2670 = vpow.pop %v2669
        %v2671 = vmul.f32 %v2618, 1.442695
        %v2672 = vpow.pop %v2671
        %v2673 = vmul.f32 %v2619, 1.442695
        %v2674 = vpow.pop %v2673
        %v2675 = vmul.f32 %v2620, 1.442695
        %v2676 = vpow.pop %v2675
        %v2677 = vmul.f32 %v2621, 1.442695
        %v2678 = vpow.pop %v2677
        %v2679 = vmul.f32 %v2622, 1.442695
        %v2680 = vpow.pop %v2679
        %v2681 = vmul.f32 %v2623, 1.442695
        %v2682 = vpow.pop %v2681
        %v2683 = vmul.f32 %v2624, 1.442695
        %v2684 = vpow.pop %v2683
        %v2685 = vmul.f32 %v2625, 1.442695
        %v2686 = vpow.pop %v2685
        %v2687 = vmul.f32 %v2626, 1.442695
        %v2688 = vpow.pop %v2687
        %v2689 = vmul.f32 %v2627, 1.442695
        %v2690 = vpow.pop %v2689
        %v2691 = vmul.f32 %v2628, 1.442695
        %v2692 = vpow.pop %v2691
        %v2693 = vadd.f32 %v2630, %v2632
        %v2694 = vrot.slane %v2693, 4
        %v2695 = vadd.f32 %v2693, %v2694
        %v2696 = vrot.slane %v2695, 2
        %v2697 = vadd.f32 %v2695, %v2696
        %v2698 = vrot.slane %v2697, 1
        %v2699 = vadd.f32 %v2697, %v2698
        %v2700 = vadd.f32 %v2634, %v2636
        %v2701 = vrot.slane %v2700, 4
        %v2702 = vadd.f32 %v2700, %v2701
        %v2703 = vrot.slane %v2702, 2
        %v2704 = vadd.f32 %v2702, %v2703
        %v2705 = vrot.slane %v2704, 1
        %v2706 = vadd.f32 %v2704, %v2705
        %v2707 = vadd.f32 %v2638, %v2640
        %v2708 = vrot.slane %v2707, 4
        %v2709 = vadd.f32 %v2707, %v2708
        %v2710 = vrot.slane %v2709, 2
        %v2711 = vadd.f32 %v2709, %v2710
        %v2712 = vrot.slane %v2711, 1
        %v2713 = vadd.f32 %v2711, %v2712
        %v2714 = vadd.f32 %v2642, %v2644
        %v2715 = vrot.slane %v2714, 4
        %v2716 = vadd.f32 %v2714, %v2715
        %v2717 = vrot.slane %v2716, 2
        %v2718 = vadd.f32 %v2716, %v2717
        %v2719 = vrot.slane %v2718, 1
        %v2720 = vadd.f32 %v2718, %v2719
        %v2721 = vadd.f32 %v2646, %v2648
        %v2722 = vrot.slane %v2721, 4
        %v2723 = vadd.f32 %v2721, %v2722
        %v2724 = vrot.slane %v2723, 2
        %v2725 = vadd.f32 %v2723, %v2724
        %v2726 = vrot.slane %v2725, 1
        %v2727 = vadd.f32 %v2725, %v2726
        %v2728 = vadd.f32 %v2650, %v2652
        %v2729 = vrot.slane %v2728, 4
        %v2730 = vadd.f32 %v2728, %v2729
        %v2731 = vrot.slane %v2730, 2
        %v2732 = vadd.f32 %v2730, %v2731
        %v2733 = vrot.slane %v2732, 1
        %v2734 = vadd.f32 %v2732, %v2733
        %v2735 = vadd.f32 %v2654, %v2656
        %v2736 = vrot.slane %v2735, 4
        %v2737 = vadd.f32 %v2735, %v2736
        %v2738 = vrot.slane %v2737, 2
        %v2739 = vadd.f32 %v2737, %v2738
        %v2740 = vrot.slane %v2739, 1
        %v2741 = vadd.f32 %v2739, %v2740
        %v2742 = vadd.f32 %v2658, %v2660
        %v2743 = vrot.slane %v2742, 4
        %v2744 = vadd.f32 %v2742, %v2743
        %v2745 = vrot.slane %v2744, 2
        %v2746 = vadd.f32 %v2744, %v2745
        %v2747 = vrot.slane %v2746, 1
        %v2748 = vadd.f32 %v2746, %v2747
        %v2749 = vadd.f32 %v2662, %v2664
        %v2750 = vrot.slane %v2749, 4
        %v2751 = vadd.f32 %v2749, %v2750
        %v2752 = vrot.slane %v2751, 2
        %v2753 = vadd.f32 %v2751, %v2752
        %v2754 = vrot.slane %v2753, 1
        %v2755 = vadd.f32 %v2753, %v2754
        %v2756 = vadd.f32 %v2666, %v2668
        %v2757 = vrot.slane %v2756, 4
        %v2758 = vadd.f32 %v2756, %v2757
        %v2759 = vrot.slane %v2758, 2
        %v2760 = vadd.f32 %v2758, %v2759
        %v2761 = vrot.slane %v2760, 1
        %v2762 = vadd.f32 %v2760, %v2761
        %v2763 = vadd.f32 %v2670, %v2672
        %v2764 = vrot.slane %v2763, 4
        %v2765 = vadd.f32 %v2763, %v2764
        %v2766 = vrot.slane %v2765, 2
        %v2767 = vadd.f32 %v2765, %v2766
        %v2768 = vrot.slane %v2767, 1
        %v2769 = vadd.f32 %v2767, %v2768
        %v2770 = vadd.f32 %v2674, %v2676
        %v2771 = vrot.slane %v2770, 4
        %v2772 = vadd.f32 %v2770, %v2771
        %v2773 = vrot.slane %v2772, 2
        %v2774 = vadd.f32 %v2772, %v2773
        %v2775 = vrot.slane %v2774, 1
        %v2776 = vadd.f32 %v2774, %v2775
        %v2777 = vadd.f32 %v2678, %v2680
        %v2778 = vrot.slane %v2777, 4
        %v2779 = vadd.f32 %v2777, %v2778
        %v2780 = vrot.slane %v2779, 2
        %v2781 = vadd.f32 %v2779, %v2780
        %v2782 = vrot.slane %v2781, 1
        %v2783 = vadd.f32 %v2781, %v2782
        %v2784 = vadd.f32 %v2682, %v2684
        %v2785 = vrot.slane %v2784, 4
        %v2786 = vadd.f32 %v2784, %v2785
        %v2787 = vrot.slane %v2786, 2
        %v2788 = vadd.f32 %v2786, %v2787
        %v2789 = vrot.slane %v2788, 1
        %v2790 = vadd.f32 %v2788, %v2789
        %v2791 = vadd.f32 %v2686, %v2688
        %v2792 = vrot.slane %v2791, 4
        %v2793 = vadd.f32 %v2791, %v2792
        %v2794 = vrot.slane %v2793, 2
        %v2795 = vadd.f32 %v2793, %v2794
        %v2796 = vrot.slane %v2795, 1
        %v2797 = vadd.f32 %v2795, %v2796
        %v2798 = vadd.f32 %v2690, %v2692
        %v2799 = vrot.slane %v2798, 4
        %v2800 = vadd.f32 %v2798, %v2799
        %v2801 = vrot.slane %v2800, 2
        %v2802 = vadd.f32 %v2800, %v2801
        %v2803 = vrot.slane %v2802, 1
        %v2804 = vadd.f32 %v2802, %v2803
        %v2805 = vrcp.pop %v2699
        %v2806 = vmul.f32 %v2630, %v2805
        %v2807 = vmul.f32 %v2632, %v2805
        %v2808 = vrcp.pop %v2706
        %v2809 = vmul.f32 %v2634, %v2808
        %v2810 = vmul.f32 %v2636, %v2808
        %v2811 = vrcp.pop %v2713
        %v2812 = vmul.f32 %v2638, %v2811
        %v2813 = vmul.f32 %v2640, %v2811
        %v2814 = vrcp.pop %v2720
        %v2815 = vmul.f32 %v2642, %v2814
        %v2816 = vmul.f32 %v2644, %v2814
        %v2817 = vrcp.pop %v2727
        %v2818 = vmul.f32 %v2646, %v2817
        %v2819 = vmul.f32 %v2648, %v2817
        %v2820 = vrcp.pop %v2734
        %v2821 = vmul.f32 %v2650, %v2820
        %v2822 = vmul.f32 %v2652, %v2820
        %v2823 = vrcp.pop %v2741
        %v2824 = vmul.f32 %v2654, %v2823
        %v2825 = vmul.f32 %v2656, %v2823
        %v2826 = vrcp.pop %v2748
        %v2827 = vmul.f32 %v2658, %v2826
        %v2828 = vmul.f32 %v2660, %v2826
        %v2829 = vrcp.pop %v2755
        %v2830 = vmul.f32 %v2662, %v2829
        %v2831 = vmul.f32 %v2664, %v2829
        %v2832 = vrcp.pop %v2762
        %v2833 = vmul.f32 %v2666, %v2832
        %v2834 = vmul.f32 %v2668, %v2832
        %v2835 = vrcp.pop %v2769
        %v2836 = vmul.f32 %v2670, %v2835
        %v2837 = vmul.f32 %v2672, %v2835
        %v2838 = vrcp.pop %v2776
        %v2839 = vmul.f32 %v2674, %v2838
        %v2840 = vmul.f32 %v2676, %v2838
        %v2841 = vrcp.pop %v2783
        %v2842 = vmul.f32 %v2678, %v2841
        %v2843 = vmul.f32 %v2680, %v2841
        %v2844 = vrcp.pop %v2790
        %v2845 = vmul.f32 %v2682, %v2844
        %v2846 = vmul.f32 %v2684, %v2844
        %v2847 = vrcp.pop %v2797
        %v2848 = vmul.f32 %v2686, %v2847
        %v2849 = vmul.f32 %v2688, %v2847
        %v2850 = vrcp.pop %v2804
        %v2851 = vmul.f32 %v2690, %v2850
        %v2852 = vmul.f32 %v2692, %v2850
        %v2853 = vmul.f32 %v2031, %v2806
        %v2854 = vmul.f32 %v2037, %v2807
        %v2855 = vmul.f32 %v2043, %v2809
        %v2856 = vmul.f32 %v2049, %v2810
        %v2857 = vmul.f32 %v2055, %v2812
        %v2858 = vmul.f32 %v2061, %v2813
        %v2859 = vmul.f32 %v2067, %v2815
        %v2860 = vmul.f32 %v2073, %v2816
        %v2861 = vmul.f32 %v2079, %v2818
        %v2862 = vmul.f32 %v2085, %v2819
        %v2863 = vmul.f32 %v2091, %v2821
        %v2864 = vmul.f32 %v2097, %v2822
        %v2865 = vmul.f32 %v2103, %v2824
        %v2866 = vmul.f32 %v2109, %v2825
        %v2867 = vmul.f32 %v2115, %v2827
        %v2868 = vmul.f32 %v2121, %v2828
        %v2869 = vmul.f32 %v2127, %v2830
        %v2870 = vmul.f32 %v2133, %v2831
        %v2871 = vmul.f32 %v2139, %v2833
        %v2872 = vmul.f32 %v2145, %v2834
        %v2873 = vmul.f32 %v2151, %v2836
        %v2874 = vmul.f32 %v2157, %v2837
        %v2875 = vmul.f32 %v2163, %v2839
        %v2876 = vmul.f32 %v2169, %v2840
        %v2877 = vmul.f32 %v2175, %v2842
        %v2878 = vmul.f32 %v2181, %v2843
        %v2879 = vmul.f32 %v2187, %v2845
        %v2880 = vmul.f32 %v2193, %v2846
        %v2881 = vmul.f32 %v2199, %v2848
        %v2882 = vmul.f32 %v2205, %v2849
        %v2883 = vmul.f32 %v2211, %v2851
        %v2884 = vmul.f32 %v2217, %v2852
        %v2885 = vsel %vm305, %v2853, 0.0
        %2886 = vadd.xlane.f32.xlu0 %v2885
        %v2887 = vpop.xlane.xlu0 %2886
        %v2888 = vsel %vm305, %v2854, 0.0
        %2889 = vadd.xlane.f32.xlu0 %v2888
        %v2890 = vpop.xlane.xlu0 %2889
        %v2891 = vsel %vm305, %v2855, 0.0
        %2892 = vadd.xlane.f32.xlu0 %v2891
        %v2893 = vpop.xlane.xlu0 %2892
        %v2894 = vsel %vm305, %v2856, 0.0
        %2895 = vadd.xlane.f32.xlu0 %v2894
        %v2896 = vpop.xlane.xlu0 %2895
        %v2897 = vsel %vm305, %v2857, 0.0
        %2898 = vadd.xlane.f32.xlu0 %v2897
        %v2899 = vpop.xlane.xlu0 %2898
        %v2900 = vsel %vm305, %v2858, 0.0
        %2901 = vadd.xlane.f32.xlu0 %v2900
        %v2902 = vpop.xlane.xlu0 %2901
        %v2903 = vsel %vm305, %v2859, 0.0
        %2904 = vadd.xlane.f32.xlu0 %v2903
        %v2905 = vpop.xlane.xlu0 %2904
        %v2906 = vsel %vm305, %v2860, 0.0
        %2907 = vadd.xlane.f32.xlu0 %v2906
        %v2908 = vpop.xlane.xlu0 %2907
        %v2909 = vsel %vm305, %v2861, 0.0
        %2910 = vadd.xlane.f32.xlu0 %v2909
        %v2911 = vpop.xlane.xlu0 %2910
        %v2912 = vsel %vm305, %v2862, 0.0
        %2913 = vadd.xlane.f32.xlu0 %v2912
        %v2914 = vpop.xlane.xlu0 %2913
        %v2915 = vsel %vm305, %v2863, 0.0
        %2916 = vadd.xlane.f32.xlu0 %v2915
        %v2917 = vpop.xlane.xlu0 %2916
        %v2918 = vsel %vm305, %v2864, 0.0
        %2919 = vadd.xlane.f32.xlu0 %v2918
        %v2920 = vpop.xlane.xlu0 %2919
        %v2921 = vsel %vm305, %v2865, 0.0
        %2922 = vadd.xlane.f32.xlu0 %v2921
        %v2923 = vpop.xlane.xlu0 %2922
        %v2924 = vsel %vm305, %v2866, 0.0
        %2925 = vadd.xlane.f32.xlu0 %v2924
        %v2926 = vpop.xlane.xlu0 %2925
        %v2927 = vsel %vm305, %v2867, 0.0
        %2928 = vadd.xlane.f32.xlu0 %v2927
        %v2929 = vpop.xlane.xlu0 %2928
        %v2930 = vsel %vm305, %v2868, 0.0
        %2931 = vadd.xlane.f32.xlu0 %v2930
        %v2932 = vpop.xlane.xlu0 %2931
        %v2933 = vsel %vm305, %v2869, 0.0
        %2934 = vadd.xlane.f32.xlu0 %v2933
        %v2935 = vpop.xlane.xlu0 %2934
        %v2936 = vsel %vm305, %v2870, 0.0
        %2937 = vadd.xlane.f32.xlu0 %v2936
        %v2938 = vpop.xlane.xlu0 %2937
        %v2939 = vsel %vm305, %v2871, 0.0
        %2940 = vadd.xlane.f32.xlu0 %v2939
        %v2941 = vpop.xlane.xlu0 %2940
        %v2942 = vsel %vm305, %v2872, 0.0
        %2943 = vadd.xlane.f32.xlu0 %v2942
        %v2944 = vpop.xlane.xlu0 %2943
        %v2945 = vsel %vm305, %v2873, 0.0
        %2946 = vadd.xlane.f32.xlu0 %v2945
        %v2947 = vpop.xlane.xlu0 %2946
        %v2948 = vsel %vm305, %v2874, 0.0
        %2949 = vadd.xlane.f32.xlu0 %v2948
        %v2950 = vpop.xlane.xlu0 %2949
        %v2951 = vsel %vm305, %v2875, 0.0
        %2952 = vadd.xlane.f32.xlu0 %v2951
        %v2953 = vpop.xlane.xlu0 %2952
        %v2954 = vsel %vm305, %v2876, 0.0
        %2955 = vadd.xlane.f32.xlu0 %v2954
        %v2956 = vpop.xlane.xlu0 %2955
        %v2957 = vsel %vm305, %v2877, 0.0
        %2958 = vadd.xlane.f32.xlu0 %v2957
        %v2959 = vpop.xlane.xlu0 %2958
        %v2960 = vsel %vm305, %v2878, 0.0
        %2961 = vadd.xlane.f32.xlu0 %v2960
        %v2962 = vpop.xlane.xlu0 %2961
        %v2963 = vsel %vm305, %v2879, 0.0
        %2964 = vadd.xlane.f32.xlu0 %v2963
        %v2965 = vpop.xlane.xlu0 %2964
        %v2966 = vsel %vm305, %v2880, 0.0
        %2967 = vadd.xlane.f32.xlu0 %v2966
        %v2968 = vpop.xlane.xlu0 %2967
        %v2969 = vsel %vm305, %v2881, 0.0
        %2970 = vadd.xlane.f32.xlu0 %v2969
        %v2971 = vpop.xlane.xlu0 %2970
        %v2972 = vsel %vm305, %v2882, 0.0
        %2973 = vadd.xlane.f32.xlu0 %v2972
        %v2974 = vpop.xlane.xlu0 %2973
        %v2975 = vsel %vm305, %v2883, 0.0
        %2976 = vadd.xlane.f32.xlu0 %v2975
        %v2977 = vpop.xlane.xlu0 %2976
        %v2978 = vsel %vm305, %v2884, 0.0
        %2979 = vadd.xlane.f32.xlu0 %v2978
        %v2980 = vpop.xlane.xlu0 %2979
        %v2981 = vrcp.pop 32.0
        %v2982 = vmul.f32 %v2887, %v2981
        %v2983 = vmul.f32 %v2890, %v2981
        %v2984 = vmul.f32 %v2893, %v2981
        %v2985 = vmul.f32 %v2896, %v2981
        %v2986 = vmul.f32 %v2899, %v2981
        %v2987 = vmul.f32 %v2902, %v2981
        %v2988 = vmul.f32 %v2905, %v2981
        %v2989 = vmul.f32 %v2908, %v2981
        %v2990 = vmul.f32 %v2911, %v2981
        %v2991 = vmul.f32 %v2914, %v2981
        %v2992 = vmul.f32 %v2917, %v2981
        %v2993 = vmul.f32 %v2920, %v2981
        %v2994 = vmul.f32 %v2923, %v2981
        %v2995 = vmul.f32 %v2926, %v2981
        %v2996 = vmul.f32 %v2929, %v2981
        %v2997 = vmul.f32 %v2932, %v2981
        %v2998 = vmul.f32 %v2935, %v2981
        %v2999 = vmul.f32 %v2938, %v2981
        %v3000 = vmul.f32 %v2941, %v2981
        %v3001 = vmul.f32 %v2944, %v2981
        %v3002 = vmul.f32 %v2947, %v2981
        %v3003 = vmul.f32 %v2950, %v2981
        %v3004 = vmul.f32 %v2953, %v2981
        %v3005 = vmul.f32 %v2956, %v2981
        %v3006 = vmul.f32 %v2959, %v2981
        %v3007 = vmul.f32 %v2962, %v2981
        %v3008 = vmul.f32 %v2965, %v2981
        %v3009 = vmul.f32 %v2968, %v2981
        %v3010 = vmul.f32 %v2971, %v2981
        %v3011 = vmul.f32 %v2974, %v2981
        %v3012 = vmul.f32 %v2977, %v2981
        %v3013 = vmul.f32 %v2980, %v2981
        %v3014 = vsub.f32 %v2853, %v2982
        %v3015 = vsub.f32 %v2854, %v2983
        %v3016 = vsub.f32 %v2855, %v2984
        %v3017 = vsub.f32 %v2856, %v2985
        %v3018 = vsub.f32 %v2857, %v2986
        %v3019 = vsub.f32 %v2858, %v2987
        %v3020 = vsub.f32 %v2859, %v2988
        %v3021 = vsub.f32 %v2860, %v2989
        %v3022 = vsub.f32 %v2861, %v2990
        %v3023 = vsub.f32 %v2862, %v2991
        %v3024 = vsub.f32 %v2863, %v2992
        %v3025 = vsub.f32 %v2864, %v2993
        %v3026 = vsub.f32 %v2865, %v2994
        %v3027 = vsub.f32 %v2866, %v2995
        %v3028 = vsub.f32 %v2867, %v2996
        %v3029 = vsub.f32 %v2868, %v2997
        %v3030 = vsub.f32 %v2869, %v2998
        %v3031 = vsub.f32 %v2870, %v2999
        %v3032 = vsub.f32 %v2871, %v3000
        %v3033 = vsub.f32 %v2872, %v3001
        %v3034 = vsub.f32 %v2873, %v3002
        %v3035 = vsub.f32 %v2874, %v3003
        %v3036 = vsub.f32 %v2875, %v3004
        %v3037 = vsub.f32 %v2876, %v3005
        %v3038 = vsub.f32 %v2877, %v3006
        %v3039 = vsub.f32 %v2878, %v3007
        %v3040 = vsub.f32 %v2879, %v3008
        %v3041 = vsub.f32 %v2880, %v3009
        %v3042 = vsub.f32 %v2881, %v3010
        %v3043 = vsub.f32 %v2882, %v3011
        %v3044 = vsub.f32 %v2883, %v3012
        %v3045 = vsub.f32 %v2884, %v3013
        %v3046 = vmul.f32 %v3014, %v3014
        %v3047 = vmul.f32 %v3015, %v3015
        %v3048 = vmul.f32 %v3016, %v3016
        %v3049 = vmul.f32 %v3017, %v3017
        %v3050 = vmul.f32 %v3018, %v3018
        %v3051 = vmul.f32 %v3019, %v3019
        %v3052 = vmul.f32 %v3020, %v3020
        %v3053 = vmul.f32 %v3021, %v3021
        %v3054 = vmul.f32 %v3022, %v3022
        %v3055 = vmul.f32 %v3023, %v3023
        %v3056 = vmul.f32 %v3024, %v3024
        %v3057 = vmul.f32 %v3025, %v3025
        %v3058 = vmul.f32 %v3026, %v3026
        %v3059 = vmul.f32 %v3027, %v3027
        %v3060 = vmul.f32 %v3028, %v3028
        %v3061 = vmul.f32 %v3029, %v3029
        %v3062 = vmul.f32 %v3030, %v3030
        %v3063 = vmul.f32 %v3031, %v3031
        %v3064 = vmul.f32 %v3032, %v3032
        %v3065 = vmul.f32 %v3033, %v3033
        %v3066 = vmul.f32 %v3034, %v3034
        %v3067 = vmul.f32 %v3035, %v3035
        %v3068 = vmul.f32 %v3036, %v3036
        %v3069 = vmul.f32 %v3037, %v3037
        %v3070 = vmul.f32 %v3038, %v3038
        %v3071 = vmul.f32 %v3039, %v3039
        %v3072 = vmul.f32 %v3040, %v3040
        %v3073 = vmul.f32 %v3041, %v3041
        %v3074 = vmul.f32 %v3042, %v3042
        %v3075 = vmul.f32 %v3043, %v3043
        %v3076 = vmul.f32 %v3044, %v3044
        %v3077 = vmul.f32 %v3045, %v3045
        %v3078 = vsel %vm305, %v3046, 0.0
        %3079 = vadd.xlane.f32.xlu0 %v3078
        %v3080 = vpop.xlane.xlu0 %3079
        %v3081 = vsel %vm305, %v3047, 0.0
        %3082 = vadd.xlane.f32.xlu0 %v3081
        %v3083 = vpop.xlane.xlu0 %3082
        %v3084 = vsel %vm305, %v3048, 0.0
        %3085 = vadd.xlane.f32.xlu0 %v3084
        %v3086 = vpop.xlane.xlu0 %3085
        %v3087 = vsel %vm305, %v3049, 0.0
        %3088 = vadd.xlane.f32.xlu0 %v3087
        %v3089 = vpop.xlane.xlu0 %3088
        %v3090 = vsel %vm305, %v3050, 0.0
        %3091 = vadd.xlane.f32.xlu0 %v3090
        %v3092 = vpop.xlane.xlu0 %3091
        %v3093 = vsel %vm305, %v3051, 0.0
        %3094 = vadd.xlane.f32.xlu0 %v3093
        %v3095 = vpop.xlane.xlu0 %3094
        %v3096 = vsel %vm305, %v3052, 0.0
        %3097 = vadd.xlane.f32.xlu0 %v3096
        %v3098 = vpop.xlane.xlu0 %3097
        %v3099 = vsel %vm305, %v3053, 0.0
        %3100 = vadd.xlane.f32.xlu0 %v3099
        %v3101 = vpop.xlane.xlu0 %3100
        %v3102 = vsel %vm305, %v3054, 0.0
        %3103 = vadd.xlane.f32.xlu0 %v3102
        %v3104 = vpop.xlane.xlu0 %3103
        %v3105 = vsel %vm305, %v3055, 0.0
        %3106 = vadd.xlane.f32.xlu0 %v3105
        %v3107 = vpop.xlane.xlu0 %3106
        %v3108 = vsel %vm305, %v3056, 0.0
        %3109 = vadd.xlane.f32.xlu0 %v3108
        %v3110 = vpop.xlane.xlu0 %3109
        %v3111 = vsel %vm305, %v3057, 0.0
        %3112 = vadd.xlane.f32.xlu0 %v3111
        %v3113 = vpop.xlane.xlu0 %3112
        %v3114 = vsel %vm305, %v3058, 0.0
        %3115 = vadd.xlane.f32.xlu0 %v3114
        %v3116 = vpop.xlane.xlu0 %3115
        %v3117 = vsel %vm305, %v3059, 0.0
        %3118 = vadd.xlane.f32.xlu0 %v3117
        %v3119 = vpop.xlane.xlu0 %3118
        %v3120 = vsel %vm305, %v3060, 0.0
        %3121 = vadd.xlane.f32.xlu0 %v3120
        %v3122 = vpop.xlane.xlu0 %3121
        %v3123 = vsel %vm305, %v3061, 0.0
        %3124 = vadd.xlane.f32.xlu0 %v3123
        %v3125 = vpop.xlane.xlu0 %3124
        %v3126 = vsel %vm305, %v3062, 0.0
        %3127 = vadd.xlane.f32.xlu0 %v3126
        %v3128 = vpop.xlane.xlu0 %3127
        %v3129 = vsel %vm305, %v3063, 0.0
        %3130 = vadd.xlane.f32.xlu0 %v3129
        %v3131 = vpop.xlane.xlu0 %3130
        %v3132 = vsel %vm305, %v3064, 0.0
        %3133 = vadd.xlane.f32.xlu0 %v3132
        %v3134 = vpop.xlane.xlu0 %3133
        %v3135 = vsel %vm305, %v3065, 0.0
        %3136 = vadd.xlane.f32.xlu0 %v3135
        %v3137 = vpop.xlane.xlu0 %3136
        %v3138 = vsel %vm305, %v3066, 0.0
        %3139 = vadd.xlane.f32.xlu0 %v3138
        %v3140 = vpop.xlane.xlu0 %3139
        %v3141 = vsel %vm305, %v3067, 0.0
        %3142 = vadd.xlane.f32.xlu0 %v3141
        %v3143 = vpop.xlane.xlu0 %3142
        %v3144 = vsel %vm305, %v3068, 0.0
        %3145 = vadd.xlane.f32.xlu0 %v3144
        %v3146 = vpop.xlane.xlu0 %3145
        %v3147 = vsel %vm305, %v3069, 0.0
        %3148 = vadd.xlane.f32.xlu0 %v3147
        %v3149 = vpop.xlane.xlu0 %3148
        %v3150 = vsel %vm305, %v3070, 0.0
        %3151 = vadd.xlane.f32.xlu0 %v3150
        %v3152 = vpop.xlane.xlu0 %3151
        %v3153 = vsel %vm305, %v3071, 0.0
        %3154 = vadd.xlane.f32.xlu0 %v3153
        %v3155 = vpop.xlane.xlu0 %3154
        %v3156 = vsel %vm305, %v3072, 0.0
        %3157 = vadd.xlane.f32.xlu0 %v3156
        %v3158 = vpop.xlane.xlu0 %3157
        %v3159 = vsel %vm305, %v3073, 0.0
        %3160 = vadd.xlane.f32.xlu0 %v3159
        %v3161 = vpop.xlane.xlu0 %3160
        %v3162 = vsel %vm305, %v3074, 0.0
        %3163 = vadd.xlane.f32.xlu0 %v3162
        %v3164 = vpop.xlane.xlu0 %3163
        %v3165 = vsel %vm305, %v3075, 0.0
        %3166 = vadd.xlane.f32.xlu0 %v3165
        %v3167 = vpop.xlane.xlu0 %3166
        %v3168 = vsel %vm305, %v3076, 0.0
        %3169 = vadd.xlane.f32.xlu0 %v3168
        %v3170 = vpop.xlane.xlu0 %3169
        %v3171 = vsel %vm305, %v3077, 0.0
        %3172 = vadd.xlane.f32.xlu0 %v3171
        %v3173 = vpop.xlane.xlu0 %3172
        %v3174 = vmul.f32 %v3080, %v2981
        %v3175 = vmul.f32 %v3083, %v2981
        %v3176 = vmul.f32 %v3086, %v2981
        %v3177 = vmul.f32 %v3089, %v2981
        %v3178 = vmul.f32 %v3092, %v2981
        %v3179 = vmul.f32 %v3095, %v2981
        %v3180 = vmul.f32 %v3098, %v2981
        %v3181 = vmul.f32 %v3101, %v2981
        %v3182 = vmul.f32 %v3104, %v2981
        %v3183 = vmul.f32 %v3107, %v2981
        %v3184 = vmul.f32 %v3110, %v2981
        %v3185 = vmul.f32 %v3113, %v2981
        %v3186 = vmul.f32 %v3116, %v2981
        %v3187 = vmul.f32 %v3119, %v2981
        %v3188 = vmul.f32 %v3122, %v2981
        %v3189 = vmul.f32 %v3125, %v2981
        %v3190 = vmul.f32 %v3128, %v2981
        %v3191 = vmul.f32 %v3131, %v2981
        %v3192 = vmul.f32 %v3134, %v2981
        %v3193 = vmul.f32 %v3137, %v2981
        %v3194 = vmul.f32 %v3140, %v2981
        %v3195 = vmul.f32 %v3143, %v2981
        %v3196 = vmul.f32 %v3146, %v2981
        %v3197 = vmul.f32 %v3149, %v2981
        %v3198 = vmul.f32 %v3152, %v2981
        %v3199 = vmul.f32 %v3155, %v2981
        %v3200 = vmul.f32 %v3158, %v2981
        %v3201 = vmul.f32 %v3161, %v2981
        %v3202 = vmul.f32 %v3164, %v2981
        %v3203 = vmul.f32 %v3167, %v2981
        %v3204 = vmul.f32 %v3170, %v2981
        %v3205 = vmul.f32 %v3173, %v2981
        %v3206 = vadd.f32 %v3174, 1e-05
        %v3207 = vadd.f32 %v3175, 1e-05
        %v3208 = vadd.f32 %v3176, 1e-05
        %v3209 = vadd.f32 %v3177, 1e-05
        %v3210 = vadd.f32 %v3178, 1e-05
        %v3211 = vadd.f32 %v3179, 1e-05
        %v3212 = vadd.f32 %v3180, 1e-05
        %v3213 = vadd.f32 %v3181, 1e-05
        %v3214 = vadd.f32 %v3182, 1e-05
        %v3215 = vadd.f32 %v3183, 1e-05
        %v3216 = vadd.f32 %v3184, 1e-05
        %v3217 = vadd.f32 %v3185, 1e-05
        %v3218 = vadd.f32 %v3186, 1e-05
        %v3219 = vadd.f32 %v3187, 1e-05
        %v3220 = vadd.f32 %v3188, 1e-05
        %v3221 = vadd.f32 %v3189, 1e-05
        %v3222 = vadd.f32 %v3190, 1e-05
        %v3223 = vadd.f32 %v3191, 1e-05
        %v3224 = vadd.f32 %v3192, 1e-05
        %v3225 = vadd.f32 %v3193, 1e-05
        %v3226 = vadd.f32 %v3194, 1e-05
        %v3227 = vadd.f32 %v3195, 1e-05
        %v3228 = vadd.f32 %v3196, 1e-05
        %v3229 = vadd.f32 %v3197, 1e-05
        %v3230 = vadd.f32 %v3198, 1e-05
        %v3231 = vadd.f32 %v3199, 1e-05
        %v3232 = vadd.f32 %v3200, 1e-05
        %v3233 = vadd.f32 %v3201, 1e-05
        %v3234 = vadd.f32 %v3202, 1e-05
        %v3235 = vadd.f32 %v3203, 1e-05
        %v3236 = vadd.f32 %v3204, 1e-05
        %v3237 = vadd.f32 %v3205, 1e-05
        %v3238 = vrsqrt.pop %v3206
        %v3239 = vrsqrt.pop %v3207
        %v3240 = vrsqrt.pop %v3208
        %v3241 = vrsqrt.pop %v3209
        %v3242 = vrsqrt.pop %v3210
        %v3243 = vrsqrt.pop %v3211
        %v3244 = vrsqrt.pop %v3212
        %v3245 = vrsqrt.pop %v3213
        %v3246 = vrsqrt.pop %v3214
        %v3247 = vrsqrt.pop %v3215
        %v3248 = vrsqrt.pop %v3216
        %v3249 = vrsqrt.pop %v3217
        %v3250 = vrsqrt.pop %v3218
        %v3251 = vrsqrt.pop %v3219
        %v3252 = vrsqrt.pop %v3220
        %v3253 = vrsqrt.pop %v3221
        %v3254 = vrsqrt.pop %v3222
        %v3255 = vrsqrt.pop %v3223
        %v3256 = vrsqrt.pop %v3224
        %v3257 = vrsqrt.pop %v3225
        %v3258 = vrsqrt.pop %v3226
        %v3259 = vrsqrt.pop %v3227
        %v3260 = vrsqrt.pop %v3228
        %v3261 = vrsqrt.pop %v3229
        %v3262 = vrsqrt.pop %v3230
        %v3263 = vrsqrt.pop %v3231
        %v3264 = vrsqrt.pop %v3232
        %v3265 = vrsqrt.pop %v3233
        %v3266 = vrsqrt.pop %v3234
        %v3267 = vrsqrt.pop %v3235
        %v3268 = vrsqrt.pop %v3236
        %v3269 = vrsqrt.pop %v3237
        %v3270 = vmul.f32 %v3014, %v3238
        %v3271 = vmul.f32 %v3015, %v3239
        %v3272 = vmul.f32 %v3016, %v3240
        %v3273 = vmul.f32 %v3017, %v3241
        %v3274 = vmul.f32 %v3018, %v3242
        %v3275 = vmul.f32 %v3019, %v3243
        %v3276 = vmul.f32 %v3020, %v3244
        %v3277 = vmul.f32 %v3021, %v3245
        %v3278 = vmul.f32 %v3022, %v3246
        %v3279 = vmul.f32 %v3023, %v3247
        %v3280 = vmul.f32 %v3024, %v3248
        %v3281 = vmul.f32 %v3025, %v3249
        %v3282 = vmul.f32 %v3026, %v3250
        %v3283 = vmul.f32 %v3027, %v3251
        %v3284 = vmul.f32 %v3028, %v3252
        %v3285 = vmul.f32 %v3029, %v3253
        %v3286 = vmul.f32 %v3030, %v3254
        %v3287 = vmul.f32 %v3031, %v3255
        %v3288 = vmul.f32 %v3032, %v3256
        %v3289 = vmul.f32 %v3033, %v3257
        %v3290 = vmul.f32 %v3034, %v3258
        %v3291 = vmul.f32 %v3035, %v3259
        %v3292 = vmul.f32 %v3036, %v3260
        %v3293 = vmul.f32 %v3037, %v3261
        %v3294 = vmul.f32 %v3038, %v3262
        %v3295 = vmul.f32 %v3039, %v3263
        %v3296 = vmul.f32 %v3040, %v3264
        %v3297 = vmul.f32 %v3041, %v3265
        %v3298 = vmul.f32 %v3042, %v3266
        %v3299 = vmul.f32 %v3043, %v3267
        %v3300 = vmul.f32 %v3044, %v3268
        %v3301 = vmul.f32 %v3045, %v3269
        %vm3302 = vcmp.gt.f32.partialorder %v3270, 0.0
        %vm3303 = vcmp.gt.f32.partialorder %v3271, 0.0
        %vm3304 = vcmp.gt.f32.partialorder %v3272, 0.0
        %vm3305 = vcmp.gt.f32.partialorder %v3273, 0.0
        %vm3306 = vcmp.gt.f32.partialorder %v3274, 0.0
        %vm3307 = vcmp.gt.f32.partialorder %v3275, 0.0
        %vm3308 = vcmp.gt.f32.partialorder %v3276, 0.0
        %vm3309 = vcmp.gt.f32.partialorder %v3277, 0.0
        %vm3310 = vcmp.gt.f32.partialorder %v3278, 0.0
        %vm3311 = vcmp.gt.f32.partialorder %v3279, 0.0
        %vm3312 = vcmp.gt.f32.partialorder %v3280, 0.0
        %vm3313 = vcmp.gt.f32.partialorder %v3281, 0.0
        %vm3314 = vcmp.gt.f32.partialorder %v3282, 0.0
        %vm3315 = vcmp.gt.f32.partialorder %v3283, 0.0
        %vm3316 = vcmp.gt.f32.partialorder %v3284, 0.0
        %vm3317 = vcmp.gt.f32.partialorder %v3285, 0.0
        %vm3318 = vcmp.gt.f32.partialorder %v3286, 0.0
        %vm3319 = vcmp.gt.f32.partialorder %v3287, 0.0
        %vm3320 = vcmp.gt.f32.partialorder %v3288, 0.0
        %vm3321 = vcmp.gt.f32.partialorder %v3289, 0.0
        %vm3322 = vcmp.gt.f32.partialorder %v3290, 0.0
        %vm3323 = vcmp.gt.f32.partialorder %v3291, 0.0
        %vm3324 = vcmp.gt.f32.partialorder %v3292, 0.0
        %vm3325 = vcmp.gt.f32.partialorder %v3293, 0.0
        %vm3326 = vcmp.gt.f32.partialorder %v3294, 0.0
        %vm3327 = vcmp.gt.f32.partialorder %v3295, 0.0
        %vm3328 = vcmp.gt.f32.partialorder %v3296, 0.0
        %vm3329 = vcmp.gt.f32.partialorder %v3297, 0.0
        %vm3330 = vcmp.gt.f32.partialorder %v3298, 0.0
        %vm3331 = vcmp.gt.f32.partialorder %v3299, 0.0
        %vm3332 = vcmp.gt.f32.partialorder %v3300, 0.0
        %vm3333 = vcmp.gt.f32.partialorder %v3301, 0.0
        %v3334 = vmul.f32 %v3270, 0.02
        %v3335 = vmul.f32 %v3271, 0.02
        %v3336 = vmul.f32 %v3272, 0.02
        %v3337 = vmul.f32 %v3273, 0.02
        %v3338 = vmul.f32 %v3274, 0.02
        %v3339 = vmul.f32 %v3275, 0.02
        %v3340 = vmul.f32 %v3276, 0.02
        %v3341 = vmul.f32 %v3277, 0.02
        %v3342 = vmul.f32 %v3278, 0.02
        %v3343 = vmul.f32 %v3279, 0.02
        %v3344 = vmul.f32 %v3280, 0.02
        %v3345 = vmul.f32 %v3281, 0.02
        %v3346 = vmul.f32 %v3282, 0.02
        %v3347 = vmul.f32 %v3283, 0.02
        %v3348 = vmul.f32 %v3284, 0.02
        %v3349 = vmul.f32 %v3285, 0.02
        %v3350 = vmul.f32 %v3286, 0.02
        %v3351 = vmul.f32 %v3287, 0.02
        %v3352 = vmul.f32 %v3288, 0.02
        %v3353 = vmul.f32 %v3289, 0.02
        %v3354 = vmul.f32 %v3290, 0.02
        %v3355 = vmul.f32 %v3291, 0.02
        %v3356 = vmul.f32 %v3292, 0.02
        %v3357 = vmul.f32 %v3293, 0.02
        %v3358 = vmul.f32 %v3294, 0.02
        %v3359 = vmul.f32 %v3295, 0.02
        %v3360 = vmul.f32 %v3296, 0.02
        %v3361 = vmul.f32 %v3297, 0.02
        %v3362 = vmul.f32 %v3298, 0.02
        %v3363 = vmul.f32 %v3299, 0.02
        %v3364 = vmul.f32 %v3300, 0.02
        %v3365 = vmul.f32 %v3301, 0.02
        %v3366 = vsel %vm3302, %v3270, %v3334
        %v3367 = vsel %vm3303, %v3271, %v3335
        %v3368 = vsel %vm3304, %v3272, %v3336
        %v3369 = vsel %vm3305, %v3273, %v3337
        %v3370 = vsel %vm3306, %v3274, %v3338
        %v3371 = vsel %vm3307, %v3275, %v3339
        %v3372 = vsel %vm3308, %v3276, %v3340
        %v3373 = vsel %vm3309, %v3277, %v3341
        %v3374 = vsel %vm3310, %v3278, %v3342
        %v3375 = vsel %vm3311, %v3279, %v3343
        %v3376 = vsel %vm3312, %v3280, %v3344
        %v3377 = vsel %vm3313, %v3281, %v3345
        %v3378 = vsel %vm3314, %v3282, %v3346
        %v3379 = vsel %vm3315, %v3283, %v3347
        %v3380 = vsel %vm3316, %v3284, %v3348
        %v3381 = vsel %vm3317, %v3285, %v3349
        %v3382 = vsel %vm3318, %v3286, %v3350
        %v3383 = vsel %vm3319, %v3287, %v3351
        %v3384 = vsel %vm3320, %v3288, %v3352
        %v3385 = vsel %vm3321, %v3289, %v3353
        %v3386 = vsel %vm3322, %v3290, %v3354
        %v3387 = vsel %vm3323, %v3291, %v3355
        %v3388 = vsel %vm3324, %v3292, %v3356
        %v3389 = vsel %vm3325, %v3293, %v3357
        %v3390 = vsel %vm3326, %v3294, %v3358
        %v3391 = vsel %vm3327, %v3295, %v3359
        %v3392 = vsel %vm3328, %v3296, %v3360
        %v3393 = vsel %vm3329, %v3297, %v3361
        %v3394 = vsel %vm3330, %v3298, %v3362
        %v3395 = vsel %vm3331, %v3299, %v3363
        %v3396 = vsel %vm3332, %v3300, %v3364
        %v3397 = vsel %vm3333, %v3301, %v3365
        %v3398 = vsel %vm305, %v3366, 0.0
        %v3399 = vsel %vm305, %v3367, 0.0
        %v3400 = vadd.f32 %v3398, %v3399
        %v3401 = vrot.slane %v3400, 4
        %v3402 = vadd.f32 %v3400, %v3401
        %v3403 = vrot.slane %v3402, 2
        %v3404 = vadd.f32 %v3402, %v3403
        %v3405 = vrot.slane %v3404, 1
        %v3406 = vadd.f32 %v3404, %v3405
        %v3407 = vsel %vm305, %v3368, 0.0
        %v3408 = vsel %vm305, %v3369, 0.0
        %v3409 = vadd.f32 %v3407, %v3408
        %v3410 = vrot.slane %v3409, 4
        %v3411 = vadd.f32 %v3409, %v3410
        %v3412 = vrot.slane %v3411, 2
        %v3413 = vadd.f32 %v3411, %v3412
        %v3414 = vrot.slane %v3413, 1
        %v3415 = vadd.f32 %v3413, %v3414
        %v3416 = vsel %vm305, %v3370, 0.0
        %v3417 = vsel %vm305, %v3371, 0.0
        %v3418 = vadd.f32 %v3416, %v3417
        %v3419 = vrot.slane %v3418, 4
        %v3420 = vadd.f32 %v3418, %v3419
        %v3421 = vrot.slane %v3420, 2
        %v3422 = vadd.f32 %v3420, %v3421
        %v3423 = vrot.slane %v3422, 1
        %v3424 = vadd.f32 %v3422, %v3423
        %v3425 = vsel %vm305, %v3372, 0.0
        %v3426 = vsel %vm305, %v3373, 0.0
        %v3427 = vadd.f32 %v3425, %v3426
        %v3428 = vrot.slane %v3427, 4
        %v3429 = vadd.f32 %v3427, %v3428
        %v3430 = vrot.slane %v3429, 2
        %v3431 = vadd.f32 %v3429, %v3430
        %v3432 = vrot.slane %v3431, 1
        %v3433 = vadd.f32 %v3431, %v3432
        %v3434 = vsel %vm305, %v3374, 0.0
        %v3435 = vsel %vm305, %v3375, 0.0
        %v3436 = vadd.f32 %v3434, %v3435
        %v3437 = vrot.slane %v3436, 4
        %v3438 = vadd.f32 %v3436, %v3437
        %v3439 = vrot.slane %v3438, 2
        %v3440 = vadd.f32 %v3438, %v3439
        %v3441 = vrot.slane %v3440, 1
        %v3442 = vadd.f32 %v3440, %v3441
        %v3443 = vsel %vm305, %v3376, 0.0
        %v3444 = vsel %vm305, %v3377, 0.0
        %v3445 = vadd.f32 %v3443, %v3444
        %v3446 = vrot.slane %v3445, 4
        %v3447 = vadd.f32 %v3445, %v3446
        %v3448 = vrot.slane %v3447, 2
        %v3449 = vadd.f32 %v3447, %v3448
        %v3450 = vrot.slane %v3449, 1
        %v3451 = vadd.f32 %v3449, %v3450
        %v3452 = vsel %vm305, %v3378, 0.0
        %v3453 = vsel %vm305, %v3379, 0.0
        %v3454 = vadd.f32 %v3452, %v3453
        %v3455 = vrot.slane %v3454, 4
        %v3456 = vadd.f32 %v3454, %v3455
        %v3457 = vrot.slane %v3456, 2
        %v3458 = vadd.f32 %v3456, %v3457
        %v3459 = vrot.slane %v3458, 1
        %v3460 = vadd.f32 %v3458, %v3459
        %v3461 = vsel %vm305, %v3380, 0.0
        %v3462 = vsel %vm305, %v3381, 0.0
        %v3463 = vadd.f32 %v3461, %v3462
        %v3464 = vrot.slane %v3463, 4
        %v3465 = vadd.f32 %v3463, %v3464
        %v3466 = vrot.slane %v3465, 2
        %v3467 = vadd.f32 %v3465, %v3466
        %v3468 = vrot.slane %v3467, 1
        %v3469 = vadd.f32 %v3467, %v3468
        %v3470 = vsel %vm305, %v3382, 0.0
        %v3471 = vsel %vm305, %v3383, 0.0
        %v3472 = vadd.f32 %v3470, %v3471
        %v3473 = vrot.slane %v3472, 4
        %v3474 = vadd.f32 %v3472, %v3473
        %v3475 = vrot.slane %v3474, 2
        %v3476 = vadd.f32 %v3474, %v3475
        %v3477 = vrot.slane %v3476, 1
        %v3478 = vadd.f32 %v3476, %v3477
        %v3479 = vsel %vm305, %v3384, 0.0
        %v3480 = vsel %vm305, %v3385, 0.0
        %v3481 = vadd.f32 %v3479, %v3480
        %v3482 = vrot.slane %v3481, 4
        %v3483 = vadd.f32 %v3481, %v3482
        %v3484 = vrot.slane %v3483, 2
        %v3485 = vadd.f32 %v3483, %v3484
        %v3486 = vrot.slane %v3485, 1
        %v3487 = vadd.f32 %v3485, %v3486
        %v3488 = vsel %vm305, %v3386, 0.0
        %v3489 = vsel %vm305, %v3387, 0.0
        %v3490 = vadd.f32 %v3488, %v3489
        %v3491 = vrot.slane %v3490, 4
        %v3492 = vadd.f32 %v3490, %v3491
        %v3493 = vrot.slane %v3492, 2
        %v3494 = vadd.f32 %v3492, %v3493
        %v3495 = vrot.slane %v3494, 1
        %v3496 = vadd.f32 %v3494, %v3495
        %v3497 = vsel %vm305, %v3388, 0.0
        %v3498 = vsel %vm305, %v3389, 0.0
        %v3499 = vadd.f32 %v3497, %v3498
        %v3500 = vrot.slane %v3499, 4
        %v3501 = vadd.f32 %v3499, %v3500
        %v3502 = vrot.slane %v3501, 2
        %v3503 = vadd.f32 %v3501, %v3502
        %v3504 = vrot.slane %v3503, 1
        %v3505 = vadd.f32 %v3503, %v3504
        %v3506 = vsel %vm305, %v3390, 0.0
        %v3507 = vsel %vm305, %v3391, 0.0
        %v3508 = vadd.f32 %v3506, %v3507
        %v3509 = vrot.slane %v3508, 4
        %v3510 = vadd.f32 %v3508, %v3509
        %v3511 = vrot.slane %v3510, 2
        %v3512 = vadd.f32 %v3510, %v3511
        %v3513 = vrot.slane %v3512, 1
        %v3514 = vadd.f32 %v3512, %v3513
        %v3515 = vsel %vm305, %v3392, 0.0
        %v3516 = vsel %vm305, %v3393, 0.0
        %v3517 = vadd.f32 %v3515, %v3516
        %v3518 = vrot.slane %v3517, 4
        %v3519 = vadd.f32 %v3517, %v3518
        %v3520 = vrot.slane %v3519, 2
        %v3521 = vadd.f32 %v3519, %v3520
        %v3522 = vrot.slane %v3521, 1
        %v3523 = vadd.f32 %v3521, %v3522
        %v3524 = vsel %vm305, %v3394, 0.0
        %v3525 = vsel %vm305, %v3395, 0.0
        %v3526 = vadd.f32 %v3524, %v3525
        %v3527 = vrot.slane %v3526, 4
        %v3528 = vadd.f32 %v3526, %v3527
        %v3529 = vrot.slane %v3528, 2
        %v3530 = vadd.f32 %v3528, %v3529
        %v3531 = vrot.slane %v3530, 1
        %v3532 = vadd.f32 %v3530, %v3531
        %v3533 = vsel %vm305, %v3396, 0.0
        %v3534 = vsel %vm305, %v3397, 0.0
        %v3535 = vadd.f32 %v3533, %v3534
        %v3536 = vrot.slane %v3535, 4
        %v3537 = vadd.f32 %v3535, %v3536
        %v3538 = vrot.slane %v3537, 2
        %v3539 = vadd.f32 %v3537, %v3538
        %v3540 = vrot.slane %v3539, 1
        %v3541 = vadd.f32 %v3539, %v3540
        %vm3558 = vcmask 1041409
        %v3559 = vsel %vm3558, %v3415, %v3406
        %vm3560 = vcmask 1042434
        %v3561 = vsel %vm3560, %v3424, %v3559
        %vm3562 = vcmask 1043459
        %v3563 = vsel %vm3562, %v3433, %v3561
        %vm3564 = vcmask 1044484
        %v3565 = vsel %vm3564, %v3442, %v3563
        %vm3566 = vcmask 1045509
        %v3567 = vsel %vm3566, %v3451, %v3565
        %vm3568 = vcmask 1046534
        %v3569 = vsel %vm3568, %v3460, %v3567
        %vm3570 = vcmask 1047559
        %v3571 = vsel %vm3570, %v3469, %v3569
        %v3572 = vsel %vm3558, %v3487, %v3478
        %v3573 = vsel %vm3560, %v3496, %v3572
        %v3574 = vsel %vm3562, %v3505, %v3573
        %v3575 = vsel %vm3564, %v3514, %v3574
        %v3576 = vsel %vm3566, %v3523, %v3575
        %v3577 = vsel %vm3568, %v3532, %v3576
        %v3578 = vsel %vm3570, %v3541, %v3577
        %3581 = vst.msk [vmem:[%s259] sm:$0xff] %vm305, %v3571
        %3582 = vst.msk [vmem:[%s259 + $0x8] sm:$0xff] %vm305, %v3578
        %s3583 = sand.u32 %s142, 1
        %s3584 = scalar_lea.sflag [#allocation5], %s3583
        %s3585 = sand.u32 %s142, 1
        %s3586 = smul.addr %s3585, 16
        %s3587 = scalar_lea.vmem [#allocation8], %s3586
        // Predicated region
        $region49: #{tpu_custom_call.1} parent=39 // pred_check
          %p3588 = pneg %p152
        $region50: #{tpu_custom_call.1} parent=39 // pred_check_branch
          %3590 = sbr.rel (%p3588) target = $region52
        $region51: #{tpu_custom_call.1} parent=39 // pred_region
          %s3591 = smul.u32 2, %s24
          %s3593 = ssub.s32 256, 256
          %3594 = vsyncadd %s3584, %s3593
          %s3595 = smul.addr %s3591, 128
          %s3596 = scalar_lea.hbm %s5, %s3595
          %s3597 = sshll.u32 %s3587, 4
          %s3598 = int_to_ptr.vmem [resolvable:$true] %s3597
          %3603 = dma.vmem_to_hbm [thread:$0]  %s3598, 256, %s3596, %s3584, 128, 128, 8
        $region52: #{tpu_custom_call.1} parent=39 // pred_fallthru
          _
      $region40: #{tpu_custom_call.1} parent=5 // pred_fallthru
        _
      %p3604 = scmp.le.s32.totalorder 2, %s19
      // Predicated region
      $region53: #{tpu_custom_call.1} parent=5 // pred_check
        %p3605 = pneg %p3604
      $region54: #{tpu_custom_call.1} parent=5 // pred_check_branch
        %3607 = sbr.rel (%p3605) target = $region56
      $region55: #{tpu_custom_call.1} parent=5 // pred_region
        %s3608 = ssub.s32 %s19, 2
        // Predicated region
        $region57: #{tpu_custom_call.1} parent=55 // pred_check
          %p3609 = pneg %p158
        $region58: #{tpu_custom_call.1} parent=55 // pred_check_branch
          %3611 = sbr.rel (%p3609) target = $region60
        $region59: #{tpu_custom_call.1} parent=55 // pred_region
          %s3612 = sand.u32 %s143, 1
          %s3613 = scalar_lea.sflag [#allocation5], %s3612
          %s3614 = sand.u32 %s143, 1
          %s3615 = smul.addr %s3614, 16
          %s3616 = scalar_lea.vmem [#allocation8], %s3615
          %3617 = dma.done %s3613, 256
        $region60: #{tpu_custom_call.1} parent=55 // pred_fallthru
          _
      $region56: #{tpu_custom_call.1} parent=5 // pred_fallthru
        _
    $region6: #{tpu_custom_call.1} parent=1 // loop_footer
      %s23 = sadd.s32 1, %s19
    $region7: #{tpu_custom_call.1} parent=1 // loop_footer_branch
      %18 = sbr.rel target = $region3
    $region8: #{tpu_custom_call.1} parent=1 // loop_exit
      _
    %3618 = vsyncpa [#allocation4], 1
    %s3619 = scalar_lea.sflag [#allocation4], 1
    %3620 = vsyncpa %s3619, 1
    %3621 = vsyncpa [#allocation7], 1
    %3622 = vsyncpa [#allocation5], 1
    %s3623 = scalar_lea.sflag [#allocation5], 1
    %3624 = vsyncpa %s3623, 1

</llo_original>
